<compile_context>
chip_gen: v7x
topology: tpu7x:2x2x1
jax: 0.10.0
libtpu: 0.0.40
codegen_flags: <defaults>
</compile_context>

<pallas_src>
import functools

import numpy as np
import jax
import jax.numpy as jnp
from jax.experimental import pallas as pl
from jax.experimental.pallas import tpu as pltpu


# ---------------------------------------------------------------------------
# Pallas kernel: one grid step == B lane-packed images.
# ---------------------------------------------------------------------------
def _encoder_block_kernel(x_ref, w1_ref, b1_ref, w2_ref, b2_ref,
                          a1m_ref, a1s_ref, a1b_ref,
                          a2m_ref, a2s_ref, a2b_ref,
                          masks_ref, pool_ref,
                          seg1_ref, seg1t_ref, seg2_ref, seg2t_ref,
                          xo_ref, s1_ref, s2_ref,
                          *, H, W, B, dot_dtype):
    f32 = jnp.float32
    HW = H * W
    HWh = (H // 2) * (W // 2)
    L = B * HW

    masks = masks_ref[...]                               # (9, L) tap-validity masks

    def lrelu(v):
        return jnp.maximum(v, 0.2 * v)

    def build_patches(v):
        """im2col: v (C, L) -> (9*C, L); rows ordered (ky, kx, c)."""
        taps = []
        for ky in range(3):
            for kx in range(3):
                delta = (ky - 1) * W + (kx - 1)
                if delta == 0:
                    taps.append(v)
                    continue
                # t[:, q] = v[:, (q + delta) mod L]  (XLU lane rotation)
                t = pltpu.roll(v, (-delta) % L, axis=1)
                k = ky * 3 + kx
                taps.append(t * masks[k:k + 1, :])       # zero out-of-bounds taps
        return jnp.concatenate(taps, axis=0)

    def conv(w_ref, b_ref, patches):
        w = w_ref[...]
        if dot_dtype != jnp.float32:                     # bf16 MXU at big channel counts
            w, patches = w.astype(dot_dtype), patches.astype(dot_dtype)
        return lrelu(jnp.dot(w, patches, preferred_element_type=f32) + b_ref[...])

    def inorm(v, seg_ref, segt_ref, n_pix):
        """Per-image instance norm (two-pass var). Returns (normed, mean, std)."""
        if B == 1:
            mean = jnp.sum(v, axis=1, keepdims=True) * (1.0 / n_pix)        # (C, 1)
            diff = v - mean
            var = jnp.sum(diff * diff, axis=1, keepdims=True) * (1.0 / n_pix)
            sd = jnp.sqrt(var + 1e-8)
            return diff * (1.0 / sd), mean, sd
        seg, segt = seg_ref[...], segt_ref[...]          # (Lv, B) scaled 1/n, (B, Lv)
        mean = jnp.dot(v, seg, preferred_element_type=f32)                  # (C, B)
        diff = v - jnp.dot(mean, segt, preferred_element_type=f32)
        var = jnp.dot(diff * diff, seg, preferred_element_type=f32)
        sd = jnp.sqrt(var + 1e-8)
        inv_full = jnp.dot(1.0 / sd, segt, preferred_element_type=f32)
        return diff * inv_full, mean, sd

    def style_head(wm_ref, ws_ref, wb_ref, mean, sd):
        # aff(cat([mean, std])) computed transposed -> (Wsz, B)
        return (jnp.dot(wm_ref[...], mean, preferred_element_type=f32)
                + jnp.dot(ws_ref[...], sd, preferred_element_type=f32)
                + wb_ref[...])

    # ---- conv1 -> leaky relu -> instance norm -> style1 ----
    x = x_ref[0].astype(f32)                                        # (Cin_p, L)
    a1 = conv(w1_ref, b1_ref, build_patches(x))                     # (Cout, L)
    xn1, m1, sd1 = inorm(a1, seg1_ref, seg1t_ref, HW)
    s1_ref[0] = style_head(a1m_ref, a1s_ref, a1b_ref, m1, sd1).astype(s1_ref.dtype)

    # ---- conv2 -> leaky relu -> 2x2 avg pool (one matmul) -> norm -> style2 ----
    a2 = conv(w2_ref, b2_ref, build_patches(xn1))                   # (Cout, L)
    pooled = jnp.dot(a2, pool_ref[...], preferred_element_type=f32)  # (Cout, B*HWh)
    xn2, m2, sd2 = inorm(pooled, seg2_ref, seg2t_ref, HWh)
    xo_ref[0] = xn2.astype(xo_ref.dtype)
    s2_ref[0] = style_head(a2m_ref, a2s_ref, a2b_ref, m2, sd2).astype(s2_ref.dtype)


# ---------------------------------------------------------------------------
# Glue
# ---------------------------------------------------------------------------
def _pick_images_per_step(n, hw):
    """Lane-pack images per grid step: keep the lane axis modest and keep at
    least 2 grid steps (v7x megacore) when the batch allows it."""
    cap = max(1, 2048 // hw)
    if n >= 2:
        cap = min(cap, n // 2)
    cap = max(1, min(cap, n))
    for b in range(cap, 0, -1):
        if n % b == 0:
            return b
    return 1


def style_alae_encoder_block(x_nchw, params, images_per_step=None,
                             dot_dtype=jnp.float32):
    """Forward pass. x_nchw: (N, in_size, H, W) float32.
    Returns (x, style1, style2) with PyTorch shapes:
      x: (N, out_size, H/2, W/2); style1/2: (N, w_size, 1, 1)."""
    N, Cin, H, W = x_nchw.shape
    assert H % 2 == 0 and W % 2 == 0
    HW, Hh, Wh = H * W, H // 2, W // 2
    HWh = Hh * Wh

    w1, b1 = params["w1"], params["b1"]
    w2, b2 = params["w2"], params["b2"]
    a1w, a1b = params["a1w"], params["a1b"]
    a2w, a2b = params["a2w"], params["a2b"]
    Cout = w1.shape[-1]
    Wsz = a1w.shape[-1]

    B = images_per_step or _pick_images_per_step(N, HW)
    if N % B:
        raise ValueError(f"images_per_step={B} must divide batch {N}")
    G = N // B
    L, Lh = B * HW, B * HWh

    # Channels-first, Cin zero-padded to a sublane multiple (aligned im2col tap
    # blocks), B images lane-packed per grid step -> (G, Cin_p, B*HW).
    Cin_p = -(-Cin // 8) * 8
    x = x_nchw.reshape(N, Cin, HW).astype(jnp.float32)
    if Cin_p != Cin:
        x = jnp.pad(x, ((0, 0), (0, Cin_p - Cin), (0, 0)))
    x = x.reshape(G, B, Cin_p, HW).transpose(0, 2, 1, 3).reshape(G, Cin_p, L)

    # Conv weights as (Cout, 9*C): column index = (ky*3 + kx)*C + ci.
    if Cin_p != Cin:
        w1 = jnp.pad(w1, ((0, 0), (0, 0), (0, Cin_p - Cin), (0, 0)))
    w1m = jnp.transpose(w1, (3, 0, 1, 2)).reshape(Cout, 9 * Cin_p)
    w2m = jnp.transpose(w2, (3, 0, 1, 2)).reshape(Cout, 9 * Cout)
    b1c = jnp.reshape(b1, (Cout, 1))
    b2c = jnp.reshape(b2, (Cout, 1))

    # Style-head weights, transposed so the kernel produces (Wsz, B) directly.
    a1mT, a1sT = a1w[:Cout, :].T, a1w[Cout:, :].T          # (Wsz, Cout) each
    a2mT, a2sT = a2w[:Cout, :].T, a2w[Cout:, :].T
    a1bT = jnp.reshape(a1b, (Wsz, 1))
    a2bT = jnp.reshape(a2b, (Wsz, 1))

    # --- host-built constants -------------------------------------------------
    # Combined per-tap border masks over the packed lane axis (9, B*HW): zero the
    # taps a 'SAME' conv pads, including cross-image bleed from the cyclic rolls.
    hh = np.repeat(np.arange(H), W)
    ww = np.tile(np.arange(W), H)
    masks = np.ones((9, HW), np.float32)
    for ky in range(3):
        for kx in range(3):
            dy, dx = ky - 1, kx - 1
            ok = (hh + dy >= 0) & (hh + dy < H) & (ww + dx >= 0) & (ww + dx < W)
            masks[ky * 3 + kx] = ok.astype(np.float32)
    masks = np.tile(masks, (1, B))

    # 2x2 average pool as one block-diagonal (B*HW, B*HW/4) selection matmul.
    pool = np.zeros((L, Lh), np.float32)
    qo = np.arange(Lh)
    b_i, r = np.divmod(qo, HWh)
    ho, wo = np.divmod(r, Wh)
    for i in range(2):
        for j in range(2):
            pool[b_i * HW + (2 * ho + i) * W + (2 * wo + j), qo] = 0.25

    # Per-image segment matrices for instance-norm stats (pre-scaled by 1/pixels)
    # and for broadcasting per-image mean / 1/std back onto the lanes.
    def seg_pair(pix):
        s = np.zeros((B * pix, B), np.float32)
        st = np.zeros((B, B * pix), np.float32)
        for b in range(B):
            s[b * pix:(b + 1) * pix, b] = 1.0 / pix
            st[b, b * pix:(b + 1) * pix] = 1.0
        return s, st
    seg1, seg1t = seg_pair(HW)
    seg2, seg2t = seg_pair(HWh)

    kernel = functools.partial(_encoder_block_kernel,
                               H=H, W=W, B=B, dot_dtype=dot_dtype)

    def const(shape):
        return pl.BlockSpec(shape, lambda g, _s=shape: (0,) * len(_s))

    xo, s1, s2 = pl.pallas_call(
        kernel,
        out_shape=(
            jax.ShapeDtypeStruct((G, Cout, Lh), jnp.float32),
            jax.ShapeDtypeStruct((G, Wsz, B), jnp.float32),
            jax.ShapeDtypeStruct((G, Wsz, B), jnp.float32),
        ),
        grid=(G,),
        in_specs=[
            pl.BlockSpec((1, Cin_p, L), lambda g: (g, 0, 0)),
            const((Cout, 9 * Cin_p)), const((Cout, 1)),
            const((Cout, 9 * Cout)), const((Cout, 1)),
            const((Wsz, Cout)), const((Wsz, Cout)), const((Wsz, 1)),
            const((Wsz, Cout)), const((Wsz, Cout)), const((Wsz, 1)),
            const((9, L)), const((L, Lh)),
            const((L, B)), const((B, L)), const((Lh, B)), const((B, Lh)),
        ],
        out_specs=(
            pl.BlockSpec((1, Cout, Lh), lambda g: (g, 0, 0)),
            pl.BlockSpec((1, Wsz, B), lambda g: (g, 0, 0)),
            pl.BlockSpec((1, Wsz, B), lambda g: (g, 0, 0)),
        ),
        # NOTE: at production sizes (Cout ~ 512, HW >= 1024) raise
        # vmem_limit_bytes and/or lower B so the patch values + pool matrix fit.
        compiler_params=pltpu.CompilerParams(
            dimension_semantics=("parallel",)),            # batch steps independent
    )(x, w1m, b1c, w2m, b2c, a1mT, a1sT, a1bT, a2mT, a2sT, a2bT,
      jnp.asarray(masks), jnp.asarray(pool),
      jnp.asarray(seg1), jnp.asarray(seg1t),
      jnp.asarray(seg2), jnp.asarray(seg2t))

    x_out = (xo.reshape(G, Cout, B, Hh, Wh)
               .transpose(0, 2, 1, 3, 4).reshape(N, Cout, Hh, Wh))
    style1 = s1.transpose(0, 2, 1).reshape(N, Wsz, 1, 1)
    style2 = s2.transpose(0, 2, 1).reshape(N, Wsz, 1, 1)
    return x_out, style1, style2


def init_params(key, in_size, out_size, w_size):
    """Deterministic equalized-LR params; conv weight layout (KH, KW, Cin, Cout),
    use-time scale gain/sqrt(fan_in) is baked into the weights."""
    ks = jax.random.split(key, 8)

    def scaled(k, shape, fan_in, gain):
        return jax.random.normal(k, shape, jnp.float32) * (gain / np.sqrt(fan_in))

    return dict(
        w1=scaled(ks[0], (3, 3, in_size, out_size), in_size * 9, np.sqrt(2.0)),
        b1=0.1 * jax.random.normal(ks[1], (1, out_size), jnp.float32),
        w2=scaled(ks[2], (3, 3, out_size, out_size), out_size * 9, np.sqrt(2.0)),
        b2=0.1 * jax.random.normal(ks[3], (1, out_size), jnp.float32),
        a1w=scaled(ks[4], (2 * out_size, w_size), 2 * out_size, 1.0),
        a1b=0.1 * jax.random.normal(ks[5], (1, w_size), jnp.float32),
        a2w=scaled(ks[6], (2 * out_size, w_size), 2 * out_size, 1.0),
        a2b=0.1 * jax.random.normal(ks[7], (1, w_size), jnp.float32),
    )


# ---------------------------------------------------------------------------
# Pure-JAX reference (mirrors the PyTorch forward) for verification.
# ---------------------------------------------------------------------------
def reference_forward(x_nchw, p):
    x = jnp.transpose(x_nchw, (0, 2, 3, 1)).astype(jnp.float32)  # NHWC

    def conv3(v, w, b):
        y = jax.lax.conv_general_dilated(
            v, w, (1, 1), "SAME", dimension_numbers=("NHWC", "HWIO", "NHWC"))
        return y + b.reshape(1, 1, 1, -1)

    def lrelu(v):
        return jnp.where(v >= 0, v, 0.2 * v)

    def inorm(v):
        m = jnp.mean(v, axis=(1, 2), keepdims=True)
        sd = jnp.sqrt(jnp.mean((v - m) ** 2, axis=(1, 2), keepdims=True) + 1e-8)
        return (v - m) / sd, m, sd

    x = lrelu(conv3(x, p["w1"], p["b1"]))
    x, m1, sd1 = inorm(x)
    style1 = jnp.concatenate([m1[:, 0, 0, :], sd1[:, 0, 0, :]], axis=-1) @ p["a1w"] + p["a1b"]
    x = lrelu(conv3(x, p["w2"], p["b2"]))
    N, H, W, C = x.shape
    x = x.reshape(N, H // 2, 2, W // 2, 2, C).mean(axis=(2, 4))
    x, m2, sd2 = inorm(x)
    style2 = jnp.concatenate([m2[:, 0, 0, :], sd2[:, 0, 0, :]], axis=-1) @ p["a2w"] + p["a2b"]
    return (jnp.transpose(x, (0, 3, 1, 2)),
            style1.reshape(N, -1, 1, 1),
            style2.reshape(N, -1, 1, 1))


if __name__ == "__main__":
    key = jax.random.PRNGKey(0)
    kx, kp = jax.random.split(key)

    N, in_size, out_size, w_size, H, W = 4, 4, 8, 16, 16, 16
    x = jax.random.normal(kx, (N, in_size, H, W), jnp.float32)
    params = init_params(kp, in_size, out_size, w_size)

    xr, s1r, s2r = reference_forward(x, params)

    # Default path: 2 images lane-packed per step, grid of 2 parallel steps.
    xo, s1, s2 = style_alae_encoder_block(x, params)
    jax.block_until_ready((xo, s1, s2))
    assert xo.shape == (N, out_size, H // 2, W // 2)
    assert s1.shape == (N, w_size, 1, 1) and s2.shape == (N, w_size, 1, 1)
    assert np.allclose(np.asarray(xo), np.asarray(xr), atol=1e-4, rtol=1e-4)
    assert np.allclose(np.asarray(s1), np.asarray(s1r), atol=1e-4, rtol=1e-4)
    assert np.allclose(np.asarray(s2), np.asarray(s2r), atol=1e-4, rtol=1e-4)

    # Single-image-per-step path (lane-reduction stats) also verified.
    xo1, s11, s21 = style_alae_encoder_block(x, params, images_per_step=1)
    jax.block_until_ready((xo1, s11, s21))
    assert np.allclose(np.asarray(xo1), np.asarray(xr), atol=1e-4, rtol=1e-4)
    assert np.allclose(np.asarray(s11), np.asarray(s1r), atol=1e-4, rtol=1e-4)
    assert np.allclose(np.asarray(s21), np.asarray(s2r), atol=1e-4, rtol=1e-4)

    print("KERNEL_OK")
</pallas_src>

<mosaic_0001>
module attributes {stable_mosaic.version = 11 : i64} {
  func.func @_encoder_block_kernel(%arg0: i32, %arg1: memref<1x8x512xf32, #tpu.memory_space<vmem>>, %arg2: memref<8x72xf32, #tpu.memory_space<vmem>>, %arg3: memref<8x1xf32, #tpu.memory_space<vmem>>, %arg4: memref<8x72xf32, #tpu.memory_space<vmem>>, %arg5: memref<8x1xf32, #tpu.memory_space<vmem>>, %arg6: memref<16x8xf32, #tpu.memory_space<vmem>>, %arg7: memref<16x8xf32, #tpu.memory_space<vmem>>, %arg8: memref<16x1xf32, #tpu.memory_space<vmem>>, %arg9: memref<16x8xf32, #tpu.memory_space<vmem>>, %arg10: memref<16x8xf32, #tpu.memory_space<vmem>>, %arg11: memref<16x1xf32, #tpu.memory_space<vmem>>, %arg12: memref<9x512xf32, #tpu.memory_space<vmem>>, %arg13: memref<512x128xf32, #tpu.memory_space<vmem>>, %arg14: memref<512x2xf32, #tpu.memory_space<vmem>>, %arg15: memref<2x512xf32, #tpu.memory_space<vmem>>, %arg16: memref<128x2xf32, #tpu.memory_space<vmem>>, %arg17: memref<2x128xf32, #tpu.memory_space<vmem>>, %arg18: memref<1x8x128xf32, #tpu.memory_space<vmem>>, %arg19: memref<1x16x2xf32, #tpu.memory_space<vmem>>, %arg20: memref<1x16x2xf32, #tpu.memory_space<vmem>>) attributes {dimension_semantics = [#tpu.dimension_semantics<parallel>], iteration_bounds = array<i64: 2>, scalar_prefetch = 0 : i64, scratch_operands = 0 : i64, tpu.core_type = #tpu.core_type<tc>, window_params = [{transform_indices = @transform_0, window_bounds = array<i64: 1, 8, 512>}, {pipeline_mode = #tpu.pipeline_mode<synchronous>, transform_indices = @transform_1, window_bounds = array<i64: 8, 72>}, {pipeline_mode = #tpu.pipeline_mode<synchronous>, transform_indices = @transform_2, window_bounds = array<i64: 8, 1>}, {pipeline_mode = #tpu.pipeline_mode<synchronous>, transform_indices = @transform_3, window_bounds = array<i64: 8, 72>}, {pipeline_mode = #tpu.pipeline_mode<synchronous>, transform_indices = @transform_4, window_bounds = array<i64: 8, 1>}, {pipeline_mode = #tpu.pipeline_mode<synchronous>, transform_indices = @transform_5, window_bounds = array<i64: 16, 8>}, {pipeline_mode = #tpu.pipeline_mode<synchronous>, transform_indices = @transform_6, window_bounds = array<i64: 16, 8>}, {pipeline_mode = #tpu.pipeline_mode<synchronous>, transform_indices = @transform_7, window_bounds = array<i64: 16, 1>}, {pipeline_mode = #tpu.pipeline_mode<synchronous>, transform_indices = @transform_8, window_bounds = array<i64: 16, 8>}, {pipeline_mode = #tpu.pipeline_mode<synchronous>, transform_indices = @transform_9, window_bounds = array<i64: 16, 8>}, {pipeline_mode = #tpu.pipeline_mode<synchronous>, transform_indices = @transform_10, window_bounds = array<i64: 16, 1>}, {pipeline_mode = #tpu.pipeline_mode<synchronous>, transform_indices = @transform_11, window_bounds = array<i64: 9, 512>}, {pipeline_mode = #tpu.pipeline_mode<synchronous>, transform_indices = @transform_12, window_bounds = array<i64: 512, 128>}, {pipeline_mode = #tpu.pipeline_mode<synchronous>, transform_indices = @transform_13, window_bounds = array<i64: 512, 2>}, {pipeline_mode = #tpu.pipeline_mode<synchronous>, transform_indices = @transform_14, window_bounds = array<i64: 2, 512>}, {pipeline_mode = #tpu.pipeline_mode<synchronous>, transform_indices = @transform_15, window_bounds = array<i64: 128, 2>}, {pipeline_mode = #tpu.pipeline_mode<synchronous>, transform_indices = @transform_16, window_bounds = array<i64: 2, 128>}, {transform_indices = @transform_17, window_bounds = array<i64: 1, 8, 128>}, {transform_indices = @transform_18, window_bounds = array<i64: 1, 16, 2>}, {transform_indices = @transform_19, window_bounds = array<i64: 1, 16, 2>}]} {
    %c0 = arith.constant 0 : index
    %c0_0 = arith.constant 0 : index
    %0 = vector.load %arg12[%c0, %c0_0] : memref<9x512xf32, #tpu.memory_space<vmem>>, vector<9x512xf32>
    %c0_1 = arith.constant 0 : index
    %c0_2 = arith.constant 0 : index
    %c0_3 = arith.constant 0 : index
    %1 = vector.load %arg1[%c0_1, %c0_2, %c0_3] : memref<1x8x512xf32, #tpu.memory_space<vmem>>, vector<1x8x512xf32>
    %2 = vector.shape_cast %1 : vector<1x8x512xf32> to vector<8x512xf32>
    %c17_i32 = arith.constant 17 : i32
    %3 = tpu.dynamic_rotate %2 by %c17_i32 dim 1 : vector<8x512xf32>, i32 -> vector<8x512xf32>
    %4 = vector.extract_strided_slice %0 {offsets = [0, 0], sizes = [1, 512], strides = [1, 1]} : vector<9x512xf32> to vector<1x512xf32>
    %5 = vector.broadcast %4 : vector<1x512xf32> to vector<8x512xf32>
    %6 = arith.mulf %3, %5 : vector<8x512xf32>
    %c16_i32 = arith.constant 16 : i32
    %7 = tpu.dynamic_rotate %2 by %c16_i32 dim 1 : vector<8x512xf32>, i32 -> vector<8x512xf32>
    %8 = vector.extract_strided_slice %0 {offsets = [1, 0], sizes = [1, 512], strides = [1, 1]} : vector<9x512xf32> to vector<1x512xf32>
    %9 = vector.broadcast %8 : vector<1x512xf32> to vector<8x512xf32>
    %10 = arith.mulf %7, %9 : vector<8x512xf32>
    %c15_i32 = arith.constant 15 : i32
    %11 = tpu.dynamic_rotate %2 by %c15_i32 dim 1 : vector<8x512xf32>, i32 -> vector<8x512xf32>
    %12 = vector.extract_strided_slice %0 {offsets = [2, 0], sizes = [1, 512], strides = [1, 1]} : vector<9x512xf32> to vector<1x512xf32>
    %13 = vector.broadcast %12 : vector<1x512xf32> to vector<8x512xf32>
    %14 = arith.mulf %11, %13 : vector<8x512xf32>
    %c1_i32 = arith.constant 1 : i32
    %15 = tpu.dynamic_rotate %2 by %c1_i32 dim 1 : vector<8x512xf32>, i32 -> vector<8x512xf32>
    %16 = vector.extract_strided_slice %0 {offsets = [3, 0], sizes = [1, 512], strides = [1, 1]} : vector<9x512xf32> to vector<1x512xf32>
    %17 = vector.broadcast %16 : vector<1x512xf32> to vector<8x512xf32>
    %18 = arith.mulf %15, %17 : vector<8x512xf32>
    %c511_i32 = arith.constant 511 : i32
    %19 = tpu.dynamic_rotate %2 by %c511_i32 dim 1 : vector<8x512xf32>, i32 -> vector<8x512xf32>
    %20 = vector.extract_strided_slice %0 {offsets = [5, 0], sizes = [1, 512], strides = [1, 1]} : vector<9x512xf32> to vector<1x512xf32>
    %21 = vector.broadcast %20 : vector<1x512xf32> to vector<8x512xf32>
    %22 = arith.mulf %19, %21 : vector<8x512xf32>
    %c497_i32 = arith.constant 497 : i32
    %23 = tpu.dynamic_rotate %2 by %c497_i32 dim 1 : vector<8x512xf32>, i32 -> vector<8x512xf32>
    %24 = vector.extract_strided_slice %0 {offsets = [6, 0], sizes = [1, 512], strides = [1, 1]} : vector<9x512xf32> to vector<1x512xf32>
    %25 = vector.broadcast %24 : vector<1x512xf32> to vector<8x512xf32>
    %26 = arith.mulf %23, %25 : vector<8x512xf32>
    %c496_i32 = arith.constant 496 : i32
    %27 = tpu.dynamic_rotate %2 by %c496_i32 dim 1 : vector<8x512xf32>, i32 -> vector<8x512xf32>
    %28 = vector.extract_strided_slice %0 {offsets = [7, 0], sizes = [1, 512], strides = [1, 1]} : vector<9x512xf32> to vector<1x512xf32>
    %29 = vector.broadcast %28 : vector<1x512xf32> to vector<8x512xf32>
    %30 = arith.mulf %27, %29 : vector<8x512xf32>
    %c495_i32 = arith.constant 495 : i32
    %31 = tpu.dynamic_rotate %2 by %c495_i32 dim 1 : vector<8x512xf32>, i32 -> vector<8x512xf32>
    %32 = vector.extract_strided_slice %0 {offsets = [8, 0], sizes = [1, 512], strides = [1, 1]} : vector<9x512xf32> to vector<1x512xf32>
    %33 = vector.broadcast %32 : vector<1x512xf32> to vector<8x512xf32>
    %34 = arith.mulf %31, %33 : vector<8x512xf32>
    %35 = tpu.concatenate %6, %10, %14, %18, %2, %22, %26, %30, %34 in 0 : vector<8x512xf32>, vector<8x512xf32>, vector<8x512xf32>, vector<8x512xf32>, vector<8x512xf32>, vector<8x512xf32>, vector<8x512xf32>, vector<8x512xf32>, vector<8x512xf32> -> vector<72x512xf32>
    %c0_4 = arith.constant 0 : index
    %c0_5 = arith.constant 0 : index
    %36 = vector.load %arg2[%c0_4, %c0_5] : memref<8x72xf32, #tpu.memory_space<vmem>>, vector<8x72xf32>
    %cst = arith.constant dense<0.000000e+00> : vector<8x512xf32>
    %37 = tpu.matmul %36, %35, %cst {dimension_numbers = #tpu.dot_dimension_numbers<[1], [0], [0], [1], [0, 0, 1, 1], [], []>} : vector<8x72xf32>, vector<72x512xf32>, vector<8x512xf32> -> vector<8x512xf32>
    %c0_6 = arith.constant 0 : index
    %c0_7 = arith.constant 0 : index
    %38 = vector.load %arg3[%c0_6, %c0_7] : memref<8x1xf32, #tpu.memory_space<vmem>>, vector<8x1xf32>
    %39 = vector.broadcast %38 : vector<8x1xf32> to vector<8x512xf32>
    %40 = arith.addf %37, %39 : vector<8x512xf32>
    %cst_8 = arith.constant 2.000000e-01 : f32
    %41 = vector.broadcast %cst_8 : f32 to vector<8x512xf32>
    %42 = arith.mulf %41, %40 : vector<8x512xf32>
    %43 = arith.maximumf %40, %42 : vector<8x512xf32>
    %c0_9 = arith.constant 0 : index
    %c0_10 = arith.constant 0 : index
    %44 = vector.load %arg14[%c0_9, %c0_10] : memref<512x2xf32, #tpu.memory_space<vmem>>, vector<512x2xf32>
    %c0_11 = arith.constant 0 : index
    %c0_12 = arith.constant 0 : index
    %45 = vector.load %arg15[%c0_11, %c0_12] : memref<2x512xf32, #tpu.memory_space<vmem>>, vector<2x512xf32>
    %cst_13 = arith.constant dense<0.000000e+00> : vector<8x2xf32>
    %46 = tpu.matmul %43, %44, %cst_13 {dimension_numbers = #tpu.dot_dimension_numbers<[1], [0], [0], [1], [0, 0, 1, 1], [], []>} : vector<8x512xf32>, vector<512x2xf32>, vector<8x2xf32> -> vector<8x2xf32>
    %cst_14 = arith.constant dense<0.000000e+00> : vector<8x512xf32>
    %47 = tpu.matmul %46, %45, %cst_14 {dimension_numbers = #tpu.dot_dimension_numbers<[1], [0], [0], [1], [0, 0, 1, 1], [], []>} : vector<8x2xf32>, vector<2x512xf32>, vector<8x512xf32> -> vector<8x512xf32>
    %48 = arith.subf %43, %47 : vector<8x512xf32>
    %49 = arith.mulf %48, %48 : vector<8x512xf32>
    %cst_15 = arith.constant dense<0.000000e+00> : vector<8x2xf32>
    %50 = tpu.matmul %49, %44, %cst_15 {dimension_numbers = #tpu.dot_dimension_numbers<[1], [0], [0], [1], [0, 0, 1, 1], [], []>} : vector<8x512xf32>, vector<512x2xf32>, vector<8x2xf32> -> vector<8x2xf32>
    %cst_16 = arith.constant 9.99999993E-9 : f32
    %51 = vector.broadcast %cst_16 : f32 to vector<8x2xf32>
    %52 = arith.addf %50, %51 : vector<8x2xf32>
    %53 = math.sqrt %52 : vector<8x2xf32>
    %cst_17 = arith.constant 1.000000e+00 : f32
    %54 = vector.broadcast %cst_17 : f32 to vector<8x2xf32>
    %55 = arith.divf %54, %53 : vector<8x2xf32>
    %cst_18 = arith.constant dense<0.000000e+00> : vector<8x512xf32>
    %56 = tpu.matmul %55, %45, %cst_18 {dimension_numbers = #tpu.dot_dimension_numbers<[1], [0], [0], [1], [0, 0, 1, 1], [], []>} : vector<8x2xf32>, vector<2x512xf32>, vector<8x512xf32> -> vector<8x512xf32>
    %57 = arith.mulf %48, %56 : vector<8x512xf32>
    %c0_19 = arith.constant 0 : index
    %c0_20 = arith.constant 0 : index
    %58 = vector.load %arg6[%c0_19, %c0_20] : memref<16x8xf32, #tpu.memory_space<vmem>>, vector<16x8xf32>
    %cst_21 = arith.constant dense<0.000000e+00> : vector<16x2xf32>
    %59 = tpu.matmul %58, %46, %cst_21 {dimension_numbers = #tpu.dot_dimension_numbers<[1], [0], [0], [1], [0, 0, 1, 1], [], []>} : vector<16x8xf32>, vector<8x2xf32>, vector<16x2xf32> -> vector<16x2xf32>
    %c0_22 = arith.constant 0 : index
    %c0_23 = arith.constant 0 : index
    %60 = vector.load %arg7[%c0_22, %c0_23] : memref<16x8xf32, #tpu.memory_space<vmem>>, vector<16x8xf32>
    %cst_24 = arith.constant dense<0.000000e+00> : vector<16x2xf32>
    %61 = tpu.matmul %60, %53, %cst_24 {dimension_numbers = #tpu.dot_dimension_numbers<[1], [0], [0], [1], [0, 0, 1, 1], [], []>} : vector<16x8xf32>, vector<8x2xf32>, vector<16x2xf32> -> vector<16x2xf32>
    %62 = arith.addf %59, %61 : vector<16x2xf32>
    %c0_25 = arith.constant 0 : index
    %c0_26 = arith.constant 0 : index
    %63 = vector.load %arg8[%c0_25, %c0_26] : memref<16x1xf32, #tpu.memory_space<vmem>>, vector<16x1xf32>
    %64 = vector.broadcast %63 : vector<16x1xf32> to vector<16x2xf32>
    %65 = arith.addf %62, %64 : vector<16x2xf32>
    %c0_27 = arith.constant 0 : index
    %c0_28 = arith.constant 0 : index
    %c0_29 = arith.constant 0 : index
    %66 = vector.load %arg19[%c0_27, %c0_28, %c0_29] : memref<1x16x2xf32, #tpu.memory_space<vmem>>, vector<1x16x2xf32>
    %67 = vector.shape_cast %66 : vector<1x16x2xf32> to vector<16x2xf32>
    %68 = vector.shape_cast %65 : vector<16x2xf32> to vector<1x16x2xf32>
    tpu.vector_store %arg19[%c0_27, %c0_28, %c0_29], %68 {strides = array<i32>} : memref<1x16x2xf32, #tpu.memory_space<vmem>>, vector<1x16x2xf32>,
    %c17_i32_30 = arith.constant 17 : i32
    %69 = tpu.dynamic_rotate %57 by %c17_i32_30 dim 1 : vector<8x512xf32>, i32 -> vector<8x512xf32>
    %70 = vector.extract_strided_slice %0 {offsets = [0, 0], sizes = [1, 512], strides = [1, 1]} : vector<9x512xf32> to vector<1x512xf32>
    %71 = vector.broadcast %70 : vector<1x512xf32> to vector<8x512xf32>
    %72 = arith.mulf %69, %71 : vector<8x512xf32>
    %c16_i32_31 = arith.constant 16 : i32
    %73 = tpu.dynamic_rotate %57 by %c16_i32_31 dim 1 : vector<8x512xf32>, i32 -> vector<8x512xf32>
    %74 = vector.extract_strided_slice %0 {offsets = [1, 0], sizes = [1, 512], strides = [1, 1]} : vector<9x512xf32> to vector<1x512xf32>
    %75 = vector.broadcast %74 : vector<1x512xf32> to vector<8x512xf32>
    %76 = arith.mulf %73, %75 : vector<8x512xf32>
    %c15_i32_32 = arith.constant 15 : i32
    %77 = tpu.dynamic_rotate %57 by %c15_i32_32 dim 1 : vector<8x512xf32>, i32 -> vector<8x512xf32>
    %78 = vector.extract_strided_slice %0 {offsets = [2, 0], sizes = [1, 512], strides = [1, 1]} : vector<9x512xf32> to vector<1x512xf32>
    %79 = vector.broadcast %78 : vector<1x512xf32> to vector<8x512xf32>
    %80 = arith.mulf %77, %79 : vector<8x512xf32>
    %c1_i32_33 = arith.constant 1 : i32
    %81 = tpu.dynamic_rotate %57 by %c1_i32_33 dim 1 : vector<8x512xf32>, i32 -> vector<8x512xf32>
    %82 = vector.extract_strided_slice %0 {offsets = [3, 0], sizes = [1, 512], strides = [1, 1]} : vector<9x512xf32> to vector<1x512xf32>
    %83 = vector.broadcast %82 : vector<1x512xf32> to vector<8x512xf32>
    %84 = arith.mulf %81, %83 : vector<8x512xf32>
    %c511_i32_34 = arith.constant 511 : i32
    %85 = tpu.dynamic_rotate %57 by %c511_i32_34 dim 1 : vector<8x512xf32>, i32 -> vector<8x512xf32>
    %86 = vector.extract_strided_slice %0 {offsets = [5, 0], sizes = [1, 512], strides = [1, 1]} : vector<9x512xf32> to vector<1x512xf32>
    %87 = vector.broadcast %86 : vector<1x512xf32> to vector<8x512xf32>
    %88 = arith.mulf %85, %87 : vector<8x512xf32>
    %c497_i32_35 = arith.constant 497 : i32
    %89 = tpu.dynamic_rotate %57 by %c497_i32_35 dim 1 : vector<8x512xf32>, i32 -> vector<8x512xf32>
    %90 = vector.extract_strided_slice %0 {offsets = [6, 0], sizes = [1, 512], strides = [1, 1]} : vector<9x512xf32> to vector<1x512xf32>
    %91 = vector.broadcast %90 : vector<1x512xf32> to vector<8x512xf32>
    %92 = arith.mulf %89, %91 : vector<8x512xf32>
    %c496_i32_36 = arith.constant 496 : i32
    %93 = tpu.dynamic_rotate %57 by %c496_i32_36 dim 1 : vector<8x512xf32>, i32 -> vector<8x512xf32>
    %94 = vector.extract_strided_slice %0 {offsets = [7, 0], sizes = [1, 512], strides = [1, 1]} : vector<9x512xf32> to vector<1x512xf32>
    %95 = vector.broadcast %94 : vector<1x512xf32> to vector<8x512xf32>
    %96 = arith.mulf %93, %95 : vector<8x512xf32>
    %c495_i32_37 = arith.constant 495 : i32
    %97 = tpu.dynamic_rotate %57 by %c495_i32_37 dim 1 : vector<8x512xf32>, i32 -> vector<8x512xf32>
    %98 = vector.extract_strided_slice %0 {offsets = [8, 0], sizes = [1, 512], strides = [1, 1]} : vector<9x512xf32> to vector<1x512xf32>
    %99 = vector.broadcast %98 : vector<1x512xf32> to vector<8x512xf32>
    %100 = arith.mulf %97, %99 : vector<8x512xf32>
    %101 = tpu.concatenate %72, %76, %80, %84, %57, %88, %92, %96, %100 in 0 : vector<8x512xf32>, vector<8x512xf32>, vector<8x512xf32>, vector<8x512xf32>, vector<8x512xf32>, vector<8x512xf32>, vector<8x512xf32>, vector<8x512xf32>, vector<8x512xf32> -> vector<72x512xf32>
    %c0_38 = arith.constant 0 : index
    %c0_39 = arith.constant 0 : index
    %102 = vector.load %arg4[%c0_38, %c0_39] : memref<8x72xf32, #tpu.memory_space<vmem>>, vector<8x72xf32>
    %cst_40 = arith.constant dense<0.000000e+00> : vector<8x512xf32>
    %103 = tpu.matmul %102, %101, %cst_40 {dimension_numbers = #tpu.dot_dimension_numbers<[1], [0], [0], [1], [0, 0, 1, 1], [], []>} : vector<8x72xf32>, vector<72x512xf32>, vector<8x512xf32> -> vector<8x512xf32>
    %c0_41 = arith.constant 0 : index
    %c0_42 = arith.constant 0 : index
    %104 = vector.load %arg5[%c0_41, %c0_42] : memref<8x1xf32, #tpu.memory_space<vmem>>, vector<8x1xf32>
    %105 = vector.broadcast %104 : vector<8x1xf32> to vector<8x512xf32>
    %106 = arith.addf %103, %105 : vector<8x512xf32>
    %cst_43 = arith.constant 2.000000e-01 : f32
    %107 = vector.broadcast %cst_43 : f32 to vector<8x512xf32>
    %108 = arith.mulf %107, %106 : vector<8x512xf32>
    %109 = arith.maximumf %106, %108 : vector<8x512xf32>
    %c0_44 = arith.constant 0 : index
    %c0_45 = arith.constant 0 : index
    %110 = vector.load %arg13[%c0_44, %c0_45] : memref<512x128xf32, #tpu.memory_space<vmem>>, vector<512x128xf32>
    %cst_46 = arith.constant dense<0.000000e+00> : vector<8x128xf32>
    %111 = tpu.matmul %109, %110, %cst_46 {dimension_numbers = #tpu.dot_dimension_numbers<[1], [0], [0], [1], [0, 0, 1, 1], [], []>} : vector<8x512xf32>, vector<512x128xf32>, vector<8x128xf32> -> vector<8x128xf32>
    %c0_47 = arith.constant 0 : index
    %c0_48 = arith.constant 0 : index
    %112 = vector.load %arg16[%c0_47, %c0_48] : memref<128x2xf32, #tpu.memory_space<vmem>>, vector<128x2xf32>
    %c0_49 = arith.constant 0 : index
    %c0_50 = arith.constant 0 : index
    %113 = vector.load %arg17[%c0_49, %c0_50] : memref<2x128xf32, #tpu.memory_space<vmem>>, vector<2x128xf32>
    %cst_51 = arith.constant dense<0.000000e+00> : vector<8x2xf32>
    %114 = tpu.matmul %111, %112, %cst_51 {dimension_numbers = #tpu.dot_dimension_numbers<[1], [0], [0], [1], [0, 0, 1, 1], [], []>} : vector<8x128xf32>, vector<128x2xf32>, vector<8x2xf32> -> vector<8x2xf32>
    %cst_52 = arith.constant dense<0.000000e+00> : vector<8x128xf32>
    %115 = tpu.matmul %114, %113, %cst_52 {dimension_numbers = #tpu.dot_dimension_numbers<[1], [0], [0], [1], [0, 0, 1, 1], [], []>} : vector<8x2xf32>, vector<2x128xf32>, vector<8x128xf32> -> vector<8x128xf32>
    %116 = arith.subf %111, %115 : vector<8x128xf32>
    %117 = arith.mulf %116, %116 : vector<8x128xf32>
    %cst_53 = arith.constant dense<0.000000e+00> : vector<8x2xf32>
    %118 = tpu.matmul %117, %112, %cst_53 {dimension_numbers = #tpu.dot_dimension_numbers<[1], [0], [0], [1], [0, 0, 1, 1], [], []>} : vector<8x128xf32>, vector<128x2xf32>, vector<8x2xf32> -> vector<8x2xf32>
    %cst_54 = arith.constant 9.99999993E-9 : f32
    %119 = vector.broadcast %cst_54 : f32 to vector<8x2xf32>
    %120 = arith.addf %118, %119 : vector<8x2xf32>
    %121 = math.sqrt %120 : vector<8x2xf32>
    %cst_55 = arith.constant 1.000000e+00 : f32
    %122 = vector.broadcast %cst_55 : f32 to vector<8x2xf32>
    %123 = arith.divf %122, %121 : vector<8x2xf32>
    %cst_56 = arith.constant dense<0.000000e+00> : vector<8x128xf32>
    %124 = tpu.matmul %123, %113, %cst_56 {dimension_numbers = #tpu.dot_dimension_numbers<[1], [0], [0], [1], [0, 0, 1, 1], [], []>} : vector<8x2xf32>, vector<2x128xf32>, vector<8x128xf32> -> vector<8x128xf32>
    %125 = arith.mulf %116, %124 : vector<8x128xf32>
    %c0_57 = arith.constant 0 : index
    %c0_58 = arith.constant 0 : index
    %c0_59 = arith.constant 0 : index
    %126 = vector.load %arg18[%c0_57, %c0_58, %c0_59] : memref<1x8x128xf32, #tpu.memory_space<vmem>>, vector<1x8x128xf32>
    %127 = vector.shape_cast %126 : vector<1x8x128xf32> to vector<8x128xf32>
    %128 = vector.shape_cast %125 : vector<8x128xf32> to vector<1x8x128xf32>
    tpu.vector_store %arg18[%c0_57, %c0_58, %c0_59], %128 {strides = array<i32>} : memref<1x8x128xf32, #tpu.memory_space<vmem>>, vector<1x8x128xf32>,
    %c0_60 = arith.constant 0 : index
    %c0_61 = arith.constant 0 : index
    %129 = vector.load %arg9[%c0_60, %c0_61] : memref<16x8xf32, #tpu.memory_space<vmem>>, vector<16x8xf32>
    %cst_62 = arith.constant dense<0.000000e+00> : vector<16x2xf32>
    %130 = tpu.matmul %129, %114, %cst_62 {dimension_numbers = #tpu.dot_dimension_numbers<[1], [0], [0], [1], [0, 0, 1, 1], [], []>} : vector<16x8xf32>, vector<8x2xf32>, vector<16x2xf32> -> vector<16x2xf32>
    %c0_63 = arith.constant 0 : index
    %c0_64 = arith.constant 0 : index
    %131 = vector.load %arg10[%c0_63, %c0_64] : memref<16x8xf32, #tpu.memory_space<vmem>>, vector<16x8xf32>
    %cst_65 = arith.constant dense<0.000000e+00> : vector<16x2xf32>
    %132 = tpu.matmul %131, %121, %cst_65 {dimension_numbers = #tpu.dot_dimension_numbers<[1], [0], [0], [1], [0, 0, 1, 1], [], []>} : vector<16x8xf32>, vector<8x2xf32>, vector<16x2xf32> -> vector<16x2xf32>
    %133 = arith.addf %130, %132 : vector<16x2xf32>
    %c0_66 = arith.constant 0 : index
    %c0_67 = arith.constant 0 : index
    %134 = vector.load %arg11[%c0_66, %c0_67] : memref<16x1xf32, #tpu.memory_space<vmem>>, vector<16x1xf32>
    %135 = vector.broadcast %134 : vector<16x1xf32> to vector<16x2xf32>
    %136 = arith.addf %133, %135 : vector<16x2xf32>
    %c0_68 = arith.constant 0 : index
    %c0_69 = arith.constant 0 : index
    %c0_70 = arith.constant 0 : index
    %137 = vector.load %arg20[%c0_68, %c0_69, %c0_70] : memref<1x16x2xf32, #tpu.memory_space<vmem>>, vector<1x16x2xf32>
    %138 = vector.shape_cast %137 : vector<1x16x2xf32> to vector<16x2xf32>
    %139 = vector.shape_cast %136 : vector<16x2xf32> to vector<1x16x2xf32>
    tpu.vector_store %arg20[%c0_68, %c0_69, %c0_70], %139 {strides = array<i32>} : memref<1x16x2xf32, #tpu.memory_space<vmem>>, vector<1x16x2xf32>,
    return
  }
  func.func @transform_0(%arg0: i32) -> (i32, i32, i32) {
    %c0_i32 = arith.constant 0 : i32
    %c0_i32_0 = arith.constant 0 : i32
    %c0_i32_1 = arith.constant 0 : i32
    return %arg0, %c0_i32, %c0_i32_0 : i32, i32, i32
  }
  func.func @transform_1(%arg0: i32) -> (i32, i32) {
    %c0_i32 = arith.constant 0 : i32
    %c0_i32_0 = arith.constant 0 : i32
    %c0_i32_1 = arith.constant 0 : i32
    return %c0_i32, %c0_i32_0 : i32, i32
  }
  func.func @transform_2(%arg0: i32) -> (i32, i32) {
    %c0_i32 = arith.constant 0 : i32
    %c0_i32_0 = arith.constant 0 : i32
    %c0_i32_1 = arith.constant 0 : i32
    return %c0_i32, %c0_i32_0 : i32, i32
  }
  func.func @transform_3(%arg0: i32) -> (i32, i32) {
    %c0_i32 = arith.constant 0 : i32
    %c0_i32_0 = arith.constant 0 : i32
    %c0_i32_1 = arith.constant 0 : i32
    return %c0_i32, %c0_i32_0 : i32, i32
  }
  func.func @transform_4(%arg0: i32) -> (i32, i32) {
    %c0_i32 = arith.constant 0 : i32
    %c0_i32_0 = arith.constant 0 : i32
    %c0_i32_1 = arith.constant 0 : i32
    return %c0_i32, %c0_i32_0 : i32, i32
  }
  func.func @transform_5(%arg0: i32) -> (i32, i32) {
    %c0_i32 = arith.constant 0 : i32
    %c0_i32_0 = arith.constant 0 : i32
    %c0_i32_1 = arith.constant 0 : i32
    return %c0_i32, %c0_i32_0 : i32, i32
  }
  func.func @transform_6(%arg0: i32) -> (i32, i32) {
    %c0_i32 = arith.constant 0 : i32
    %c0_i32_0 = arith.constant 0 : i32
    %c0_i32_1 = arith.constant 0 : i32
    return %c0_i32, %c0_i32_0 : i32, i32
  }
  func.func @transform_7(%arg0: i32) -> (i32, i32) {
    %c0_i32 = arith.constant 0 : i32
    %c0_i32_0 = arith.constant 0 : i32
    %c0_i32_1 = arith.constant 0 : i32
    return %c0_i32, %c0_i32_0 : i32, i32
  }
  func.func @transform_8(%arg0: i32) -> (i32, i32) {
    %c0_i32 = arith.constant 0 : i32
    %c0_i32_0 = arith.constant 0 : i32
    %c0_i32_1 = arith.constant 0 : i32
    return %c0_i32, %c0_i32_0 : i32, i32
  }
  func.func @transform_9(%arg0: i32) -> (i32, i32) {
    %c0_i32 = arith.constant 0 : i32
    %c0_i32_0 = arith.constant 0 : i32
    %c0_i32_1 = arith.constant 0 : i32
    return %c0_i32, %c0_i32_0 : i32, i32
  }
  func.func @transform_10(%arg0: i32) -> (i32, i32) {
    %c0_i32 = arith.constant 0 : i32
    %c0_i32_0 = arith.constant 0 : i32
    %c0_i32_1 = arith.constant 0 : i32
    return %c0_i32, %c0_i32_0 : i32, i32
  }
  func.func @transform_11(%arg0: i32) -> (i32, i32) {
    %c0_i32 = arith.constant 0 : i32
    %c0_i32_0 = arith.constant 0 : i32
    %c0_i32_1 = arith.constant 0 : i32
    return %c0_i32, %c0_i32_0 : i32, i32
  }
  func.func @transform_12(%arg0: i32) -> (i32, i32) {
    %c0_i32 = arith.constant 0 : i32
    %c0_i32_0 = arith.constant 0 : i32
    %c0_i32_1 = arith.constant 0 : i32
    return %c0_i32, %c0_i32_0 : i32, i32
  }
  func.func @transform_13(%arg0: i32) -> (i32, i32) {
    %c0_i32 = arith.constant 0 : i32
    %c0_i32_0 = arith.constant 0 : i32
    %c0_i32_1 = arith.constant 0 : i32
    return %c0_i32, %c0_i32_0 : i32, i32
  }
  func.func @transform_14(%arg0: i32) -> (i32, i32) {
    %c0_i32 = arith.constant 0 : i32
    %c0_i32_0 = arith.constant 0 : i32
    %c0_i32_1 = arith.constant 0 : i32
    return %c0_i32, %c0_i32_0 : i32, i32
  }
  func.func @transform_15(%arg0: i32) -> (i32, i32) {
    %c0_i32 = arith.constant 0 : i32
    %c0_i32_0 = arith.constant 0 : i32
    %c0_i32_1 = arith.constant 0 : i32
    return %c0_i32, %c0_i32_0 : i32, i32
  }
  func.func @transform_16(%arg0: i32) -> (i32, i32) {
    %c0_i32 = arith.constant 0 : i32
    %c0_i32_0 = arith.constant 0 : i32
    %c0_i32_1 = arith.constant 0 : i32
    return %c0_i32, %c0_i32_0 : i32, i32
  }
  func.func @transform_17(%arg0: i32) -> (i32, i32, i32) {
    %c0_i32 = arith.constant 0 : i32
    %c0_i32_0 = arith.constant 0 : i32
    %c0_i32_1 = arith.constant 0 : i32
    return %arg0, %c0_i32, %c0_i32_0 : i32, i32, i32
  }
  func.func @transform_18(%arg0: i32) -> (i32, i32, i32) {
    %c0_i32 = arith.constant 0 : i32
    %c0_i32_0 = arith.constant 0 : i32
    %c0_i32_1 = arith.constant 0 : i32
    return %arg0, %c0_i32, %c0_i32_0 : i32, i32, i32
  }
  func.func @transform_19(%arg0: i32) -> (i32, i32, i32) {
    %c0_i32 = arith.constant 0 : i32
    %c0_i32_0 = arith.constant 0 : i32
    %c0_i32_1 = arith.constant 0 : i32
    return %arg0, %c0_i32, %c0_i32_0 : i32, i32, i32
  }
}

</mosaic_0001>

<llo_original>
// kernel: tpu_custom_call.1
$region0: #{tpu_custom_call.1}
  #allocation0 [shape = 'u32[]', space=smem, size = 0x4, offset = 0x4, fixed_abs, tag = 'smem constant byte address 0x4 - core index']
  #allocation1 [shape = 'u32[144,128]{1,0:T(1,128)}', space=vmem, size = 0x12000, scoped, tag = 'internal scratch']
  %s0 = inlined_call_operand.vmem [shape: f32[2,8,512], index: 0, kind: input, shape index: {}]
  %s1 = inlined_call_operand.vmem [shape: f32[8,72], index: 1, kind: input, shape index: {}]
  %s2 = inlined_call_operand.vmem [shape: f32[8,1], index: 2, kind: input, shape index: {}]
  %s3 = inlined_call_operand.vmem [shape: f32[8,72], index: 3, kind: input, shape index: {}]
  %s4 = inlined_call_operand.vmem [shape: f32[8,1], index: 4, kind: input, shape index: {}]
  %s5 = inlined_call_operand.vmem [shape: f32[16,8], index: 5, kind: input, shape index: {}]
  %s6 = inlined_call_operand.vmem [shape: f32[16,8], index: 6, kind: input, shape index: {}]
  %s7 = inlined_call_operand.vmem [shape: f32[16,1], index: 7, kind: input, shape index: {}]
  %s8 = inlined_call_operand.vmem [shape: f32[16,8], index: 8, kind: input, shape index: {}]
  %s9 = inlined_call_operand.vmem [shape: f32[16,8], index: 9, kind: input, shape index: {}]
  %s10 = inlined_call_operand.vmem [shape: f32[16,1], index: 10, kind: input, shape index: {}]
  %s11 = inlined_call_operand.vmem [shape: f32[9,512], index: 11, kind: input, shape index: {}]
  %s12 = inlined_call_operand.vmem [shape: f32[512,128], index: 12, kind: input, shape index: {}]
  %s13 = inlined_call_operand.vmem [shape: f32[512,2], index: 13, kind: input, shape index: {}]
  %s14 = inlined_call_operand.vmem [shape: f32[2,512], index: 14, kind: input, shape index: {}]
  %s15 = inlined_call_operand.vmem [shape: f32[128,2], index: 15, kind: input, shape index: {}]
  %s16 = inlined_call_operand.vmem [shape: f32[2,128], index: 16, kind: input, shape index: {}]
  %s17 = inlined_call_operand.hbm [shape: f32[2,8,128], index: 17, kind: output, shape index: {0}]
  %s18 = inlined_call_operand.vmem [shape: f32[2,16,2], index: 18, kind: output, shape index: {1}]
  %s19 = inlined_call_operand.vmem [shape: f32[2,16,2], index: 19, kind: output, shape index: {2}]
  %20 = xla_tuple %s17, %s18, %s19
  %s21 = sld [smem:[#allocation0]]
  $region117: #{tpu_custom_call.1} parent=0
    _
  %s23 = ssub.s32 1, %s21
  %s24 = scalar_select 0, %s23, %s21
  $region1: #{tpu_custom_call.1} parent=0
    #allocation2 [shape = 'u8[8192]{0}', space=vmem, size = 0x2000, scoped, tag = 'output window, operand 0']
    #allocation3 [shape = 's32[2]{0}', space=sflag, size = 0x8, scoped, tag = 'scoped memory for tpu_custom_call.1']
    %25 = vsyncpa [#allocation3], 0
    %s26 = scalar_lea.sflag [#allocation3], 1
    %27 = vsyncpa %s26, 0
    loop: start=0, step=1, limit=4
    $region2: #{tpu_custom_call.1} parent=1 // loop_pre_header
      _
    $region3: #{tpu_custom_call.1} parent=1 // loop_header
      %s29 = sphi 0, %s33
      %p30 = scmp.ge.s32.totalorder %s29, 4
      %s39 = sphi 0, %s41
      %s42 = sphi 0, %s39
      %s43 = sphi 0, %s42
      %s59 = sphi 0, %s43
      %s63 = sphi 0, %s63
      %s65 = sphi 0, %s63
      %s66 = sphi 0, %s65
      %s80 = sphi 0, %s66
      %s84 = sphi 0, %s84
      %s86 = sphi 0, %s84
      %s87 = sphi 0, %s86
      %s101 = sphi 0, %s87
      %s105 = sphi 0, %s105
      %s107 = sphi 0, %s105
      %s108 = sphi 0, %s107
      %s122 = sphi 0, %s108
      %s126 = sphi 0, %s126
      %s128 = sphi 0, %s126
      %s129 = sphi 0, %s128
      %s143 = sphi 0, %s129
      %s147 = sphi 0, %s147
      %s149 = sphi 0, %s147
      %s150 = sphi 0, %s149
      %s164 = sphi 0, %s150
      %s168 = sphi 0, %s168
      %s170 = sphi 0, %s168
      %s171 = sphi 0, %s170
      %s185 = sphi 0, %s171
      %s189 = sphi 0, %s189
      %s191 = sphi 0, %s189
      %s192 = sphi 0, %s191
      %s206 = sphi 0, %s192
      %s210 = sphi 0, %s210
      %s212 = sphi 0, %s210
      %s213 = sphi 0, %s212
      %s227 = sphi 0, %s213
      %s231 = sphi 0, %s231
      %s233 = sphi 0, %s231
      %s234 = sphi 0, %s233
      %s248 = sphi 0, %s234
      %s252 = sphi 0, %s252
      %s254 = sphi 0, %s252
      %s255 = sphi 0, %s254
      %s269 = sphi 0, %s255
      %s273 = sphi 0, %s273
      %s275 = sphi 0, %s273
      %s276 = sphi 0, %s275
      %s290 = sphi 0, %s276
      %s294 = sphi 0, %s294
      %s296 = sphi 0, %s294
      %s297 = sphi 0, %s296
      %s311 = sphi 0, %s297
      %s315 = sphi 0, %s315
      %s317 = sphi 0, %s315
      %s318 = sphi 0, %s317
      %s332 = sphi 0, %s318
      %s336 = sphi 0, %s336
      %s338 = sphi 0, %s336
      %s339 = sphi 0, %s338
      %s353 = sphi 0, %s339
      %s357 = sphi 0, %s357
      %s359 = sphi 0, %s357
      %s360 = sphi 0, %s359
      %s374 = sphi 0, %s360
      %s378 = sphi 0, %s378
      %s380 = sphi 0, %s378
      %s381 = sphi 0, %s380
      %s395 = sphi 0, %s381
      %s401 = sphi 0, %s403
      %s404 = sphi 0, %s401
      %s405 = sphi 0, %s404
      %s421 = sphi 0, %s405
      %s427 = sphi 0, %s429
      %s430 = sphi 0, %s427
      %s431 = sphi 0, %s430
      %s447 = sphi 0, %s431
      %s453 = sphi 0, %s455
      %s456 = sphi 0, %s453
      %s457 = sphi 0, %s456
      %s473 = sphi 0, %s457
    $region4: #{tpu_custom_call.1} parent=1 // loop_header_branch
      %32 = sbr.rel (%p30) target = $region8
    $region5: #{tpu_custom_call.1} parent=1 // loop_body
      %s34 = ssub.s32 %s29, 1
      %s35 = ssub.s32 %s29, 2
      %s36 = sadd.s32 %s29, 1
      %s37 = ssub.s32 %s29, %s36
      %p38 = scmp.eq.s32.totalorder %s37, 0
      %s40 = sadd.s32 %s39, 1
      %s41 = scalar_select %p38, %s39, %s40
      %p44 = pneg %p38
      %p45 = scmp.eq.s32.totalorder %s29, 1
      %p46 = por %p44, %p45
      %p47 = scmp.ne.s32.totalorder %s39, %s42
      %p48 = scmp.eq.s32.totalorder %s29, 0
      %p49 = por %p47, %p48
      %p50 = scmp.ne.s32.totalorder %s39, %s42
      %p51 = scmp.eq.s32.totalorder %s34, 1
      %p52 = por %p50, %p51
      %p53 = scmp.ne.s32.totalorder %s42, %s43
      %p54 = scmp.eq.s32.totalorder %s34, 0
      %p55 = por %p53, %p54
      %p56 = scmp.ne.s32.totalorder %s42, %s43
      %p57 = scmp.eq.s32.totalorder %s35, 1
      %p58 = por %p56, %p57
      %p60 = scmp.ne.s32.totalorder %s43, %s59
      %p61 = scmp.eq.s32.totalorder %s35, 0
      %p62 = por %p60, %p61
      %s64 = sadd.s32 %s63, 1
      %p67 = scmp.eq.s32.totalorder %s29, 1
      %p68 = scmp.ne.s32.totalorder %s63, %s65
      %p69 = scmp.eq.s32.totalorder %s29, 0
      %p70 = por %p68, %p69
      %p71 = scmp.ne.s32.totalorder %s63, %s65
      %p72 = scmp.eq.s32.totalorder %s34, 1
      %p73 = por %p71, %p72
      %p74 = scmp.ne.s32.totalorder %s65, %s66
      %p75 = scmp.eq.s32.totalorder %s34, 0
      %p76 = por %p74, %p75
      %p77 = scmp.ne.s32.totalorder %s65, %s66
      %p78 = scmp.eq.s32.totalorder %s35, 1
      %p79 = por %p77, %p78
      %p81 = scmp.ne.s32.totalorder %s66, %s80
      %p82 = scmp.eq.s32.totalorder %s35, 0
      %p83 = por %p81, %p82
      %s85 = sadd.s32 %s84, 1
      %p88 = scmp.eq.s32.totalorder %s29, 1
      %p89 = scmp.ne.s32.totalorder %s84, %s86
      %p90 = scmp.eq.s32.totalorder %s29, 0
      %p91 = por %p89, %p90
      %p92 = scmp.ne.s32.totalorder %s84, %s86
      %p93 = scmp.eq.s32.totalorder %s34, 1
      %p94 = por %p92, %p93
      %p95 = scmp.ne.s32.totalorder %s86, %s87
      %p96 = scmp.eq.s32.totalorder %s34, 0
      %p97 = por %p95, %p96
      %p98 = scmp.ne.s32.totalorder %s86, %s87
      %p99 = scmp.eq.s32.totalorder %s35, 1
      %p100 = por %p98, %p99
      %p102 = scmp.ne.s32.totalorder %s87, %s101
      %p103 = scmp.eq.s32.totalorder %s35, 0
      %p104 = por %p102, %p103
      %s106 = sadd.s32 %s105, 1
      %p109 = scmp.eq.s32.totalorder %s29, 1
      %p110 = scmp.ne.s32.totalorder %s105, %s107
      %p111 = scmp.eq.s32.totalorder %s29, 0
      %p112 = por %p110, %p111
      %p113 = scmp.ne.s32.totalorder %s105, %s107
      %p114 = scmp.eq.s32.totalorder %s34, 1
      %p115 = por %p113, %p114
      %p116 = scmp.ne.s32.totalorder %s107, %s108
      %p117 = scmp.eq.s32.totalorder %s34, 0
      %p118 = por %p116, %p117
      %p119 = scmp.ne.s32.totalorder %s107, %s108
      %p120 = scmp.eq.s32.totalorder %s35, 1
      %p121 = por %p119, %p120
      %p123 = scmp.ne.s32.totalorder %s108, %s122
      %p124 = scmp.eq.s32.totalorder %s35, 0
      %p125 = por %p123, %p124
      %s127 = sadd.s32 %s126, 1
      %p130 = scmp.eq.s32.totalorder %s29, 1
      %p131 = scmp.ne.s32.totalorder %s126, %s128
      %p132 = scmp.eq.s32.totalorder %s29, 0
      %p133 = por %p131, %p132
      %p134 = scmp.ne.s32.totalorder %s126, %s128
      %p135 = scmp.eq.s32.totalorder %s34, 1
      %p136 = por %p134, %p135
      %p137 = scmp.ne.s32.totalorder %s128, %s129
      %p138 = scmp.eq.s32.totalorder %s34, 0
      %p139 = por %p137, %p138
      %p140 = scmp.ne.s32.totalorder %s128, %s129
      %p141 = scmp.eq.s32.totalorder %s35, 1
      %p142 = por %p140, %p141
      %p144 = scmp.ne.s32.totalorder %s129, %s143
      %p145 = scmp.eq.s32.totalorder %s35, 0
      %p146 = por %p144, %p145
      %s148 = sadd.s32 %s147, 1
      %p151 = scmp.eq.s32.totalorder %s29, 1
      %p152 = scmp.ne.s32.totalorder %s147, %s149
      %p153 = scmp.eq.s32.totalorder %s29, 0
      %p154 = por %p152, %p153
      %p155 = scmp.ne.s32.totalorder %s147, %s149
      %p156 = scmp.eq.s32.totalorder %s34, 1
      %p157 = por %p155, %p156
      %p158 = scmp.ne.s32.totalorder %s149, %s150
      %p159 = scmp.eq.s32.totalorder %s34, 0
      %p160 = por %p158, %p159
      %p161 = scmp.ne.s32.totalorder %s149, %s150
      %p162 = scmp.eq.s32.totalorder %s35, 1
      %p163 = por %p161, %p162
      %p165 = scmp.ne.s32.totalorder %s150, %s164
      %p166 = scmp.eq.s32.totalorder %s35, 0
      %p167 = por %p165, %p166
      %s169 = sadd.s32 %s168, 1
      %p172 = scmp.eq.s32.totalorder %s29, 1
      %p173 = scmp.ne.s32.totalorder %s168, %s170
      %p174 = scmp.eq.s32.totalorder %s29, 0
      %p175 = por %p173, %p174
      %p176 = scmp.ne.s32.totalorder %s168, %s170
      %p177 = scmp.eq.s32.totalorder %s34, 1
      %p178 = por %p176, %p177
      %p179 = scmp.ne.s32.totalorder %s170, %s171
      %p180 = scmp.eq.s32.totalorder %s34, 0
      %p181 = por %p179, %p180
      %p182 = scmp.ne.s32.totalorder %s170, %s171
      %p183 = scmp.eq.s32.totalorder %s35, 1
      %p184 = por %p182, %p183
      %p186 = scmp.ne.s32.totalorder %s171, %s185
      %p187 = scmp.eq.s32.totalorder %s35, 0
      %p188 = por %p186, %p187
      %s190 = sadd.s32 %s189, 1
      %p193 = scmp.eq.s32.totalorder %s29, 1
      %p194 = scmp.ne.s32.totalorder %s189, %s191
      %p195 = scmp.eq.s32.totalorder %s29, 0
      %p196 = por %p194, %p195
      %p197 = scmp.ne.s32.totalorder %s189, %s191
      %p198 = scmp.eq.s32.totalorder %s34, 1
      %p199 = por %p197, %p198
      %p200 = scmp.ne.s32.totalorder %s191, %s192
      %p201 = scmp.eq.s32.totalorder %s34, 0
      %p202 = por %p200, %p201
      %p203 = scmp.ne.s32.totalorder %s191, %s192
      %p204 = scmp.eq.s32.totalorder %s35, 1
      %p205 = por %p203, %p204
      %p207 = scmp.ne.s32.totalorder %s192, %s206
      %p208 = scmp.eq.s32.totalorder %s35, 0
      %p209 = por %p207, %p208
      %s211 = sadd.s32 %s210, 1
      %p214 = scmp.eq.s32.totalorder %s29, 1
      %p215 = scmp.ne.s32.totalorder %s210, %s212
      %p216 = scmp.eq.s32.totalorder %s29, 0
      %p217 = por %p215, %p216
      %p218 = scmp.ne.s32.totalorder %s210, %s212
      %p219 = scmp.eq.s32.totalorder %s34, 1
      %p220 = por %p218, %p219
      %p221 = scmp.ne.s32.totalorder %s212, %s213
      %p222 = scmp.eq.s32.totalorder %s34, 0
      %p223 = por %p221, %p222
      %p224 = scmp.ne.s32.totalorder %s212, %s213
      %p225 = scmp.eq.s32.totalorder %s35, 1
      %p226 = por %p224, %p225
      %p228 = scmp.ne.s32.totalorder %s213, %s227
      %p229 = scmp.eq.s32.totalorder %s35, 0
      %p230 = por %p228, %p229
      %s232 = sadd.s32 %s231, 1
      %p235 = scmp.eq.s32.totalorder %s29, 1
      %p236 = scmp.ne.s32.totalorder %s231, %s233
      %p237 = scmp.eq.s32.totalorder %s29, 0
      %p238 = por %p236, %p237
      %p239 = scmp.ne.s32.totalorder %s231, %s233
      %p240 = scmp.eq.s32.totalorder %s34, 1
      %p241 = por %p239, %p240
      %p242 = scmp.ne.s32.totalorder %s233, %s234
      %p243 = scmp.eq.s32.totalorder %s34, 0
      %p244 = por %p242, %p243
      %p245 = scmp.ne.s32.totalorder %s233, %s234
      %p246 = scmp.eq.s32.totalorder %s35, 1
      %p247 = por %p245, %p246
      %p249 = scmp.ne.s32.totalorder %s234, %s248
      %p250 = scmp.eq.s32.totalorder %s35, 0
      %p251 = por %p249, %p250
      %s253 = sadd.s32 %s252, 1
      %p256 = scmp.eq.s32.totalorder %s29, 1
      %p257 = scmp.ne.s32.totalorder %s252, %s254
      %p258 = scmp.eq.s32.totalorder %s29, 0
      %p259 = por %p257, %p258
      %p260 = scmp.ne.s32.totalorder %s252, %s254
      %p261 = scmp.eq.s32.totalorder %s34, 1
      %p262 = por %p260, %p261
      %p263 = scmp.ne.s32.totalorder %s254, %s255
      %p264 = scmp.eq.s32.totalorder %s34, 0
      %p265 = por %p263, %p264
      %p266 = scmp.ne.s32.totalorder %s254, %s255
      %p267 = scmp.eq.s32.totalorder %s35, 1
      %p268 = por %p266, %p267
      %p270 = scmp.ne.s32.totalorder %s255, %s269
      %p271 = scmp.eq.s32.totalorder %s35, 0
      %p272 = por %p270, %p271
      %s274 = sadd.s32 %s273, 1
      %p277 = scmp.eq.s32.totalorder %s29, 1
      %p278 = scmp.ne.s32.totalorder %s273, %s275
      %p279 = scmp.eq.s32.totalorder %s29, 0
      %p280 = por %p278, %p279
      %p281 = scmp.ne.s32.totalorder %s273, %s275
      %p282 = scmp.eq.s32.totalorder %s34, 1
      %p283 = por %p281, %p282
      %p284 = scmp.ne.s32.totalorder %s275, %s276
      %p285 = scmp.eq.s32.totalorder %s34, 0
      %p286 = por %p284, %p285
      %p287 = scmp.ne.s32.totalorder %s275, %s276
      %p288 = scmp.eq.s32.totalorder %s35, 1
      %p289 = por %p287, %p288
      %p291 = scmp.ne.s32.totalorder %s276, %s290
      %p292 = scmp.eq.s32.totalorder %s35, 0
      %p293 = por %p291, %p292
      %s295 = sadd.s32 %s294, 1
      %p298 = scmp.eq.s32.totalorder %s29, 1
      %p299 = scmp.ne.s32.totalorder %s294, %s296
      %p300 = scmp.eq.s32.totalorder %s29, 0
      %p301 = por %p299, %p300
      %p302 = scmp.ne.s32.totalorder %s294, %s296
      %p303 = scmp.eq.s32.totalorder %s34, 1
      %p304 = por %p302, %p303
      %p305 = scmp.ne.s32.totalorder %s296, %s297
      %p306 = scmp.eq.s32.totalorder %s34, 0
      %p307 = por %p305, %p306
      %p308 = scmp.ne.s32.totalorder %s296, %s297
      %p309 = scmp.eq.s32.totalorder %s35, 1
      %p310 = por %p308, %p309
      %p312 = scmp.ne.s32.totalorder %s297, %s311
      %p313 = scmp.eq.s32.totalorder %s35, 0
      %p314 = por %p312, %p313
      %s316 = sadd.s32 %s315, 1
      %p319 = scmp.eq.s32.totalorder %s29, 1
      %p320 = scmp.ne.s32.totalorder %s315, %s317
      %p321 = scmp.eq.s32.totalorder %s29, 0
      %p322 = por %p320, %p321
      %p323 = scmp.ne.s32.totalorder %s315, %s317
      %p324 = scmp.eq.s32.totalorder %s34, 1
      %p325 = por %p323, %p324
      %p326 = scmp.ne.s32.totalorder %s317, %s318
      %p327 = scmp.eq.s32.totalorder %s34, 0
      %p328 = por %p326, %p327
      %p329 = scmp.ne.s32.totalorder %s317, %s318
      %p330 = scmp.eq.s32.totalorder %s35, 1
      %p331 = por %p329, %p330
      %p333 = scmp.ne.s32.totalorder %s318, %s332
      %p334 = scmp.eq.s32.totalorder %s35, 0
      %p335 = por %p333, %p334
      %s337 = sadd.s32 %s336, 1
      %p340 = scmp.eq.s32.totalorder %s29, 1
      %p341 = scmp.ne.s32.totalorder %s336, %s338
      %p342 = scmp.eq.s32.totalorder %s29, 0
      %p343 = por %p341, %p342
      %p344 = scmp.ne.s32.totalorder %s336, %s338
      %p345 = scmp.eq.s32.totalorder %s34, 1
      %p346 = por %p344, %p345
      %p347 = scmp.ne.s32.totalorder %s338, %s339
      %p348 = scmp.eq.s32.totalorder %s34, 0
      %p349 = por %p347, %p348
      %p350 = scmp.ne.s32.totalorder %s338, %s339
      %p351 = scmp.eq.s32.totalorder %s35, 1
      %p352 = por %p350, %p351
      %p354 = scmp.ne.s32.totalorder %s339, %s353
      %p355 = scmp.eq.s32.totalorder %s35, 0
      %p356 = por %p354, %p355
      %s358 = sadd.s32 %s357, 1
      %p361 = scmp.eq.s32.totalorder %s29, 1
      %p362 = scmp.ne.s32.totalorder %s357, %s359
      %p363 = scmp.eq.s32.totalorder %s29, 0
      %p364 = por %p362, %p363
      %p365 = scmp.ne.s32.totalorder %s357, %s359
      %p366 = scmp.eq.s32.totalorder %s34, 1
      %p367 = por %p365, %p366
      %p368 = scmp.ne.s32.totalorder %s359, %s360
      %p369 = scmp.eq.s32.totalorder %s34, 0
      %p370 = por %p368, %p369
      %p371 = scmp.ne.s32.totalorder %s359, %s360
      %p372 = scmp.eq.s32.totalorder %s35, 1
      %p373 = por %p371, %p372
      %p375 = scmp.ne.s32.totalorder %s360, %s374
      %p376 = scmp.eq.s32.totalorder %s35, 0
      %p377 = por %p375, %p376
      %s379 = sadd.s32 %s378, 1
      %p382 = scmp.eq.s32.totalorder %s29, 1
      %p383 = scmp.ne.s32.totalorder %s378, %s380
      %p384 = scmp.eq.s32.totalorder %s29, 0
      %p385 = por %p383, %p384
      %p386 = scmp.ne.s32.totalorder %s378, %s380
      %p387 = scmp.eq.s32.totalorder %s34, 1
      %p388 = por %p386, %p387
      %p389 = scmp.ne.s32.totalorder %s380, %s381
      %p390 = scmp.eq.s32.totalorder %s34, 0
      %p391 = por %p389, %p390
      %p392 = scmp.ne.s32.totalorder %s380, %s381
      %p393 = scmp.eq.s32.totalorder %s35, 1
      %p394 = por %p392, %p393
      %p396 = scmp.ne.s32.totalorder %s381, %s395
      %p397 = scmp.eq.s32.totalorder %s35, 0
      %p398 = por %p396, %p397
      %s399 = ssub.s32 %s29, %s36
      %p400 = scmp.eq.s32.totalorder %s399, 0
      %s402 = sadd.s32 %s401, 1
      %s403 = scalar_select %p400, %s401, %s402
      %p406 = pneg %p400
      %p407 = scmp.eq.s32.totalorder %s29, 1
      %p408 = por %p406, %p407
      %p409 = scmp.ne.s32.totalorder %s401, %s404
      %p410 = scmp.eq.s32.totalorder %s29, 0
      %p411 = por %p409, %p410
      %p412 = scmp.ne.s32.totalorder %s401, %s404
      %p413 = scmp.eq.s32.totalorder %s34, 1
      %p414 = por %p412, %p413
      %p415 = scmp.ne.s32.totalorder %s404, %s405
      %p416 = scmp.eq.s32.totalorder %s34, 0
      %p417 = por %p415, %p416
      %p418 = scmp.ne.s32.totalorder %s404, %s405
      %p419 = scmp.eq.s32.totalorder %s35, 1
      %p420 = por %p418, %p419
      %p422 = scmp.ne.s32.totalorder %s405, %s421
      %p423 = scmp.eq.s32.totalorder %s35, 0
      %p424 = por %p422, %p423
      %s425 = ssub.s32 %s29, %s36
      %p426 = scmp.eq.s32.totalorder %s425, 0
      %s428 = sadd.s32 %s427, 1
      %s429 = scalar_select %p426, %s427, %s428
      %p432 = pneg %p426
      %p433 = scmp.eq.s32.totalorder %s29, 1
      %p434 = por %p432, %p433
      %p435 = scmp.ne.s32.totalorder %s427, %s430
      %p436 = scmp.eq.s32.totalorder %s29, 0
      %p437 = por %p435, %p436
      %p438 = scmp.ne.s32.totalorder %s427, %s430
      %p439 = scmp.eq.s32.totalorder %s34, 1
      %p440 = por %p438, %p439
      %p441 = scmp.ne.s32.totalorder %s430, %s431
      %p442 = scmp.eq.s32.totalorder %s34, 0
      %p443 = por %p441, %p442
      %p444 = scmp.ne.s32.totalorder %s430, %s431
      %p445 = scmp.eq.s32.totalorder %s35, 1
      %p446 = por %p444, %p445
      %p448 = scmp.ne.s32.totalorder %s431, %s447
      %p449 = scmp.eq.s32.totalorder %s35, 0
      %p450 = por %p448, %p449
      %s451 = ssub.s32 %s29, %s36
      %p452 = scmp.eq.s32.totalorder %s451, 0
      %s454 = sadd.s32 %s453, 1
      %s455 = scalar_select %p452, %s453, %s454
      %p458 = pneg %p452
      %p459 = scmp.eq.s32.totalorder %s29, 1
      %p460 = por %p458, %p459
      %p461 = scmp.ne.s32.totalorder %s453, %s456
      %p462 = scmp.eq.s32.totalorder %s29, 0
      %p463 = por %p461, %p462
      %p464 = scmp.ne.s32.totalorder %s453, %s456
      %p465 = scmp.eq.s32.totalorder %s34, 1
      %p466 = por %p464, %p465
      %p467 = scmp.ne.s32.totalorder %s456, %s457
      %p468 = scmp.eq.s32.totalorder %s34, 0
      %p469 = por %p467, %p468
      %p470 = scmp.ne.s32.totalorder %s456, %s457
      %p471 = scmp.eq.s32.totalorder %s35, 1
      %p472 = por %p470, %p471
      %p474 = scmp.ne.s32.totalorder %s457, %s473
      %p475 = scmp.eq.s32.totalorder %s35, 0
      %p476 = por %p474, %p475
      %p477 = scmp.le.s32.totalorder 1, %s29
      %p478 = scmp.lt.s32.totalorder %s29, 3
      %p479 = pnand %p477, %p478
      %p480 = pneg %p479
      // Predicated region
      $region9: #{tpu_custom_call.1} parent=5 // pred_check
        _
      $region10: #{tpu_custom_call.1} parent=5 // pred_check_branch
        %482 = sbr.rel (%p479) target = $region12
      $region11: #{tpu_custom_call.1} parent=5 // pred_region
        %s483 = ssub.s32 %s29, 1
        // Predicated region
        $region13: #{tpu_custom_call.1} parent=11 // pred_check
          %p484 = pneg %p76
        $region14: #{tpu_custom_call.1} parent=11 // pred_check_branch
          %486 = sbr.rel (%p484) target = $region16
        $region15: #{tpu_custom_call.1} parent=11 // pred_region
          _
        $region16: #{tpu_custom_call.1} parent=11 // pred_fallthru
          _
        // Predicated region
        $region17: #{tpu_custom_call.1} parent=11 // pred_check
          %p487 = pneg %p97
        $region18: #{tpu_custom_call.1} parent=11 // pred_check_branch
          %489 = sbr.rel (%p487) target = $region20
        $region19: #{tpu_custom_call.1} parent=11 // pred_region
          _
        $region20: #{tpu_custom_call.1} parent=11 // pred_fallthru
          _
        // Predicated region
        $region21: #{tpu_custom_call.1} parent=11 // pred_check
          %p490 = pneg %p118
        $region22: #{tpu_custom_call.1} parent=11 // pred_check_branch
          %492 = sbr.rel (%p490) target = $region24
        $region23: #{tpu_custom_call.1} parent=11 // pred_region
          _
        $region24: #{tpu_custom_call.1} parent=11 // pred_fallthru
          _
        // Predicated region
        $region25: #{tpu_custom_call.1} parent=11 // pred_check
          %p493 = pneg %p139
        $region26: #{tpu_custom_call.1} parent=11 // pred_check_branch
          %495 = sbr.rel (%p493) target = $region28
        $region27: #{tpu_custom_call.1} parent=11 // pred_region
          _
        $region28: #{tpu_custom_call.1} parent=11 // pred_fallthru
          _
        // Predicated region
        $region29: #{tpu_custom_call.1} parent=11 // pred_check
          %p496 = pneg %p160
        $region30: #{tpu_custom_call.1} parent=11 // pred_check_branch
          %498 = sbr.rel (%p496) target = $region32
        $region31: #{tpu_custom_call.1} parent=11 // pred_region
          _
        $region32: #{tpu_custom_call.1} parent=11 // pred_fallthru
          _
        // Predicated region
        $region33: #{tpu_custom_call.1} parent=11 // pred_check
          %p499 = pneg %p181
        $region34: #{tpu_custom_call.1} parent=11 // pred_check_branch
          %501 = sbr.rel (%p499) target = $region36
        $region35: #{tpu_custom_call.1} parent=11 // pred_region
          _
        $region36: #{tpu_custom_call.1} parent=11 // pred_fallthru
          _
        // Predicated region
        $region37: #{tpu_custom_call.1} parent=11 // pred_check
          %p502 = pneg %p202
        $region38: #{tpu_custom_call.1} parent=11 // pred_check_branch
          %504 = sbr.rel (%p502) target = $region40
        $region39: #{tpu_custom_call.1} parent=11 // pred_region
          _
        $region40: #{tpu_custom_call.1} parent=11 // pred_fallthru
          _
        // Predicated region
        $region41: #{tpu_custom_call.1} parent=11 // pred_check
          %p505 = pneg %p223
        $region42: #{tpu_custom_call.1} parent=11 // pred_check_branch
          %507 = sbr.rel (%p505) target = $region44
        $region43: #{tpu_custom_call.1} parent=11 // pred_region
          _
        $region44: #{tpu_custom_call.1} parent=11 // pred_fallthru
          _
        // Predicated region
        $region45: #{tpu_custom_call.1} parent=11 // pred_check
          %p508 = pneg %p244
        $region46: #{tpu_custom_call.1} parent=11 // pred_check_branch
          %510 = sbr.rel (%p508) target = $region48
        $region47: #{tpu_custom_call.1} parent=11 // pred_region
          _
        $region48: #{tpu_custom_call.1} parent=11 // pred_fallthru
          _
        // Predicated region
        $region49: #{tpu_custom_call.1} parent=11 // pred_check
          %p511 = pneg %p265
        $region50: #{tpu_custom_call.1} parent=11 // pred_check_branch
          %513 = sbr.rel (%p511) target = $region52
        $region51: #{tpu_custom_call.1} parent=11 // pred_region
          _
        $region52: #{tpu_custom_call.1} parent=11 // pred_fallthru
          _
        // Predicated region
        $region53: #{tpu_custom_call.1} parent=11 // pred_check
          %p514 = pneg %p286
        $region54: #{tpu_custom_call.1} parent=11 // pred_check_branch
          %516 = sbr.rel (%p514) target = $region56
        $region55: #{tpu_custom_call.1} parent=11 // pred_region
          _
        $region56: #{tpu_custom_call.1} parent=11 // pred_fallthru
          _
        // Predicated region
        $region57: #{tpu_custom_call.1} parent=11 // pred_check
          %p517 = pneg %p307
        $region58: #{tpu_custom_call.1} parent=11 // pred_check_branch
          %519 = sbr.rel (%p517) target = $region60
        $region59: #{tpu_custom_call.1} parent=11 // pred_region
          _
        $region60: #{tpu_custom_call.1} parent=11 // pred_fallthru
          _
        // Predicated region
        $region61: #{tpu_custom_call.1} parent=11 // pred_check
          %p520 = pneg %p328
        $region62: #{tpu_custom_call.1} parent=11 // pred_check_branch
          %522 = sbr.rel (%p520) target = $region64
        $region63: #{tpu_custom_call.1} parent=11 // pred_region
          _
        $region64: #{tpu_custom_call.1} parent=11 // pred_fallthru
          _
        // Predicated region
        $region65: #{tpu_custom_call.1} parent=11 // pred_check
          %p523 = pneg %p349
        $region66: #{tpu_custom_call.1} parent=11 // pred_check_branch
          %525 = sbr.rel (%p523) target = $region68
        $region67: #{tpu_custom_call.1} parent=11 // pred_region
          _
        $region68: #{tpu_custom_call.1} parent=11 // pred_fallthru
          _
        // Predicated region
        $region69: #{tpu_custom_call.1} parent=11 // pred_check
          %p526 = pneg %p370
        $region70: #{tpu_custom_call.1} parent=11 // pred_check_branch
          %528 = sbr.rel (%p526) target = $region72
        $region71: #{tpu_custom_call.1} parent=11 // pred_region
          _
        $region72: #{tpu_custom_call.1} parent=11 // pred_fallthru
          _
        // Predicated region
        $region73: #{tpu_custom_call.1} parent=11 // pred_check
          %p529 = pneg %p391
        $region74: #{tpu_custom_call.1} parent=11 // pred_check_branch
          %531 = sbr.rel (%p529) target = $region76
        $region75: #{tpu_custom_call.1} parent=11 // pred_region
          _
        $region76: #{tpu_custom_call.1} parent=11 // pred_fallthru
          _
      $region12: #{tpu_custom_call.1} parent=5 // pred_fallthru
        _
      %p532 = scmp.lt.s32.totalorder %s29, 2
      // Predicated region
      $region77: #{tpu_custom_call.1} parent=5 // pred_check
        %p533 = pneg %p532
      $region78: #{tpu_custom_call.1} parent=5 // pred_check_branch
        %535 = sbr.rel (%p533) target = $region80
      $region79: #{tpu_custom_call.1} parent=5 // pred_region
        // Predicated region
        $region81: #{tpu_custom_call.1} parent=79 // pred_check
          %p536 = pneg %p49
        $region82: #{tpu_custom_call.1} parent=79 // pred_check_branch
          %538 = sbr.rel (%p536) target = $region84
        $region83: #{tpu_custom_call.1} parent=79 // pred_region
          %p539 = scmp.lt.s32.totalorder %s29, 1
          %s540 = scalar_select %p539, %s29, 1
          %s541 = smul.addr %s540, 4
          %s542 = smul.addr %s541, 8
          %s543 = scalar_lea.vmem %s0, %s542
        $region84: #{tpu_custom_call.1} parent=79 // pred_fallthru
          _
      $region80: #{tpu_custom_call.1} parent=5 // pred_fallthru
        _
      %p544 = scmp.le.s32.totalorder 1, %s29
      %p545 = scmp.lt.s32.totalorder %s29, 3
      %p546 = pnand %p544, %p545
      %p547 = pneg %p546
      // Predicated region
      $region85: #{tpu_custom_call.1} parent=5 // pred_check
        _
      $region86: #{tpu_custom_call.1} parent=5 // pred_check_branch
        %549 = sbr.rel (%p546) target = $region88
      $region87: #{tpu_custom_call.1} parent=5 // pred_region
        %s550 = ssub.s32 %s29, 1
        %p551 = scmp.lt.s32.totalorder %s34, 1
        %s552 = scalar_select %p551, %s34, 1
        %s553 = smul.addr %s552, 4
        %s554 = smul.addr %s553, 8
        %s555 = scalar_lea.vmem %s0, %s554
        %p556 = pneg %p55
        %p557 = pneg %p52
        %p558 = pneg %p76
        %p559 = pneg %p73
        %p560 = pneg %p97
        %p561 = pneg %p94
        %p562 = pneg %p118
        %p563 = pneg %p115
        %p564 = pneg %p139
        %p565 = pneg %p136
        %p566 = pneg %p160
        %p567 = pneg %p157
        %p568 = pneg %p181
        %p569 = pneg %p178
        %p570 = pneg %p202
        %p571 = pneg %p199
        %p572 = pneg %p223
        %p573 = pneg %p220
        %p574 = pneg %p244
        %p575 = pneg %p241
        %p576 = pneg %p265
        %p577 = pneg %p262
        %p578 = pneg %p286
        %p579 = pneg %p283
        %p580 = pneg %p307
        %p581 = pneg %p304
        %p582 = pneg %p328
        %p583 = pneg %p325
        %p584 = pneg %p349
        %p585 = pneg %p346
        %p586 = pneg %p370
        %p587 = pneg %p367
        %p588 = pneg %p391
        %p589 = pneg %p388
        %p590 = pneg %p417
        %p591 = pneg %p414
        %s592 = sand.u32 %s404, 1
        %s593 = scalar_lea.sflag [#allocation3], %s592
        %s594 = sand.u32 %s404, 1
        %s595 = smul.addr %s594, 8
        %s596 = scalar_lea.vmem [#allocation2], %s595
        %p597 = pneg %p443
        %p598 = pneg %p440
        %p599 = scmp.lt.s32.totalorder %s34, 1
        %s600 = scalar_select %p599, %s34, 1
        %s601 = smul.addr %s600, 2
        %s602 = smul.addr %s601, 8
        %s603 = scalar_lea.vmem %s18, %s602
        %p604 = pneg %p469
        %p605 = pneg %p466
        %p606 = scmp.lt.s32.totalorder %s34, 1
        %s607 = scalar_select %p606, %s34, 1
        %s608 = smul.addr %s607, 2
        %s609 = smul.addr %s608, 8
        %s610 = scalar_lea.vmem %s19, %s609
        %p611 = scmp.lt.s32.totalorder %s34, 1
        %s612 = scalar_select %p611, %s34, 1
        %s613 = smul.addr %s612, 4
        %s614 = smul.addr %s613, 8
        %s615 = scalar_lea.vmem %s0, %s614
        %p616 = scmp.lt.s32.totalorder %s34, 1
        %s617 = scalar_select %p616, %s34, 1
        %s618 = smul.addr %s617, 2
        %s619 = smul.addr %s618, 8
        %s620 = scalar_lea.vmem %s18, %s619
        %p621 = scmp.lt.s32.totalorder %s34, 1
        %s622 = scalar_select %p621, %s34, 1
        %s623 = smul.addr %s622, 2
        %s624 = smul.addr %s623, 8
        %s625 = scalar_lea.vmem %s19, %s624
        %v626 = vld [vmem:[%s11] sm:$0xff]
        %v627 = vld [vmem:[%s11 + $0x8] sm:$0xff]
        %v628 = vld [vmem:[%s11 + $0x10] sm:$0xff]
        %v629 = vld [vmem:[%s11 + $0x18] sm:$0xff]
        %v630 = vld [vmem:[%s11 + $0x20] sm:$0x1]
        %v631 = vld [vmem:[%s11 + $0x28] sm:$0x1]
        %v632 = vld [vmem:[%s11 + $0x30] sm:$0x1]
        %v633 = vld [vmem:[%s11 + $0x38] sm:$0x1]
        %v634 = vld [vmem:[%s615] sm:$0xff]
        %v635 = vld [vmem:[%s615 + $0x8] sm:$0xff]
        %v636 = vld [vmem:[%s615 + $0x10] sm:$0xff]
        %v637 = vld [vmem:[%s615 + $0x18] sm:$0xff]
        %638 = vrot.lane.b32.xlu0 %v634, 17
        %v639 = vpop.permute.xlu0 %638
        %640 = vrot.lane.b32.xlu0 %v635, 17
        %v641 = vpop.permute.xlu0 %640
        %642 = vrot.lane.b32.xlu0 %v636, 17
        %v643 = vpop.permute.xlu0 %642
        %644 = vrot.lane.b32.xlu0 %v637, 17
        %v645 = vpop.permute.xlu0 %644
        %v646 = vlaneseq
        %v647 = vand.u32 %v646, 127
        %vm648 = vcmp.lt.s32.totalorder %v647, 17
        %v649 = vsel %vm648, %v643, %v645
        %v650 = vsel %vm648, %v641, %v643
        %v651 = vsel %vm648, %v639, %v641
        %v652 = vsel %vm648, %v645, %v639
        %v653 = vlaneseq
        %v654 = vshrl.u32 %v653, 7
        %v655 = vsub.s32 0, %v654
        %v656 = vrot.slane %v626, %v655
        %v657 = vlaneseq
        %v658 = vshrl.u32 %v657, 7
        %v659 = vsub.s32 0, %v658
        %v660 = vrot.slane %v627, %v659
        %v661 = vlaneseq
        %v662 = vshrl.u32 %v661, 7
        %v663 = vsub.s32 0, %v662
        %v664 = vrot.slane %v628, %v663
        %v665 = vlaneseq
        %v666 = vshrl.u32 %v665, 7
        %v667 = vsub.s32 0, %v666
        %v668 = vrot.slane %v629, %v667
        %v669 = vmul.f32 %v652, %v656
        %v670 = vmul.f32 %v651, %v660
        %v671 = vmul.f32 %v650, %v664
        %v672 = vmul.f32 %v649, %v668
        %673 = vrot.lane.b32.xlu0 %v634, 16
        %v674 = vpop.permute.xlu0 %673
        %675 = vrot.lane.b32.xlu0 %v635, 16
        %v676 = vpop.permute.xlu0 %675
        %677 = vrot.lane.b32.xlu0 %v636, 16
        %v678 = vpop.permute.xlu0 %677
        %679 = vrot.lane.b32.xlu0 %v637, 16
        %v680 = vpop.permute.xlu0 %679
        %vm681 = vcmp.lt.s32.totalorder %v647, 16
        %v682 = vsel %vm681, %v678, %v680
        %v683 = vsel %vm681, %v676, %v678
        %v684 = vsel %vm681, %v674, %v676
        %v685 = vsel %vm681, %v680, %v674
        %v686 = vlaneseq
        %v687 = vshrl.u32 %v686, 7
        %v688 = vsub.s32 1, %v687
        %v689 = vrot.slane %v626, %v688
        %v690 = vlaneseq
        %v691 = vshrl.u32 %v690, 7
        %v692 = vsub.s32 1, %v691
        %v693 = vrot.slane %v627, %v692
        %v694 = vlaneseq
        %v695 = vshrl.u32 %v694, 7
        %v696 = vsub.s32 1, %v695
        %v697 = vrot.slane %v628, %v696
        %v698 = vlaneseq
        %v699 = vshrl.u32 %v698, 7
        %v700 = vsub.s32 1, %v699
        %v701 = vrot.slane %v629, %v700
        %v702 = vmul.f32 %v685, %v689
        %v703 = vmul.f32 %v684, %v693
        %v704 = vmul.f32 %v683, %v697
        %v705 = vmul.f32 %v682, %v701
        %706 = vrot.lane.b32.xlu0 %v634, 15
        %v707 = vpop.permute.xlu0 %706
        %708 = vrot.lane.b32.xlu0 %v635, 15
        %v709 = vpop.permute.xlu0 %708
        %710 = vrot.lane.b32.xlu0 %v636, 15
        %v711 = vpop.permute.xlu0 %710
        %712 = vrot.lane.b32.xlu0 %v637, 15
        %v713 = vpop.permute.xlu0 %712
        %vm714 = vcmp.lt.s32.totalorder %v647, 15
        %v715 = vsel %vm714, %v711, %v713
        %v716 = vsel %vm714, %v709, %v711
        %v717 = vsel %vm714, %v707, %v709
        %v718 = vsel %vm714, %v713, %v707
        %v719 = vlaneseq
        %v720 = vshrl.u32 %v719, 7
        %v721 = vsub.s32 2, %v720
        %v722 = vrot.slane %v626, %v721
        %v723 = vlaneseq
        %v724 = vshrl.u32 %v723, 7
        %v725 = vsub.s32 2, %v724
        %v726 = vrot.slane %v627, %v725
        %v727 = vlaneseq
        %v728 = vshrl.u32 %v727, 7
        %v729 = vsub.s32 2, %v728
        %v730 = vrot.slane %v628, %v729
        %v731 = vlaneseq
        %v732 = vshrl.u32 %v731, 7
        %v733 = vsub.s32 2, %v732
        %v734 = vrot.slane %v629, %v733
        %v735 = vmul.f32 %v718, %v722
        %v736 = vmul.f32 %v717, %v726
        %v737 = vmul.f32 %v716, %v730
        %v738 = vmul.f32 %v715, %v734
        %739 = vrot.lane.b32.xlu0 %v634, 1
        %v740 = vpop.permute.xlu0 %739
        %741 = vrot.lane.b32.xlu0 %v635, 1
        %v742 = vpop.permute.xlu0 %741
        %743 = vrot.lane.b32.xlu0 %v636, 1
        %v744 = vpop.permute.xlu0 %743
        %745 = vrot.lane.b32.xlu0 %v637, 1
        %v746 = vpop.permute.xlu0 %745
        %vm747 = vcmp.lt.s32.totalorder %v647, 1
        %v748 = vsel %vm747, %v744, %v746
        %v749 = vsel %vm747, %v742, %v744
        %v750 = vsel %vm747, %v740, %v742
        %v751 = vsel %vm747, %v746, %v740
        %v752 = vlaneseq
        %v753 = vshrl.u32 %v752, 7
        %v754 = vsub.s32 3, %v753
        %v755 = vrot.slane %v626, %v754
        %v756 = vlaneseq
        %v757 = vshrl.u32 %v756, 7
        %v758 = vsub.s32 3, %v757
        %v759 = vrot.slane %v627, %v758
        %v760 = vlaneseq
        %v761 = vshrl.u32 %v760, 7
        %v762 = vsub.s32 3, %v761
        %v763 = vrot.slane %v628, %v762
        %v764 = vlaneseq
        %v765 = vshrl.u32 %v764, 7
        %v766 = vsub.s32 3, %v765
        %v767 = vrot.slane %v629, %v766
        %v768 = vmul.f32 %v751, %v755
        %v769 = vmul.f32 %v750, %v759
        %v770 = vmul.f32 %v749, %v763
        %v771 = vmul.f32 %v748, %v767
        %772 = vrot.lane.b32.xlu0 %v634, 127
        %v773 = vpop.permute.xlu0 %772
        %774 = vrot.lane.b32.xlu0 %v635, 127
        %v775 = vpop.permute.xlu0 %774
        %776 = vrot.lane.b32.xlu0 %v636, 127
        %v777 = vpop.permute.xlu0 %776
        %778 = vrot.lane.b32.xlu0 %v637, 127
        %v779 = vpop.permute.xlu0 %778
        %vm780 = vcmp.lt.s32.totalorder %v647, 127
        %v781 = vsel %vm780, %v777, %v779
        %v782 = vsel %vm780, %v775, %v777
        %v783 = vsel %vm780, %v773, %v775
        %v784 = vsel %vm780, %v779, %v773
        %v785 = vlaneseq
        %v786 = vshrl.u32 %v785, 7
        %v787 = vsub.s32 5, %v786
        %v788 = vrot.slane %v626, %v787
        %v789 = vlaneseq
        %v790 = vshrl.u32 %v789, 7
        %v791 = vsub.s32 5, %v790
        %v792 = vrot.slane %v627, %v791
        %v793 = vlaneseq
        %v794 = vshrl.u32 %v793, 7
        %v795 = vsub.s32 5, %v794
        %v796 = vrot.slane %v628, %v795
        %v797 = vlaneseq
        %v798 = vshrl.u32 %v797, 7
        %v799 = vsub.s32 5, %v798
        %v800 = vrot.slane %v629, %v799
        %v801 = vmul.f32 %v783, %v788
        %v802 = vmul.f32 %v782, %v792
        %v803 = vmul.f32 %v781, %v796
        %v804 = vmul.f32 %v784, %v800
        %805 = vrot.lane.b32.xlu0 %v634, 113
        %v806 = vpop.permute.xlu0 %805
        %807 = vrot.lane.b32.xlu0 %v635, 113
        %v808 = vpop.permute.xlu0 %807
        %809 = vrot.lane.b32.xlu0 %v636, 113
        %v810 = vpop.permute.xlu0 %809
        %811 = vrot.lane.b32.xlu0 %v637, 113
        %v812 = vpop.permute.xlu0 %811
        %vm813 = vcmp.lt.s32.totalorder %v647, 113
        %v814 = vsel %vm813, %v810, %v812
        %v815 = vsel %vm813, %v808, %v810
        %v816 = vsel %vm813, %v806, %v808
        %v817 = vsel %vm813, %v812, %v806
        %v818 = vlaneseq
        %v819 = vshrl.u32 %v818, 7
        %v820 = vsub.s32 6, %v819
        %v821 = vrot.slane %v626, %v820
        %v822 = vlaneseq
        %v823 = vshrl.u32 %v822, 7
        %v824 = vsub.s32 6, %v823
        %v825 = vrot.slane %v627, %v824
        %v826 = vlaneseq
        %v827 = vshrl.u32 %v826, 7
        %v828 = vsub.s32 6, %v827
        %v829 = vrot.slane %v628, %v828
        %v830 = vlaneseq
        %v831 = vshrl.u32 %v830, 7
        %v832 = vsub.s32 6, %v831
        %v833 = vrot.slane %v629, %v832
        %v834 = vmul.f32 %v816, %v821
        %v835 = vmul.f32 %v815, %v825
        %v836 = vmul.f32 %v814, %v829
        %v837 = vmul.f32 %v817, %v833
        %838 = vrot.lane.b32.xlu0 %v634, 112
        %v839 = vpop.permute.xlu0 %838
        %840 = vrot.lane.b32.xlu0 %v635, 112
        %v841 = vpop.permute.xlu0 %840
        %842 = vrot.lane.b32.xlu0 %v636, 112
        %v843 = vpop.permute.xlu0 %842
        %844 = vrot.lane.b32.xlu0 %v637, 112
        %v845 = vpop.permute.xlu0 %844
        %vm846 = vcmp.lt.s32.totalorder %v647, 112
        %v847 = vsel %vm846, %v843, %v845
        %v848 = vsel %vm846, %v841, %v843
        %v849 = vsel %vm846, %v839, %v841
        %v850 = vsel %vm846, %v845, %v839
        %v851 = vlaneseq
        %v852 = vshrl.u32 %v851, 7
        %v853 = vsub.s32 7, %v852
        %v854 = vrot.slane %v626, %v853
        %v855 = vlaneseq
        %v856 = vshrl.u32 %v855, 7
        %v857 = vsub.s32 7, %v856
        %v858 = vrot.slane %v627, %v857
        %v859 = vlaneseq
        %v860 = vshrl.u32 %v859, 7
        %v861 = vsub.s32 7, %v860
        %v862 = vrot.slane %v628, %v861
        %v863 = vlaneseq
        %v864 = vshrl.u32 %v863, 7
        %v865 = vsub.s32 7, %v864
        %v866 = vrot.slane %v629, %v865
        %v867 = vmul.f32 %v849, %v854
        %v868 = vmul.f32 %v848, %v858
        %v869 = vmul.f32 %v847, %v862
        %v870 = vmul.f32 %v850, %v866
        %871 = vrot.lane.b32.xlu0 %v634, 111
        %v872 = vpop.permute.xlu0 %871
        %873 = vrot.lane.b32.xlu0 %v635, 111
        %v874 = vpop.permute.xlu0 %873
        %875 = vrot.lane.b32.xlu0 %v636, 111
        %v876 = vpop.permute.xlu0 %875
        %877 = vrot.lane.b32.xlu0 %v637, 111
        %v878 = vpop.permute.xlu0 %877
        %vm879 = vcmp.lt.s32.totalorder %v647, 111
        %v880 = vsel %vm879, %v876, %v878
        %v881 = vsel %vm879, %v874, %v876
        %v882 = vsel %vm879, %v872, %v874
        %v883 = vsel %vm879, %v878, %v872
        %v884 = vlaneseq
        %v885 = vshrl.u32 %v884, 7
        %v886 = vsub.s32 0, %v885
        %v887 = vrot.slane %v630, %v886
        %v888 = vlaneseq
        %v889 = vshrl.u32 %v888, 7
        %v890 = vsub.s32 0, %v889
        %v891 = vrot.slane %v631, %v890
        %v892 = vlaneseq
        %v893 = vshrl.u32 %v892, 7
        %v894 = vsub.s32 0, %v893
        %v895 = vrot.slane %v632, %v894
        %v896 = vlaneseq
        %v897 = vshrl.u32 %v896, 7
        %v898 = vsub.s32 0, %v897
        %v899 = vrot.slane %v633, %v898
        %v900 = vmul.f32 %v882, %v887
        %v901 = vmul.f32 %v881, %v891
        %v902 = vmul.f32 %v880, %v895
        %v903 = vmul.f32 %v883, %v899
        %v904 = vld [vmem:[%s1] sm:$0xff]
        %v905 = vld [vmem:[%s2] sm:$0xff]
        %907 = vset.pattern.permute.xlu0 0
        %908 = vperm.xlu0 %907, %v905
        %v909 = vpop.permute.xlu0 %908
        %vm911 = vcmask 588800
        %v913 = vsel %vm911, %v904, 0
        %915 = vmatprep.subr.mxu0 %v670
        %916 = vmatpush1.msra.mxu0 %v669
        %917 = vmatprep.subr.mxu0 %v703
        %918 = vmatpush1.msra.mxu0 %v702
        %919 = vmatprep.subr.mxu0 %v736
        %920 = vmatpush1.msra.mxu0 %v735
        %921 = vmatprep.subr.mxu0 %v769
        %922 = vmatpush1.msra.mxu0 %v768
        %923 = vmatprep.subr.mxu0 %v635
        %924 = vmatpush1.msra.mxu0 %v634
        %925 = vmatprep.subr.mxu0 %v802
        %926 = vmatpush1.msra.mxu0 %v801
        %927 = vmatprep.subr.mxu0 %v835
        %928 = vmatpush1.msra.mxu0 %v834
        %929 = vmatprep.subr.mxu0 %v868
        %930 = vmatpush1.msra.mxu0 %v867
        %931 = vmatprep.subr.mxu0 %v901
        %932 = vmatpush1.msra.mxu0 %v900
        %933 = vmatprep.subr.mxu0 0.0
        %934 = vmatpush1.msra.mxu0 0.0
        %935 = vmatprep.subr.mxu0 0.0
        %936 = vmatpush1.msra.mxu0 0.0
        %937 = vmatprep.subr.mxu0 0.0
        %938 = vmatpush1.msra.mxu0 0.0
        %939 = vmatprep.subr.mxu0 0.0
        %940 = vmatpush1.msra.mxu0 0.0
        %941 = vmatprep.subr.mxu0 0.0
        %942 = vmatpush1.msra.mxu0 0.0
        %943 = vmatprep.subr.mxu0 0.0
        %944 = vmatpush1.msra.mxu0 0.0
        %945 = vmatprep.subr.mxu0 0.0
        %946 = vmatpush1.msra.mxu0 0.0
        %947 = vmatprep.subr.mxu0 0.0
        %948 = vmatpush1.msra.mxu0 0.0
        %949 = vmatprep.subr.mxu0 0.0
        %950 = vmatpush1.msra.mxu0 0.0
        %951 = vmatprep.subr.mxu0 0.0
        %952 = vmatpush1.msra.mxu0 0.0
        %953 = vmatprep.subr.mxu0 0.0
        %954 = vmatpush1.msra.mxu0 0.0
        %955 = vmatprep.subr.mxu0 0.0
        %956 = vmatpush1.msra.mxu0 0.0
        %957 = vmatprep.subr.mxu0 0.0
        %958 = vmatpush1.msra.mxu0 0.0
        %959 = vmatprep.subr.mxu0 0.0
        %960 = vmatpush1.msra.mxu0 0.0
        %961 = vmatprep.subr.mxu0 0.0
        %962 = vmatpush1.msra.mxu0 0.0
        %963 = vmatprep.subr.mxu0 0.0
        %964 = vmatpush1.msra.mxu0 0.0
        %965 = vmatprep.subr.mxu0 0.0
        %966 = vmatpush1.msra.mxu0 0.0
        %967 = vmatprep.subr.mxu0 0.0
        %968 = vmatpush1.msra.mxu0 0.0
        %969 = vmatprep.subr.mxu0 0.0
        %970 = vmatpush1.msra.mxu0 0.0
        %971 = vmatprep.subr.mxu0 0.0
        %972 = vmatpush1.msra.mxu0 0.0
        %973 = vmatprep.subr.mxu0 0.0
        %974 = vmatpush1.msra.mxu0 0.0
        %975 = vmatprep.subr.mxu0 0.0
        %976 = vmatpush1.msra.mxu0 0.0
        %977 = vmatprep.subr.mxu0 0.0
        %978 = vmatpush1.msra.mxu0 0.0
        %979 = vmatprep.mubr.f32.mxu0 0.0
        %980 = vmatmul.mubr.f32.gmra.mrb[0].mxu0 %v913
        %v981 = vpop.f32.mrb[0].mxu0
        %v982 = vadd.f32 %v909, %v981
        %v983 = vpop.f32.mrb[0].mxu0
        %v984 = vadd.f32 %v909, %v983
        %985 = vdwg.mxu0
        %986 = vmatprep.subr.mxu0 %v672
        %987 = vmatpush1.msra.mxu0 %v671
        %988 = vmatprep.subr.mxu0 %v705
        %989 = vmatpush1.msra.mxu0 %v704
        %990 = vmatprep.subr.mxu0 %v738
        %991 = vmatpush1.msra.mxu0 %v737
        %992 = vmatprep.subr.mxu0 %v771
        %993 = vmatpush1.msra.mxu0 %v770
        %994 = vmatprep.subr.mxu0 %v637
        %995 = vmatpush1.msra.mxu0 %v636
        %996 = vmatprep.subr.mxu0 %v804
        %997 = vmatpush1.msra.mxu0 %v803
        %998 = vmatprep.subr.mxu0 %v837
        %999 = vmatpush1.msra.mxu0 %v836
        %1000 = vmatprep.subr.mxu0 %v870
        %1001 = vmatpush1.msra.mxu0 %v869
        %1002 = vmatprep.subr.mxu0 %v903
        %1003 = vmatpush1.msra.mxu0 %v902
        %1004 = vmatprep.subr.mxu0 0.0
        %1005 = vmatpush1.msra.mxu0 0.0
        %1006 = vmatprep.subr.mxu0 0.0
        %1007 = vmatpush1.msra.mxu0 0.0
        %1008 = vmatprep.subr.mxu0 0.0
        %1009 = vmatpush1.msra.mxu0 0.0
        %1010 = vmatprep.subr.mxu0 0.0
        %1011 = vmatpush1.msra.mxu0 0.0
        %1012 = vmatprep.subr.mxu0 0.0
        %1013 = vmatpush1.msra.mxu0 0.0
        %1014 = vmatprep.subr.mxu0 0.0
        %1015 = vmatpush1.msra.mxu0 0.0
        %1016 = vmatprep.subr.mxu0 0.0
        %1017 = vmatpush1.msra.mxu0 0.0
        %1018 = vmatprep.subr.mxu0 0.0
        %1019 = vmatpush1.msra.mxu0 0.0
        %1020 = vmatprep.subr.mxu0 0.0
        %1021 = vmatpush1.msra.mxu0 0.0
        %1022 = vmatprep.subr.mxu0 0.0
        %1023 = vmatpush1.msra.mxu0 0.0
        %1024 = vmatprep.subr.mxu0 0.0
        %1025 = vmatpush1.msra.mxu0 0.0
        %1026 = vmatprep.subr.mxu0 0.0
        %1027 = vmatpush1.msra.mxu0 0.0
        %1028 = vmatprep.subr.mxu0 0.0
        %1029 = vmatpush1.msra.mxu0 0.0
        %1030 = vmatprep.subr.mxu0 0.0
        %1031 = vmatpush1.msra.mxu0 0.0
        %1032 = vmatprep.subr.mxu0 0.0
        %1033 = vmatpush1.msra.mxu0 0.0
        %1034 = vmatprep.subr.mxu0 0.0
        %1035 = vmatpush1.msra.mxu0 0.0
        %1036 = vmatprep.subr.mxu0 0.0
        %1037 = vmatpush1.msra.mxu0 0.0
        %1038 = vmatprep.subr.mxu0 0.0
        %1039 = vmatpush1.msra.mxu0 0.0
        %1040 = vmatprep.subr.mxu0 0.0
        %1041 = vmatpush1.msra.mxu0 0.0
        %1042 = vmatprep.subr.mxu0 0.0
        %1043 = vmatpush1.msra.mxu0 0.0
        %1044 = vmatprep.subr.mxu0 0.0
        %1045 = vmatpush1.msra.mxu0 0.0
        %1046 = vmatprep.subr.mxu0 0.0
        %1047 = vmatpush1.msra.mxu0 0.0
        %1048 = vmatprep.subr.mxu0 0.0
        %1049 = vmatpush1.msra.mxu0 0.0
        %1050 = vmatprep.mubr.f32.mxu0 0.0
        %1051 = vmatmul.mubr.f32.gmra.mrb[0].mxu0 %v913
        %v1052 = vpop.f32.mrb[0].mxu0
        %v1053 = vadd.f32 %v909, %v1052
        %v1054 = vpop.f32.mrb[0].mxu0
        %v1055 = vadd.f32 %v909, %v1054
        %1056 = vdwg.mxu0
        %v1057 = vmul.f32 %v982, 0.2
        %v1058 = vmul.f32 %v984, 0.2
        %v1059 = vmul.f32 %v1053, 0.2
        %v1060 = vmul.f32 %v1055, 0.2
        %v1061 = vmax.f32 %v982, %v1057
        %v1062 = vmax.f32 %v984, %v1058
        %v1063 = vmax.f32 %v1053, %v1059
        %v1064 = vmax.f32 %v1055, %v1060
        %v1065 = vld [vmem:[%s13] sm:$0xff]
        %v1066 = vld [vmem:[%s13 + $0x8] sm:$0xff]
        %v1067 = vld [vmem:[%s13 + $0x10] sm:$0xff]
        %v1068 = vld [vmem:[%s13 + $0x18] sm:$0xff]
        %v1069 = vld [vmem:[%s13 + $0x20] sm:$0xff]
        %v1070 = vld [vmem:[%s13 + $0x28] sm:$0xff]
        %v1071 = vld [vmem:[%s13 + $0x30] sm:$0xff]
        %v1072 = vld [vmem:[%s13 + $0x38] sm:$0xff]
        %v1073 = vld [vmem:[%s13 + $0x40] sm:$0xff]
        %v1074 = vld [vmem:[%s13 + $0x48] sm:$0xff]
        %v1075 = vld [vmem:[%s13 + $0x50] sm:$0xff]
        %v1076 = vld [vmem:[%s13 + $0x58] sm:$0xff]
        %v1077 = vld [vmem:[%s13 + $0x60] sm:$0xff]
        %v1078 = vld [vmem:[%s13 + $0x68] sm:$0xff]
        %v1079 = vld [vmem:[%s13 + $0x70] sm:$0xff]
        %v1080 = vld [vmem:[%s13 + $0x78] sm:$0xff]
        %v1081 = vld [vmem:[%s13 + $0x80] sm:$0xff]
        %v1082 = vld [vmem:[%s13 + $0x88] sm:$0xff]
        %v1083 = vld [vmem:[%s13 + $0x90] sm:$0xff]
        %v1084 = vld [vmem:[%s13 + $0x98] sm:$0xff]
        %v1085 = vld [vmem:[%s13 + $0xa0] sm:$0xff]
        %v1086 = vld [vmem:[%s13 + $0xa8] sm:$0xff]
        %v1087 = vld [vmem:[%s13 + $0xb0] sm:$0xff]
        %v1088 = vld [vmem:[%s13 + $0xb8] sm:$0xff]
        %v1089 = vld [vmem:[%s13 + $0xc0] sm:$0xff]
        %v1090 = vld [vmem:[%s13 + $0xc8] sm:$0xff]
        %v1091 = vld [vmem:[%s13 + $0xd0] sm:$0xff]
        %v1092 = vld [vmem:[%s13 + $0xd8] sm:$0xff]
        %v1093 = vld [vmem:[%s13 + $0xe0] sm:$0xff]
        %v1094 = vld [vmem:[%s13 + $0xe8] sm:$0xff]
        %v1095 = vld [vmem:[%s13 + $0xf0] sm:$0xff]
        %v1096 = vld [vmem:[%s13 + $0xf8] sm:$0xff]
        %v1097 = vld [vmem:[%s13 + $0x100] sm:$0xff]
        %v1098 = vld [vmem:[%s13 + $0x108] sm:$0xff]
        %v1099 = vld [vmem:[%s13 + $0x110] sm:$0xff]
        %v1100 = vld [vmem:[%s13 + $0x118] sm:$0xff]
        %v1101 = vld [vmem:[%s13 + $0x120] sm:$0xff]
        %v1102 = vld [vmem:[%s13 + $0x128] sm:$0xff]
        %v1103 = vld [vmem:[%s13 + $0x130] sm:$0xff]
        %v1104 = vld [vmem:[%s13 + $0x138] sm:$0xff]
        %v1105 = vld [vmem:[%s13 + $0x140] sm:$0xff]
        %v1106 = vld [vmem:[%s13 + $0x148] sm:$0xff]
        %v1107 = vld [vmem:[%s13 + $0x150] sm:$0xff]
        %v1108 = vld [vmem:[%s13 + $0x158] sm:$0xff]
        %v1109 = vld [vmem:[%s13 + $0x160] sm:$0xff]
        %v1110 = vld [vmem:[%s13 + $0x168] sm:$0xff]
        %v1111 = vld [vmem:[%s13 + $0x170] sm:$0xff]
        %v1112 = vld [vmem:[%s13 + $0x178] sm:$0xff]
        %v1113 = vld [vmem:[%s13 + $0x180] sm:$0xff]
        %v1114 = vld [vmem:[%s13 + $0x188] sm:$0xff]
        %v1115 = vld [vmem:[%s13 + $0x190] sm:$0xff]
        %v1116 = vld [vmem:[%s13 + $0x198] sm:$0xff]
        %v1117 = vld [vmem:[%s13 + $0x1a0] sm:$0xff]
        %v1118 = vld [vmem:[%s13 + $0x1a8] sm:$0xff]
        %v1119 = vld [vmem:[%s13 + $0x1b0] sm:$0xff]
        %v1120 = vld [vmem:[%s13 + $0x1b8] sm:$0xff]
        %v1121 = vld [vmem:[%s13 + $0x1c0] sm:$0xff]
        %v1122 = vld [vmem:[%s13 + $0x1c8] sm:$0xff]
        %v1123 = vld [vmem:[%s13 + $0x1d0] sm:$0xff]
        %v1124 = vld [vmem:[%s13 + $0x1d8] sm:$0xff]
        %v1125 = vld [vmem:[%s13 + $0x1e0] sm:$0xff]
        %v1126 = vld [vmem:[%s13 + $0x1e8] sm:$0xff]
        %v1127 = vld [vmem:[%s13 + $0x1f0] sm:$0xff]
        %v1128 = vld [vmem:[%s13 + $0x1f8] sm:$0xff]
        %v1129 = vld [vmem:[%s14] sm:$0xff]
        %1130 = vmatprep.subr.mxu0 0.0
        %1131 = vmatpush1.msra.mxu0 %v1065
        %1132 = vmatprep.subr.mxu0 0.0
        %1133 = vmatpush1.msra.mxu0 %v1066
        %1134 = vmatprep.subr.mxu0 0.0
        %1135 = vmatpush1.msra.mxu0 %v1067
        %1136 = vmatprep.subr.mxu0 0.0
        %1137 = vmatpush1.msra.mxu0 %v1068
        %1138 = vmatprep.subr.mxu0 0.0
        %1139 = vmatpush1.msra.mxu0 %v1069
        %1140 = vmatprep.subr.mxu0 0.0
        %1141 = vmatpush1.msra.mxu0 %v1070
        %1142 = vmatprep.subr.mxu0 0.0
        %1143 = vmatpush1.msra.mxu0 %v1071
        %1144 = vmatprep.subr.mxu0 0.0
        %1145 = vmatpush1.msra.mxu0 %v1072
        %1146 = vmatprep.subr.mxu0 0.0
        %1147 = vmatpush1.msra.mxu0 %v1073
        %1148 = vmatprep.subr.mxu0 0.0
        %1149 = vmatpush1.msra.mxu0 %v1074
        %1150 = vmatprep.subr.mxu0 0.0
        %1151 = vmatpush1.msra.mxu0 %v1075
        %1152 = vmatprep.subr.mxu0 0.0
        %1153 = vmatpush1.msra.mxu0 %v1076
        %1154 = vmatprep.subr.mxu0 0.0
        %1155 = vmatpush1.msra.mxu0 %v1077
        %1156 = vmatprep.subr.mxu0 0.0
        %1157 = vmatpush1.msra.mxu0 %v1078
        %1158 = vmatprep.subr.mxu0 0.0
        %1159 = vmatpush1.msra.mxu0 %v1079
        %1160 = vmatprep.subr.mxu0 0.0
        %1161 = vmatpush1.msra.mxu0 %v1080
        %1162 = vmatprep.subr.mxu0 0.0
        %1163 = vmatpush1.msra.mxu0 %v1081
        %1164 = vmatprep.subr.mxu0 0.0
        %1165 = vmatpush1.msra.mxu0 %v1082
        %1166 = vmatprep.subr.mxu0 0.0
        %1167 = vmatpush1.msra.mxu0 %v1083
        %1168 = vmatprep.subr.mxu0 0.0
        %1169 = vmatpush1.msra.mxu0 %v1084
        %1170 = vmatprep.subr.mxu0 0.0
        %1171 = vmatpush1.msra.mxu0 %v1085
        %1172 = vmatprep.subr.mxu0 0.0
        %1173 = vmatpush1.msra.mxu0 %v1086
        %1174 = vmatprep.subr.mxu0 0.0
        %1175 = vmatpush1.msra.mxu0 %v1087
        %1176 = vmatprep.subr.mxu0 0.0
        %1177 = vmatpush1.msra.mxu0 %v1088
        %1178 = vmatprep.subr.mxu0 0.0
        %1179 = vmatpush1.msra.mxu0 %v1089
        %1180 = vmatprep.subr.mxu0 0.0
        %1181 = vmatpush1.msra.mxu0 %v1090
        %1182 = vmatprep.subr.mxu0 0.0
        %1183 = vmatpush1.msra.mxu0 %v1091
        %1184 = vmatprep.subr.mxu0 0.0
        %1185 = vmatpush1.msra.mxu0 %v1092
        %1186 = vmatprep.subr.mxu0 0.0
        %1187 = vmatpush1.msra.mxu0 %v1093
        %1188 = vmatprep.subr.mxu0 0.0
        %1189 = vmatpush1.msra.mxu0 %v1094
        %1190 = vmatprep.subr.mxu0 0.0
        %1191 = vmatpush1.msra.mxu0 %v1095
        %1192 = vmatprep.subr.mxu0 0.0
        %1193 = vmatpush1.msra.mxu0 %v1096
        %1194 = vmatprep.mubr.f32.mxu0 %v1062
        %1195 = vmatmul.mubr.f32.gmra.mrb[0].mxu0 %v1061
        %v1196 = vpop.f32.mrb[0].mxu0
        %v1197 = vadd.f32 0.0, %v1196
        %v1198 = vpop.f32.mrb[0].mxu0
        %1199 = vdwg.mxu0
        %1200 = vmatprep.subr.mxu0 0.0
        %1201 = vmatpush1.msra.mxu0 %v1097
        %1202 = vmatprep.subr.mxu0 0.0
        %1203 = vmatpush1.msra.mxu0 %v1098
        %1204 = vmatprep.subr.mxu0 0.0
        %1205 = vmatpush1.msra.mxu0 %v1099
        %1206 = vmatprep.subr.mxu0 0.0
        %1207 = vmatpush1.msra.mxu0 %v1100
        %1208 = vmatprep.subr.mxu0 0.0
        %1209 = vmatpush1.msra.mxu0 %v1101
        %1210 = vmatprep.subr.mxu0 0.0
        %1211 = vmatpush1.msra.mxu0 %v1102
        %1212 = vmatprep.subr.mxu0 0.0
        %1213 = vmatpush1.msra.mxu0 %v1103
        %1214 = vmatprep.subr.mxu0 0.0
        %1215 = vmatpush1.msra.mxu0 %v1104
        %1216 = vmatprep.subr.mxu0 0.0
        %1217 = vmatpush1.msra.mxu0 %v1105
        %1218 = vmatprep.subr.mxu0 0.0
        %1219 = vmatpush1.msra.mxu0 %v1106
        %1220 = vmatprep.subr.mxu0 0.0
        %1221 = vmatpush1.msra.mxu0 %v1107
        %1222 = vmatprep.subr.mxu0 0.0
        %1223 = vmatpush1.msra.mxu0 %v1108
        %1224 = vmatprep.subr.mxu0 0.0
        %1225 = vmatpush1.msra.mxu0 %v1109
        %1226 = vmatprep.subr.mxu0 0.0
        %1227 = vmatpush1.msra.mxu0 %v1110
        %1228 = vmatprep.subr.mxu0 0.0
        %1229 = vmatpush1.msra.mxu0 %v1111
        %1230 = vmatprep.subr.mxu0 0.0
        %1231 = vmatpush1.msra.mxu0 %v1112
        %1232 = vmatprep.subr.mxu0 0.0
        %1233 = vmatpush1.msra.mxu0 %v1113
        %1234 = vmatprep.subr.mxu0 0.0
        %1235 = vmatpush1.msra.mxu0 %v1114
        %1236 = vmatprep.subr.mxu0 0.0
        %1237 = vmatpush1.msra.mxu0 %v1115
        %1238 = vmatprep.subr.mxu0 0.0
        %1239 = vmatpush1.msra.mxu0 %v1116
        %1240 = vmatprep.subr.mxu0 0.0
        %1241 = vmatpush1.msra.mxu0 %v1117
        %1242 = vmatprep.subr.mxu0 0.0
        %1243 = vmatpush1.msra.mxu0 %v1118
        %1244 = vmatprep.subr.mxu0 0.0
        %1245 = vmatpush1.msra.mxu0 %v1119
        %1246 = vmatprep.subr.mxu0 0.0
        %1247 = vmatpush1.msra.mxu0 %v1120
        %1248 = vmatprep.subr.mxu0 0.0
        %1249 = vmatpush1.msra.mxu0 %v1121
        %1250 = vmatprep.subr.mxu0 0.0
        %1251 = vmatpush1.msra.mxu0 %v1122
        %1252 = vmatprep.subr.mxu0 0.0
        %1253 = vmatpush1.msra.mxu0 %v1123
        %1254 = vmatprep.subr.mxu0 0.0
        %1255 = vmatpush1.msra.mxu0 %v1124
        %1256 = vmatprep.subr.mxu0 0.0
        %1257 = vmatpush1.msra.mxu0 %v1125
        %1258 = vmatprep.subr.mxu0 0.0
        %1259 = vmatpush1.msra.mxu0 %v1126
        %1260 = vmatprep.subr.mxu0 0.0
        %1261 = vmatpush1.msra.mxu0 %v1127
        %1262 = vmatprep.subr.mxu0 0.0
        %1263 = vmatpush1.msra.mxu0 %v1128
        %1264 = vmatprep.mubr.f32.mxu0 %v1064
        %1265 = vmatmul.mubr.f32.gmra.mrb[0].mxu0 %v1063
        %v1266 = vpop.f32.mrb[0].mxu0
        %v1267 = vadd.f32 %v1197, %v1266
        %v1268 = vpop.f32.mrb[0].mxu0
        %1269 = vdwg.mxu0
        %v1271 = vcombine.high %v1129, %v1129
        %v1273 = vunpack.c.l.s4 1983009808
        %v1274 = vunpack.c.0.s8 %v1273
        %v1275 = vlaneseq
        %v1276 = vshrl.u32 %v1275, 7
        %v1277 = vsub.s32 %v1274, %v1276
        %v1278 = vrot.slane %v1129, %v1277
        %v1280 = vunpack.c.l.s4 1983009808
        %v1281 = vunpack.c.0.s8 %v1280
        %v1282 = vlaneseq
        %v1283 = vshrl.u32 %v1282, 7
        %v1284 = vsub.s32 %v1281, %v1283
        %v1285 = vrot.slane %v1271, %v1284
        %v1286 = vcombine.high %v1278, %v1278
        %v1287 = vcombine.high %v1285, %v1285
        %vm1288 = vcmask 15360
        %v1290 = vsel %vm1288, %v1267, 0
        %vm1292 = vcmask 1041408
        %v1293 = vsel %vm1292, %v1278, 0
        %v1295 = vsel %vm1292, %v1286, 0
        %v1297 = vsel %vm1292, %v1285, 0
        %v1299 = vsel %vm1292, %v1287, 0
        %1301 = vmatprep.subr.mxu0 %v1295
        %1302 = vmatpush1.msra.mxu0 %v1293
        %1303 = vmatprep.subr.mxu0 0.0
        %1304 = vmatpush1.msra.mxu0 0.0
        %1305 = vmatprep.subr.mxu0 0.0
        %1306 = vmatpush1.msra.mxu0 0.0
        %1307 = vmatprep.subr.mxu0 0.0
        %1308 = vmatpush1.msra.mxu0 0.0
        %1309 = vmatprep.subr.mxu0 0.0
        %1310 = vmatpush1.msra.mxu0 0.0
        %1311 = vmatprep.subr.mxu0 0.0
        %1312 = vmatpush1.msra.mxu0 0.0
        %1313 = vmatprep.subr.mxu0 0.0
        %1314 = vmatpush1.msra.mxu0 0.0
        %1315 = vmatprep.subr.mxu0 0.0
        %1316 = vmatpush1.msra.mxu0 0.0
        %1317 = vmatprep.subr.mxu0 0.0
        %1318 = vmatpush1.msra.mxu0 0.0
        %1319 = vmatprep.subr.mxu0 0.0
        %1320 = vmatpush1.msra.mxu0 0.0
        %1321 = vmatprep.subr.mxu0 0.0
        %1322 = vmatpush1.msra.mxu0 0.0
        %1323 = vmatprep.subr.mxu0 0.0
        %1324 = vmatpush1.msra.mxu0 0.0
        %1325 = vmatprep.subr.mxu0 0.0
        %1326 = vmatpush1.msra.mxu0 0.0
        %1327 = vmatprep.subr.mxu0 0.0
        %1328 = vmatpush1.msra.mxu0 0.0
        %1329 = vmatprep.subr.mxu0 0.0
        %1330 = vmatpush1.msra.mxu0 0.0
        %1331 = vmatprep.subr.mxu0 0.0
        %1332 = vmatpush1.msra.mxu0 0.0
        %1333 = vmatprep.subr.mxu0 0.0
        %1334 = vmatpush1.msra.mxu0 0.0
        %1335 = vmatprep.subr.mxu0 0.0
        %1336 = vmatpush1.msra.mxu0 0.0
        %1337 = vmatprep.subr.mxu0 0.0
        %1338 = vmatpush1.msra.mxu0 0.0
        %1339 = vmatprep.subr.mxu0 0.0
        %1340 = vmatpush1.msra.mxu0 0.0
        %1341 = vmatprep.subr.mxu0 0.0
        %1342 = vmatpush1.msra.mxu0 0.0
        %1343 = vmatprep.subr.mxu0 0.0
        %1344 = vmatpush1.msra.mxu0 0.0
        %1345 = vmatprep.subr.mxu0 0.0
        %1346 = vmatpush1.msra.mxu0 0.0
        %1347 = vmatprep.subr.mxu0 0.0
        %1348 = vmatpush1.msra.mxu0 0.0
        %1349 = vmatprep.subr.mxu0 0.0
        %1350 = vmatpush1.msra.mxu0 0.0
        %1351 = vmatprep.subr.mxu0 0.0
        %1352 = vmatpush1.msra.mxu0 0.0
        %1353 = vmatprep.subr.mxu0 0.0
        %1354 = vmatpush1.msra.mxu0 0.0
        %1355 = vmatprep.subr.mxu0 0.0
        %1356 = vmatpush1.msra.mxu0 0.0
        %1357 = vmatprep.subr.mxu0 0.0
        %1358 = vmatpush1.msra.mxu0 0.0
        %1359 = vmatprep.subr.mxu0 0.0
        %1360 = vmatpush1.msra.mxu0 0.0
        %1361 = vmatprep.subr.mxu0 0.0
        %1362 = vmatpush1.msra.mxu0 0.0
        %1363 = vmatprep.subr.mxu0 0.0
        %1364 = vmatpush1.msra.mxu0 0.0
        %1365 = vmatprep.mubr.f32.mxu0 0.0
        %1366 = vmatmul.mubr.f32.gmra.mrb[0].mxu0 %v1290
        %v1367 = vpop.f32.mrb[0].mxu0
        %v1368 = vadd.f32 0.0, %v1367
        %v1369 = vpop.f32.mrb[0].mxu0
        %v1370 = vadd.f32 0.0, %v1369
        %1371 = vdwg.mxu0
        %1372 = vmatprep.subr.mxu0 %v1299
        %1373 = vmatpush1.msra.mxu0 %v1297
        %1374 = vmatprep.subr.mxu0 0.0
        %1375 = vmatpush1.msra.mxu0 0.0
        %1376 = vmatprep.subr.mxu0 0.0
        %1377 = vmatpush1.msra.mxu0 0.0
        %1378 = vmatprep.subr.mxu0 0.0
        %1379 = vmatpush1.msra.mxu0 0.0
        %1380 = vmatprep.subr.mxu0 0.0
        %1381 = vmatpush1.msra.mxu0 0.0
        %1382 = vmatprep.subr.mxu0 0.0
        %1383 = vmatpush1.msra.mxu0 0.0
        %1384 = vmatprep.subr.mxu0 0.0
        %1385 = vmatpush1.msra.mxu0 0.0
        %1386 = vmatprep.subr.mxu0 0.0
        %1387 = vmatpush1.msra.mxu0 0.0
        %1388 = vmatprep.subr.mxu0 0.0
        %1389 = vmatpush1.msra.mxu0 0.0
        %1390 = vmatprep.subr.mxu0 0.0
        %1391 = vmatpush1.msra.mxu0 0.0
        %1392 = vmatprep.subr.mxu0 0.0
        %1393 = vmatpush1.msra.mxu0 0.0
        %1394 = vmatprep.subr.mxu0 0.0
        %1395 = vmatpush1.msra.mxu0 0.0
        %1396 = vmatprep.subr.mxu0 0.0
        %1397 = vmatpush1.msra.mxu0 0.0
        %1398 = vmatprep.subr.mxu0 0.0
        %1399 = vmatpush1.msra.mxu0 0.0
        %1400 = vmatprep.subr.mxu0 0.0
        %1401 = vmatpush1.msra.mxu0 0.0
        %1402 = vmatprep.subr.mxu0 0.0
        %1403 = vmatpush1.msra.mxu0 0.0
        %1404 = vmatprep.subr.mxu0 0.0
        %1405 = vmatpush1.msra.mxu0 0.0
        %1406 = vmatprep.subr.mxu0 0.0
        %1407 = vmatpush1.msra.mxu0 0.0
        %1408 = vmatprep.subr.mxu0 0.0
        %1409 = vmatpush1.msra.mxu0 0.0
        %1410 = vmatprep.subr.mxu0 0.0
        %1411 = vmatpush1.msra.mxu0 0.0
        %1412 = vmatprep.subr.mxu0 0.0
        %1413 = vmatpush1.msra.mxu0 0.0
        %1414 = vmatprep.subr.mxu0 0.0
        %1415 = vmatpush1.msra.mxu0 0.0
        %1416 = vmatprep.subr.mxu0 0.0
        %1417 = vmatpush1.msra.mxu0 0.0
        %1418 = vmatprep.subr.mxu0 0.0
        %1419 = vmatpush1.msra.mxu0 0.0
        %1420 = vmatprep.subr.mxu0 0.0
        %1421 = vmatpush1.msra.mxu0 0.0
        %1422 = vmatprep.subr.mxu0 0.0
        %1423 = vmatpush1.msra.mxu0 0.0
        %1424 = vmatprep.subr.mxu0 0.0
        %1425 = vmatpush1.msra.mxu0 0.0
        %1426 = vmatprep.subr.mxu0 0.0
        %1427 = vmatpush1.msra.mxu0 0.0
        %1428 = vmatprep.subr.mxu0 0.0
        %1429 = vmatpush1.msra.mxu0 0.0
        %1430 = vmatprep.subr.mxu0 0.0
        %1431 = vmatpush1.msra.mxu0 0.0
        %1432 = vmatprep.subr.mxu0 0.0
        %1433 = vmatpush1.msra.mxu0 0.0
        %1434 = vmatprep.subr.mxu0 0.0
        %1435 = vmatpush1.msra.mxu0 0.0
        %1436 = vmatprep.mubr.f32.mxu0 0.0
        %1437 = vmatmul.mubr.f32.gmra.mrb[0].mxu0 %v1290
        %v1438 = vpop.f32.mrb[0].mxu0
        %v1439 = vadd.f32 0.0, %v1438
        %v1440 = vpop.f32.mrb[0].mxu0
        %v1441 = vadd.f32 0.0, %v1440
        %1442 = vdwg.mxu0
        %v1443 = vsub.f32 %v1061, %v1368
        %v1444 = vsub.f32 %v1062, %v1370
        %v1445 = vsub.f32 %v1063, %v1439
        %v1446 = vsub.f32 %v1064, %v1441
        %v1447 = vmul.f32 %v1443, %v1443
        %v1448 = vmul.f32 %v1444, %v1444
        %v1449 = vmul.f32 %v1445, %v1445
        %v1450 = vmul.f32 %v1446, %v1446
        %1451 = vmatprep.subr.mxu0 0.0
        %1452 = vmatpush1.msra.mxu0 %v1065
        %1453 = vmatprep.subr.mxu0 0.0
        %1454 = vmatpush1.msra.mxu0 %v1066
        %1455 = vmatprep.subr.mxu0 0.0
        %1456 = vmatpush1.msra.mxu0 %v1067
        %1457 = vmatprep.subr.mxu0 0.0
        %1458 = vmatpush1.msra.mxu0 %v1068
        %1459 = vmatprep.subr.mxu0 0.0
        %1460 = vmatpush1.msra.mxu0 %v1069
        %1461 = vmatprep.subr.mxu0 0.0
        %1462 = vmatpush1.msra.mxu0 %v1070
        %1463 = vmatprep.subr.mxu0 0.0
        %1464 = vmatpush1.msra.mxu0 %v1071
        %1465 = vmatprep.subr.mxu0 0.0
        %1466 = vmatpush1.msra.mxu0 %v1072
        %1467 = vmatprep.subr.mxu0 0.0
        %1468 = vmatpush1.msra.mxu0 %v1073
        %1469 = vmatprep.subr.mxu0 0.0
        %1470 = vmatpush1.msra.mxu0 %v1074
        %1471 = vmatprep.subr.mxu0 0.0
        %1472 = vmatpush1.msra.mxu0 %v1075
        %1473 = vmatprep.subr.mxu0 0.0
        %1474 = vmatpush1.msra.mxu0 %v1076
        %1475 = vmatprep.subr.mxu0 0.0
        %1476 = vmatpush1.msra.mxu0 %v1077
        %1477 = vmatprep.subr.mxu0 0.0
        %1478 = vmatpush1.msra.mxu0 %v1078
        %1479 = vmatprep.subr.mxu0 0.0
        %1480 = vmatpush1.msra.mxu0 %v1079
        %1481 = vmatprep.subr.mxu0 0.0
        %1482 = vmatpush1.msra.mxu0 %v1080
        %1483 = vmatprep.subr.mxu0 0.0
        %1484 = vmatpush1.msra.mxu0 %v1081
        %1485 = vmatprep.subr.mxu0 0.0
        %1486 = vmatpush1.msra.mxu0 %v1082
        %1487 = vmatprep.subr.mxu0 0.0
        %1488 = vmatpush1.msra.mxu0 %v1083
        %1489 = vmatprep.subr.mxu0 0.0
        %1490 = vmatpush1.msra.mxu0 %v1084
        %1491 = vmatprep.subr.mxu0 0.0
        %1492 = vmatpush1.msra.mxu0 %v1085
        %1493 = vmatprep.subr.mxu0 0.0
        %1494 = vmatpush1.msra.mxu0 %v1086
        %1495 = vmatprep.subr.mxu0 0.0
        %1496 = vmatpush1.msra.mxu0 %v1087
        %1497 = vmatprep.subr.mxu0 0.0
        %1498 = vmatpush1.msra.mxu0 %v1088
        %1499 = vmatprep.subr.mxu0 0.0
        %1500 = vmatpush1.msra.mxu0 %v1089
        %1501 = vmatprep.subr.mxu0 0.0
        %1502 = vmatpush1.msra.mxu0 %v1090
        %1503 = vmatprep.subr.mxu0 0.0
        %1504 = vmatpush1.msra.mxu0 %v1091
        %1505 = vmatprep.subr.mxu0 0.0
        %1506 = vmatpush1.msra.mxu0 %v1092
        %1507 = vmatprep.subr.mxu0 0.0
        %1508 = vmatpush1.msra.mxu0 %v1093
        %1509 = vmatprep.subr.mxu0 0.0
        %1510 = vmatpush1.msra.mxu0 %v1094
        %1511 = vmatprep.subr.mxu0 0.0
        %1512 = vmatpush1.msra.mxu0 %v1095
        %1513 = vmatprep.subr.mxu0 0.0
        %1514 = vmatpush1.msra.mxu0 %v1096
        %1515 = vmatprep.mubr.f32.mxu0 %v1448
        %1516 = vmatmul.mubr.f32.gmra.mrb[0].mxu0 %v1447
        %v1517 = vpop.f32.mrb[0].mxu0
        %v1518 = vadd.f32 1e-08, %v1517
        %v1519 = vpop.f32.mrb[0].mxu0
        %1520 = vdwg.mxu0
        %1521 = vmatprep.subr.mxu0 0.0
        %1522 = vmatpush1.msra.mxu0 %v1097
        %1523 = vmatprep.subr.mxu0 0.0
        %1524 = vmatpush1.msra.mxu0 %v1098
        %1525 = vmatprep.subr.mxu0 0.0
        %1526 = vmatpush1.msra.mxu0 %v1099
        %1527 = vmatprep.subr.mxu0 0.0
        %1528 = vmatpush1.msra.mxu0 %v1100
        %1529 = vmatprep.subr.mxu0 0.0
        %1530 = vmatpush1.msra.mxu0 %v1101
        %1531 = vmatprep.subr.mxu0 0.0
        %1532 = vmatpush1.msra.mxu0 %v1102
        %1533 = vmatprep.subr.mxu0 0.0
        %1534 = vmatpush1.msra.mxu0 %v1103
        %1535 = vmatprep.subr.mxu0 0.0
        %1536 = vmatpush1.msra.mxu0 %v1104
        %1537 = vmatprep.subr.mxu0 0.0
        %1538 = vmatpush1.msra.mxu0 %v1105
        %1539 = vmatprep.subr.mxu0 0.0
        %1540 = vmatpush1.msra.mxu0 %v1106
        %1541 = vmatprep.subr.mxu0 0.0
        %1542 = vmatpush1.msra.mxu0 %v1107
        %1543 = vmatprep.subr.mxu0 0.0
        %1544 = vmatpush1.msra.mxu0 %v1108
        %1545 = vmatprep.subr.mxu0 0.0
        %1546 = vmatpush1.msra.mxu0 %v1109
        %1547 = vmatprep.subr.mxu0 0.0
        %1548 = vmatpush1.msra.mxu0 %v1110
        %1549 = vmatprep.subr.mxu0 0.0
        %1550 = vmatpush1.msra.mxu0 %v1111
        %1551 = vmatprep.subr.mxu0 0.0
        %1552 = vmatpush1.msra.mxu0 %v1112
        %1553 = vmatprep.subr.mxu0 0.0
        %1554 = vmatpush1.msra.mxu0 %v1113
        %1555 = vmatprep.subr.mxu0 0.0
        %1556 = vmatpush1.msra.mxu0 %v1114
        %1557 = vmatprep.subr.mxu0 0.0
        %1558 = vmatpush1.msra.mxu0 %v1115
        %1559 = vmatprep.subr.mxu0 0.0
        %1560 = vmatpush1.msra.mxu0 %v1116
        %1561 = vmatprep.subr.mxu0 0.0
        %1562 = vmatpush1.msra.mxu0 %v1117
        %1563 = vmatprep.subr.mxu0 0.0
        %1564 = vmatpush1.msra.mxu0 %v1118
        %1565 = vmatprep.subr.mxu0 0.0
        %1566 = vmatpush1.msra.mxu0 %v1119
        %1567 = vmatprep.subr.mxu0 0.0
        %1568 = vmatpush1.msra.mxu0 %v1120
        %1569 = vmatprep.subr.mxu0 0.0
        %1570 = vmatpush1.msra.mxu0 %v1121
        %1571 = vmatprep.subr.mxu0 0.0
        %1572 = vmatpush1.msra.mxu0 %v1122
        %1573 = vmatprep.subr.mxu0 0.0
        %1574 = vmatpush1.msra.mxu0 %v1123
        %1575 = vmatprep.subr.mxu0 0.0
        %1576 = vmatpush1.msra.mxu0 %v1124
        %1577 = vmatprep.subr.mxu0 0.0
        %1578 = vmatpush1.msra.mxu0 %v1125
        %1579 = vmatprep.subr.mxu0 0.0
        %1580 = vmatpush1.msra.mxu0 %v1126
        %1581 = vmatprep.subr.mxu0 0.0
        %1582 = vmatpush1.msra.mxu0 %v1127
        %1583 = vmatprep.subr.mxu0 0.0
        %1584 = vmatpush1.msra.mxu0 %v1128
        %1585 = vmatprep.mubr.f32.mxu0 %v1450
        %1586 = vmatmul.mubr.f32.gmra.mrb[0].mxu0 %v1449
        %v1587 = vpop.f32.mrb[0].mxu0
        %v1588 = vadd.f32 %v1518, %v1587
        %v1589 = vpop.f32.mrb[0].mxu0
        %1590 = vdwg.mxu0
        %v1591 = vrsqrt.pop %v1588
        %v1592 = vmul.f32 %v1588, %v1591
        %vm1593 = vcmp.eq.f32.partialorder %v1588, inf
        %v1594 = vsel %vm1593, %v1588, %v1592
        %vm1595 = vcmp.eq.f32.partialorder %v1588, 0.0
        %v1596 = vand.u32 %v1588, 2147483648
        %v1597 = vsel %vm1595, %v1596, %v1594
        %v1598 = vrcp.pop %v1597
        %v1599 = vmul.f32 1.0, %v1598
        %v1601 = vsel %vm1288, %v1599, 0
        %1603 = vmatprep.subr.mxu0 %v1295
        %1604 = vmatpush1.msra.mxu0 %v1293
        %1605 = vmatprep.subr.mxu0 0.0
        %1606 = vmatpush1.msra.mxu0 0.0
        %1607 = vmatprep.subr.mxu0 0.0
        %1608 = vmatpush1.msra.mxu0 0.0
        %1609 = vmatprep.subr.mxu0 0.0
        %1610 = vmatpush1.msra.mxu0 0.0
        %1611 = vmatprep.subr.mxu0 0.0
        %1612 = vmatpush1.msra.mxu0 0.0
        %1613 = vmatprep.subr.mxu0 0.0
        %1614 = vmatpush1.msra.mxu0 0.0
        %1615 = vmatprep.subr.mxu0 0.0
        %1616 = vmatpush1.msra.mxu0 0.0
        %1617 = vmatprep.subr.mxu0 0.0
        %1618 = vmatpush1.msra.mxu0 0.0
        %1619 = vmatprep.subr.mxu0 0.0
        %1620 = vmatpush1.msra.mxu0 0.0
        %1621 = vmatprep.subr.mxu0 0.0
        %1622 = vmatpush1.msra.mxu0 0.0
        %1623 = vmatprep.subr.mxu0 0.0
        %1624 = vmatpush1.msra.mxu0 0.0
        %1625 = vmatprep.subr.mxu0 0.0
        %1626 = vmatpush1.msra.mxu0 0.0
        %1627 = vmatprep.subr.mxu0 0.0
        %1628 = vmatpush1.msra.mxu0 0.0
        %1629 = vmatprep.subr.mxu0 0.0
        %1630 = vmatpush1.msra.mxu0 0.0
        %1631 = vmatprep.subr.mxu0 0.0
        %1632 = vmatpush1.msra.mxu0 0.0
        %1633 = vmatprep.subr.mxu0 0.0
        %1634 = vmatpush1.msra.mxu0 0.0
        %1635 = vmatprep.subr.mxu0 0.0
        %1636 = vmatpush1.msra.mxu0 0.0
        %1637 = vmatprep.subr.mxu0 0.0
        %1638 = vmatpush1.msra.mxu0 0.0
        %1639 = vmatprep.subr.mxu0 0.0
        %1640 = vmatpush1.msra.mxu0 0.0
        %1641 = vmatprep.subr.mxu0 0.0
        %1642 = vmatpush1.msra.mxu0 0.0
        %1643 = vmatprep.subr.mxu0 0.0
        %1644 = vmatpush1.msra.mxu0 0.0
        %1645 = vmatprep.subr.mxu0 0.0
        %1646 = vmatpush1.msra.mxu0 0.0
        %1647 = vmatprep.subr.mxu0 0.0
        %1648 = vmatpush1.msra.mxu0 0.0
        %1649 = vmatprep.subr.mxu0 0.0
        %1650 = vmatpush1.msra.mxu0 0.0
        %1651 = vmatprep.subr.mxu0 0.0
        %1652 = vmatpush1.msra.mxu0 0.0
        %1653 = vmatprep.subr.mxu0 0.0
        %1654 = vmatpush1.msra.mxu0 0.0
        %1655 = vmatprep.subr.mxu0 0.0
        %1656 = vmatpush1.msra.mxu0 0.0
        %1657 = vmatprep.subr.mxu0 0.0
        %1658 = vmatpush1.msra.mxu0 0.0
        %1659 = vmatprep.subr.mxu0 0.0
        %1660 = vmatpush1.msra.mxu0 0.0
        %1661 = vmatprep.subr.mxu0 0.0
        %1662 = vmatpush1.msra.mxu0 0.0
        %1663 = vmatprep.subr.mxu0 0.0
        %1664 = vmatpush1.msra.mxu0 0.0
        %1665 = vmatprep.subr.mxu0 0.0
        %1666 = vmatpush1.msra.mxu0 0.0
        %1667 = vmatprep.mubr.f32.mxu0 0.0
        %1668 = vmatmul.mubr.f32.gmra.mrb[0].mxu0 %v1601
        %v1669 = vpop.f32.mrb[0].mxu0
        %v1670 = vadd.f32 0.0, %v1669
        %v1671 = vpop.f32.mrb[0].mxu0
        %v1672 = vadd.f32 0.0, %v1671
        %1673 = vdwg.mxu0
        %1674 = vmatprep.subr.mxu0 %v1299
        %1675 = vmatpush1.msra.mxu0 %v1297
        %1676 = vmatprep.subr.mxu0 0.0
        %1677 = vmatpush1.msra.mxu0 0.0
        %1678 = vmatprep.subr.mxu0 0.0
        %1679 = vmatpush1.msra.mxu0 0.0
        %1680 = vmatprep.subr.mxu0 0.0
        %1681 = vmatpush1.msra.mxu0 0.0
        %1682 = vmatprep.subr.mxu0 0.0
        %1683 = vmatpush1.msra.mxu0 0.0
        %1684 = vmatprep.subr.mxu0 0.0
        %1685 = vmatpush1.msra.mxu0 0.0
        %1686 = vmatprep.subr.mxu0 0.0
        %1687 = vmatpush1.msra.mxu0 0.0
        %1688 = vmatprep.subr.mxu0 0.0
        %1689 = vmatpush1.msra.mxu0 0.0
        %1690 = vmatprep.subr.mxu0 0.0
        %1691 = vmatpush1.msra.mxu0 0.0
        %1692 = vmatprep.subr.mxu0 0.0
        %1693 = vmatpush1.msra.mxu0 0.0
        %1694 = vmatprep.subr.mxu0 0.0
        %1695 = vmatpush1.msra.mxu0 0.0
        %1696 = vmatprep.subr.mxu0 0.0
        %1697 = vmatpush1.msra.mxu0 0.0
        %1698 = vmatprep.subr.mxu0 0.0
        %1699 = vmatpush1.msra.mxu0 0.0
        %1700 = vmatprep.subr.mxu0 0.0
        %1701 = vmatpush1.msra.mxu0 0.0
        %1702 = vmatprep.subr.mxu0 0.0
        %1703 = vmatpush1.msra.mxu0 0.0
        %1704 = vmatprep.subr.mxu0 0.0
        %1705 = vmatpush1.msra.mxu0 0.0
        %1706 = vmatprep.subr.mxu0 0.0
        %1707 = vmatpush1.msra.mxu0 0.0
        %1708 = vmatprep.subr.mxu0 0.0
        %1709 = vmatpush1.msra.mxu0 0.0
        %1710 = vmatprep.subr.mxu0 0.0
        %1711 = vmatpush1.msra.mxu0 0.0
        %1712 = vmatprep.subr.mxu0 0.0
        %1713 = vmatpush1.msra.mxu0 0.0
        %1714 = vmatprep.subr.mxu0 0.0
        %1715 = vmatpush1.msra.mxu0 0.0
        %1716 = vmatprep.subr.mxu0 0.0
        %1717 = vmatpush1.msra.mxu0 0.0
        %1718 = vmatprep.subr.mxu0 0.0
        %1719 = vmatpush1.msra.mxu0 0.0
        %1720 = vmatprep.subr.mxu0 0.0
        %1721 = vmatpush1.msra.mxu0 0.0
        %1722 = vmatprep.subr.mxu0 0.0
        %1723 = vmatpush1.msra.mxu0 0.0
        %1724 = vmatprep.subr.mxu0 0.0
        %1725 = vmatpush1.msra.mxu0 0.0
        %1726 = vmatprep.subr.mxu0 0.0
        %1727 = vmatpush1.msra.mxu0 0.0
        %1728 = vmatprep.subr.mxu0 0.0
        %1729 = vmatpush1.msra.mxu0 0.0
        %1730 = vmatprep.subr.mxu0 0.0
        %1731 = vmatpush1.msra.mxu0 0.0
        %1732 = vmatprep.subr.mxu0 0.0
        %1733 = vmatpush1.msra.mxu0 0.0
        %1734 = vmatprep.subr.mxu0 0.0
        %1735 = vmatpush1.msra.mxu0 0.0
        %1736 = vmatprep.subr.mxu0 0.0
        %1737 = vmatpush1.msra.mxu0 0.0
        %1738 = vmatprep.mubr.f32.mxu0 0.0
        %1739 = vmatmul.mubr.f32.gmra.mrb[0].mxu0 %v1601
        %v1740 = vpop.f32.mrb[0].mxu0
        %v1741 = vadd.f32 0.0, %v1740
        %v1742 = vpop.f32.mrb[0].mxu0
        %v1743 = vadd.f32 0.0, %v1742
        %1744 = vdwg.mxu0
        %v1745 = vmul.f32 %v1443, %v1670
        %v1746 = vmul.f32 %v1444, %v1672
        %v1747 = vmul.f32 %v1445, %v1741
        %v1748 = vmul.f32 %v1446, %v1743
        %v1749 = vld [vmem:[%s5] sm:$0xff]
        %v1750 = vld [vmem:[%s5 + $0x8] sm:$0xff]
        %v1751 = vld [vmem:[%s6] sm:$0xff]
        %v1752 = vld [vmem:[%s6 + $0x8] sm:$0xff]
        %vm1753 = vcmask 64512
        %v1755 = vsel %vm1753, %v1751, 0
        %v1758 = vsel %vm1753, %v1752, 0
        %1760 = vmatprep.subr.mxu0 0.0
        %1761 = vmatpush1.msra.mxu0 %v1597
        %1762 = vmatprep.subr.mxu0 0.0
        %1763 = vmatpush1.msra.mxu0 0.0
        %1764 = vmatprep.subr.mxu0 0.0
        %1765 = vmatpush1.msra.mxu0 0.0
        %1766 = vmatprep.subr.mxu0 0.0
        %1767 = vmatpush1.msra.mxu0 0.0
        %1768 = vmatprep.subr.mxu0 0.0
        %1769 = vmatpush1.msra.mxu0 0.0
        %1770 = vmatprep.subr.mxu0 0.0
        %1771 = vmatpush1.msra.mxu0 0.0
        %1772 = vmatprep.subr.mxu0 0.0
        %1773 = vmatpush1.msra.mxu0 0.0
        %1774 = vmatprep.subr.mxu0 0.0
        %1775 = vmatpush1.msra.mxu0 0.0
        %1776 = vmatprep.subr.mxu0 0.0
        %1777 = vmatpush1.msra.mxu0 0.0
        %1778 = vmatprep.subr.mxu0 0.0
        %1779 = vmatpush1.msra.mxu0 0.0
        %1780 = vmatprep.subr.mxu0 0.0
        %1781 = vmatpush1.msra.mxu0 0.0
        %1782 = vmatprep.subr.mxu0 0.0
        %1783 = vmatpush1.msra.mxu0 0.0
        %1784 = vmatprep.subr.mxu0 0.0
        %1785 = vmatpush1.msra.mxu0 0.0
        %1786 = vmatprep.subr.mxu0 0.0
        %1787 = vmatpush1.msra.mxu0 0.0
        %1788 = vmatprep.subr.mxu0 0.0
        %1789 = vmatpush1.msra.mxu0 0.0
        %1790 = vmatprep.subr.mxu0 0.0
        %1791 = vmatpush1.msra.mxu0 0.0
        %1792 = vmatprep.subr.mxu0 0.0
        %1793 = vmatpush1.msra.mxu0 0.0
        %1794 = vmatprep.subr.mxu0 0.0
        %1795 = vmatpush1.msra.mxu0 0.0
        %1796 = vmatprep.subr.mxu0 0.0
        %1797 = vmatpush1.msra.mxu0 0.0
        %1798 = vmatprep.subr.mxu0 0.0
        %1799 = vmatpush1.msra.mxu0 0.0
        %1800 = vmatprep.subr.mxu0 0.0
        %1801 = vmatpush1.msra.mxu0 0.0
        %1802 = vmatprep.subr.mxu0 0.0
        %1803 = vmatpush1.msra.mxu0 0.0
        %1804 = vmatprep.subr.mxu0 0.0
        %1805 = vmatpush1.msra.mxu0 0.0
        %1806 = vmatprep.subr.mxu0 0.0
        %1807 = vmatpush1.msra.mxu0 0.0
        %1808 = vmatprep.subr.mxu0 0.0
        %1809 = vmatpush1.msra.mxu0 0.0
        %1810 = vmatprep.subr.mxu0 0.0
        %1811 = vmatpush1.msra.mxu0 0.0
        %1812 = vmatprep.subr.mxu0 0.0
        %1813 = vmatpush1.msra.mxu0 0.0
        %1814 = vmatprep.subr.mxu0 0.0
        %1815 = vmatpush1.msra.mxu0 0.0
        %1816 = vmatprep.subr.mxu0 0.0
        %1817 = vmatpush1.msra.mxu0 0.0
        %1818 = vmatprep.subr.mxu0 0.0
        %1819 = vmatpush1.msra.mxu0 0.0
        %1820 = vmatprep.subr.mxu0 0.0
        %1821 = vmatpush1.msra.mxu0 0.0
        %1822 = vmatprep.subr.mxu0 0.0
        %1823 = vmatpush1.msra.mxu0 0.0
        %1824 = vmatprep.mubr.f32.mxu0 0.0
        %1825 = vmatmul.mubr.f32.gmra.mrb[0].mxu0 %v1755
        %v1826 = vpop.f32.mrb[0].mxu0
        %v1827 = vadd.f32 0.0, %v1826
        %v1828 = vpop.f32.mrb[0].mxu0
        %1829 = vmatprep.mubr.f32.mxu0 0.0
        %1830 = vmatmul.mubr.f32.gmra.mrb[0].mxu0 %v1758
        %v1831 = vpop.f32.mrb[0].mxu0
        %v1832 = vadd.f32 0.0, %v1831
        %v1833 = vpop.f32.mrb[0].mxu0
        %1834 = vdwg.mxu0
        %v1836 = vsel %vm1753, %v1749, 0
        %v1839 = vsel %vm1753, %v1750, 0
        %1841 = vmatprep.subr.mxu0 0.0
        %1842 = vmatpush1.msra.mxu0 %v1267
        %1843 = vmatprep.subr.mxu0 0.0
        %1844 = vmatpush1.msra.mxu0 0.0
        %1845 = vmatprep.subr.mxu0 0.0
        %1846 = vmatpush1.msra.mxu0 0.0
        %1847 = vmatprep.subr.mxu0 0.0
        %1848 = vmatpush1.msra.mxu0 0.0
        %1849 = vmatprep.subr.mxu0 0.0
        %1850 = vmatpush1.msra.mxu0 0.0
        %1851 = vmatprep.subr.mxu0 0.0
        %1852 = vmatpush1.msra.mxu0 0.0
        %1853 = vmatprep.subr.mxu0 0.0
        %1854 = vmatpush1.msra.mxu0 0.0
        %1855 = vmatprep.subr.mxu0 0.0
        %1856 = vmatpush1.msra.mxu0 0.0
        %1857 = vmatprep.subr.mxu0 0.0
        %1858 = vmatpush1.msra.mxu0 0.0
        %1859 = vmatprep.subr.mxu0 0.0
        %1860 = vmatpush1.msra.mxu0 0.0
        %1861 = vmatprep.subr.mxu0 0.0
        %1862 = vmatpush1.msra.mxu0 0.0
        %1863 = vmatprep.subr.mxu0 0.0
        %1864 = vmatpush1.msra.mxu0 0.0
        %1865 = vmatprep.subr.mxu0 0.0
        %1866 = vmatpush1.msra.mxu0 0.0
        %1867 = vmatprep.subr.mxu0 0.0
        %1868 = vmatpush1.msra.mxu0 0.0
        %1869 = vmatprep.subr.mxu0 0.0
        %1870 = vmatpush1.msra.mxu0 0.0
        %1871 = vmatprep.subr.mxu0 0.0
        %1872 = vmatpush1.msra.mxu0 0.0
        %1873 = vmatprep.subr.mxu0 0.0
        %1874 = vmatpush1.msra.mxu0 0.0
        %1875 = vmatprep.subr.mxu0 0.0
        %1876 = vmatpush1.msra.mxu0 0.0
        %1877 = vmatprep.subr.mxu0 0.0
        %1878 = vmatpush1.msra.mxu0 0.0
        %1879 = vmatprep.subr.mxu0 0.0
        %1880 = vmatpush1.msra.mxu0 0.0
        %1881 = vmatprep.subr.mxu0 0.0
        %1882 = vmatpush1.msra.mxu0 0.0
        %1883 = vmatprep.subr.mxu0 0.0
        %1884 = vmatpush1.msra.mxu0 0.0
        %1885 = vmatprep.subr.mxu0 0.0
        %1886 = vmatpush1.msra.mxu0 0.0
        %1887 = vmatprep.subr.mxu0 0.0
        %1888 = vmatpush1.msra.mxu0 0.0
        %1889 = vmatprep.subr.mxu0 0.0
        %1890 = vmatpush1.msra.mxu0 0.0
        %1891 = vmatprep.subr.mxu0 0.0
        %1892 = vmatpush1.msra.mxu0 0.0
        %1893 = vmatprep.subr.mxu0 0.0
        %1894 = vmatpush1.msra.mxu0 0.0
        %1895 = vmatprep.subr.mxu0 0.0
        %1896 = vmatpush1.msra.mxu0 0.0
        %1897 = vmatprep.subr.mxu0 0.0
        %1898 = vmatpush1.msra.mxu0 0.0
        %1899 = vmatprep.subr.mxu0 0.0
        %1900 = vmatpush1.msra.mxu0 0.0
        %1901 = vmatprep.subr.mxu0 0.0
        %1902 = vmatpush1.msra.mxu0 0.0
        %1903 = vmatprep.subr.mxu0 0.0
        %1904 = vmatpush1.msra.mxu0 0.0
        %1905 = vmatprep.mubr.f32.mxu0 0.0
        %1906 = vmatmul.mubr.f32.gmra.mrb[0].mxu0 %v1836
        %v1907 = vpop.f32.mrb[0].mxu0
        %v1908 = vadd.f32 %v1827, %v1907
        %v1909 = vpop.f32.mrb[0].mxu0
        %1910 = vmatprep.mubr.f32.mxu0 0.0
        %1911 = vmatmul.mubr.f32.gmra.mrb[0].mxu0 %v1839
        %v1912 = vpop.f32.mrb[0].mxu0
        %v1913 = vadd.f32 %v1832, %v1912
        %v1914 = vpop.f32.mrb[0].mxu0
        %1915 = vdwg.mxu0
        %v1916 = vld [vmem:[%s7] sm:$0xff]
        %v1917 = vld [vmem:[%s7 + $0x8] sm:$0xff]
        %1919 = vset.pattern.permute.xlu0 0
        %1920 = vperm.xlu0 %1919, %v1916
        %v1921 = vpop.permute.xlu0 %1920
        %1924 = vset.pattern.permute.xlu0 0
        %1925 = vperm.xlu0 %1924, %v1917
        %v1926 = vpop.permute.xlu0 %1925
        %v1928 = vadd.f32 %v1908, %v1921
        %v1929 = vadd.f32 %v1913, %v1926
        %1930 = vst.msk [vmem:[%s620] sm:$0xff] %vm1288, %v1928
        %1931 = vst.msk [vmem:[%s620 + $0x8] sm:$0xff] %vm1288, %v1929
        %1932 = vrot.lane.b32.xlu0 %v1745, 17
        %v1933 = vpop.permute.xlu0 %1932
        %1934 = vrot.lane.b32.xlu0 %v1746, 17
        %v1935 = vpop.permute.xlu0 %1934
        %1936 = vrot.lane.b32.xlu0 %v1747, 17
        %v1937 = vpop.permute.xlu0 %1936
        %1938 = vrot.lane.b32.xlu0 %v1748, 17
        %v1939 = vpop.permute.xlu0 %1938
        %v1940 = vsel %vm648, %v1937, %v1939
        %v1941 = vsel %vm648, %v1935, %v1937
        %v1942 = vsel %vm648, %v1933, %v1935
        %v1943 = vsel %vm648, %v1939, %v1933
        %v1944 = vmul.f32 %v1943, %v656
        %v1945 = vmul.f32 %v1942, %v660
        %v1946 = vmul.f32 %v1941, %v664
        %v1947 = vmul.f32 %v1940, %v668
        %1948 = vrot.lane.b32.xlu0 %v1745, 16
        %v1949 = vpop.permute.xlu0 %1948
        %1950 = vrot.lane.b32.xlu0 %v1746, 16
        %v1951 = vpop.permute.xlu0 %1950
        %1952 = vrot.lane.b32.xlu0 %v1747, 16
        %v1953 = vpop.permute.xlu0 %1952
        %1954 = vrot.lane.b32.xlu0 %v1748, 16
        %v1955 = vpop.permute.xlu0 %1954
        %v1956 = vsel %vm681, %v1953, %v1955
        %v1957 = vsel %vm681, %v1951, %v1953
        %v1958 = vsel %vm681, %v1949, %v1951
        %v1959 = vsel %vm681, %v1955, %v1949
        %v1960 = vmul.f32 %v1959, %v689
        %v1961 = vmul.f32 %v1958, %v693
        %v1962 = vmul.f32 %v1957, %v697
        %v1963 = vmul.f32 %v1956, %v701
        %1964 = vrot.lane.b32.xlu0 %v1745, 15
        %v1965 = vpop.permute.xlu0 %1964
        %1966 = vrot.lane.b32.xlu0 %v1746, 15
        %v1967 = vpop.permute.xlu0 %1966
        %1968 = vrot.lane.b32.xlu0 %v1747, 15
        %v1969 = vpop.permute.xlu0 %1968
        %1970 = vrot.lane.b32.xlu0 %v1748, 15
        %v1971 = vpop.permute.xlu0 %1970
        %v1972 = vsel %vm714, %v1969, %v1971
        %v1973 = vsel %vm714, %v1967, %v1969
        %v1974 = vsel %vm714, %v1965, %v1967
        %v1975 = vsel %vm714, %v1971, %v1965
        %v1976 = vmul.f32 %v1975, %v722
        %v1977 = vmul.f32 %v1974, %v726
        %v1978 = vmul.f32 %v1973, %v730
        %v1979 = vmul.f32 %v1972, %v734
        %1980 = vrot.lane.b32.xlu0 %v1745, 1
        %v1981 = vpop.permute.xlu0 %1980
        %1982 = vrot.lane.b32.xlu0 %v1746, 1
        %v1983 = vpop.permute.xlu0 %1982
        %1984 = vrot.lane.b32.xlu0 %v1747, 1
        %v1985 = vpop.permute.xlu0 %1984
        %1986 = vrot.lane.b32.xlu0 %v1748, 1
        %v1987 = vpop.permute.xlu0 %1986
        %v1988 = vsel %vm747, %v1985, %v1987
        %v1989 = vsel %vm747, %v1983, %v1985
        %v1990 = vsel %vm747, %v1981, %v1983
        %v1991 = vsel %vm747, %v1987, %v1981
        %v1992 = vmul.f32 %v1991, %v755
        %v1993 = vmul.f32 %v1990, %v759
        %v1994 = vmul.f32 %v1989, %v763
        %v1995 = vmul.f32 %v1988, %v767
        %1996 = vrot.lane.b32.xlu0 %v1745, 127
        %v1997 = vpop.permute.xlu0 %1996
        %1998 = vrot.lane.b32.xlu0 %v1746, 127
        %v1999 = vpop.permute.xlu0 %1998
        %2000 = vrot.lane.b32.xlu0 %v1747, 127
        %v2001 = vpop.permute.xlu0 %2000
        %2002 = vrot.lane.b32.xlu0 %v1748, 127
        %v2003 = vpop.permute.xlu0 %2002
        %v2004 = vsel %vm780, %v2001, %v2003
        %v2005 = vsel %vm780, %v1999, %v2001
        %v2006 = vsel %vm780, %v1997, %v1999
        %v2007 = vsel %vm780, %v2003, %v1997
        %v2008 = vmul.f32 %v2006, %v788
        %v2009 = vmul.f32 %v2005, %v792
        %v2010 = vmul.f32 %v2004, %v796
        %v2011 = vmul.f32 %v2007, %v800
        %2012 = vrot.lane.b32.xlu0 %v1745, 113
        %v2013 = vpop.permute.xlu0 %2012
        %2014 = vrot.lane.b32.xlu0 %v1746, 113
        %v2015 = vpop.permute.xlu0 %2014
        %2016 = vrot.lane.b32.xlu0 %v1747, 113
        %v2017 = vpop.permute.xlu0 %2016
        %2018 = vrot.lane.b32.xlu0 %v1748, 113
        %v2019 = vpop.permute.xlu0 %2018
        %v2020 = vsel %vm813, %v2017, %v2019
        %v2021 = vsel %vm813, %v2015, %v2017
        %v2022 = vsel %vm813, %v2013, %v2015
        %v2023 = vsel %vm813, %v2019, %v2013
        %v2024 = vmul.f32 %v2022, %v821
        %v2025 = vmul.f32 %v2021, %v825
        %v2026 = vmul.f32 %v2020, %v829
        %v2027 = vmul.f32 %v2023, %v833
        %2028 = vrot.lane.b32.xlu0 %v1745, 112
        %v2029 = vpop.permute.xlu0 %2028
        %2030 = vrot.lane.b32.xlu0 %v1746, 112
        %v2031 = vpop.permute.xlu0 %2030
        %2032 = vrot.lane.b32.xlu0 %v1747, 112
        %v2033 = vpop.permute.xlu0 %2032
        %2034 = vrot.lane.b32.xlu0 %v1748, 112
        %v2035 = vpop.permute.xlu0 %2034
        %v2036 = vsel %vm846, %v2033, %v2035
        %v2037 = vsel %vm846, %v2031, %v2033
        %v2038 = vsel %vm846, %v2029, %v2031
        %v2039 = vsel %vm846, %v2035, %v2029
        %v2040 = vmul.f32 %v2038, %v854
        %v2041 = vmul.f32 %v2037, %v858
        %v2042 = vmul.f32 %v2036, %v862
        %v2043 = vmul.f32 %v2039, %v866
        %2044 = vrot.lane.b32.xlu0 %v1745, 111
        %v2045 = vpop.permute.xlu0 %2044
        %2046 = vrot.lane.b32.xlu0 %v1746, 111
        %v2047 = vpop.permute.xlu0 %2046
        %2048 = vrot.lane.b32.xlu0 %v1747, 111
        %v2049 = vpop.permute.xlu0 %2048
        %2050 = vrot.lane.b32.xlu0 %v1748, 111
        %v2051 = vpop.permute.xlu0 %2050
        %v2052 = vsel %vm879, %v2049, %v2051
        %v2053 = vsel %vm879, %v2047, %v2049
        %v2054 = vsel %vm879, %v2045, %v2047
        %v2055 = vsel %vm879, %v2051, %v2045
        %v2056 = vmul.f32 %v2054, %v887
        %v2057 = vmul.f32 %v2053, %v891
        %v2058 = vmul.f32 %v2052, %v895
        %v2059 = vmul.f32 %v2055, %v899
        %v2060 = vld [vmem:[%s3] sm:$0xff]
        %v2061 = vld [vmem:[%s4] sm:$0xff]
        %2063 = vset.pattern.permute.xlu0 0
        %2064 = vperm.xlu0 %2063, %v2061
        %v2065 = vpop.permute.xlu0 %2064
        %v2068 = vsel %vm911, %v2060, 0
        %2070 = vmatprep.subr.mxu0 %v1945
        %2071 = vmatpush1.msra.mxu0 %v1944
        %2072 = vmatprep.subr.mxu0 %v1961
        %2073 = vmatpush1.msra.mxu0 %v1960
        %2074 = vmatprep.subr.mxu0 %v1977
        %2075 = vmatpush1.msra.mxu0 %v1976
        %2076 = vmatprep.subr.mxu0 %v1993
        %2077 = vmatpush1.msra.mxu0 %v1992
        %2078 = vmatprep.subr.mxu0 %v1746
        %2079 = vmatpush1.msra.mxu0 %v1745
        %2080 = vmatprep.subr.mxu0 %v2009
        %2081 = vmatpush1.msra.mxu0 %v2008
        %2082 = vmatprep.subr.mxu0 %v2025
        %2083 = vmatpush1.msra.mxu0 %v2024
        %2084 = vmatprep.subr.mxu0 %v2041
        %2085 = vmatpush1.msra.mxu0 %v2040
        %2086 = vmatprep.subr.mxu0 %v2057
        %2087 = vmatpush1.msra.mxu0 %v2056
        %2088 = vmatprep.subr.mxu0 0.0
        %2089 = vmatpush1.msra.mxu0 0.0
        %2090 = vmatprep.subr.mxu0 0.0
        %2091 = vmatpush1.msra.mxu0 0.0
        %2092 = vmatprep.subr.mxu0 0.0
        %2093 = vmatpush1.msra.mxu0 0.0
        %2094 = vmatprep.subr.mxu0 0.0
        %2095 = vmatpush1.msra.mxu0 0.0
        %2096 = vmatprep.subr.mxu0 0.0
        %2097 = vmatpush1.msra.mxu0 0.0
        %2098 = vmatprep.subr.mxu0 0.0
        %2099 = vmatpush1.msra.mxu0 0.0
        %2100 = vmatprep.subr.mxu0 0.0
        %2101 = vmatpush1.msra.mxu0 0.0
        %2102 = vmatprep.subr.mxu0 0.0
        %2103 = vmatpush1.msra.mxu0 0.0
        %2104 = vmatprep.subr.mxu0 0.0
        %2105 = vmatpush1.msra.mxu0 0.0
        %2106 = vmatprep.subr.mxu0 0.0
        %2107 = vmatpush1.msra.mxu0 0.0
        %2108 = vmatprep.subr.mxu0 0.0
        %2109 = vmatpush1.msra.mxu0 0.0
        %2110 = vmatprep.subr.mxu0 0.0
        %2111 = vmatpush1.msra.mxu0 0.0
        %2112 = vmatprep.subr.mxu0 0.0
        %2113 = vmatpush1.msra.mxu0 0.0
        %2114 = vmatprep.subr.mxu0 0.0
        %2115 = vmatpush1.msra.mxu0 0.0
        %2116 = vmatprep.subr.mxu0 0.0
        %2117 = vmatpush1.msra.mxu0 0.0
        %2118 = vmatprep.subr.mxu0 0.0
        %2119 = vmatpush1.msra.mxu0 0.0
        %2120 = vmatprep.subr.mxu0 0.0
        %2121 = vmatpush1.msra.mxu0 0.0
        %2122 = vmatprep.subr.mxu0 0.0
        %2123 = vmatpush1.msra.mxu0 0.0
        %2124 = vmatprep.subr.mxu0 0.0
        %2125 = vmatpush1.msra.mxu0 0.0
        %2126 = vmatprep.subr.mxu0 0.0
        %2127 = vmatpush1.msra.mxu0 0.0
        %2128 = vmatprep.subr.mxu0 0.0
        %2129 = vmatpush1.msra.mxu0 0.0
        %2130 = vmatprep.subr.mxu0 0.0
        %2131 = vmatpush1.msra.mxu0 0.0
        %2132 = vmatprep.subr.mxu0 0.0
        %2133 = vmatpush1.msra.mxu0 0.0
        %2134 = vmatprep.mubr.f32.mxu0 0.0
        %2135 = vmatmul.mubr.f32.gmra.mrb[0].mxu0 %v2068
        %v2136 = vpop.f32.mrb[0].mxu0
        %v2137 = vadd.f32 %v2065, %v2136
        %v2138 = vpop.f32.mrb[0].mxu0
        %v2139 = vadd.f32 %v2065, %v2138
        %2140 = vdwg.mxu0
        %2141 = vmatprep.subr.mxu0 %v1947
        %2142 = vmatpush1.msra.mxu0 %v1946
        %2143 = vmatprep.subr.mxu0 %v1963
        %2144 = vmatpush1.msra.mxu0 %v1962
        %2145 = vmatprep.subr.mxu0 %v1979
        %2146 = vmatpush1.msra.mxu0 %v1978
        %2147 = vmatprep.subr.mxu0 %v1995
        %2148 = vmatpush1.msra.mxu0 %v1994
        %2149 = vmatprep.subr.mxu0 %v1748
        %2150 = vmatpush1.msra.mxu0 %v1747
        %2151 = vmatprep.subr.mxu0 %v2011
        %2152 = vmatpush1.msra.mxu0 %v2010
        %2153 = vmatprep.subr.mxu0 %v2027
        %2154 = vmatpush1.msra.mxu0 %v2026
        %2155 = vmatprep.subr.mxu0 %v2043
        %2156 = vmatpush1.msra.mxu0 %v2042
        %2157 = vmatprep.subr.mxu0 %v2059
        %2158 = vmatpush1.msra.mxu0 %v2058
        %2159 = vmatprep.subr.mxu0 0.0
        %2160 = vmatpush1.msra.mxu0 0.0
        %2161 = vmatprep.subr.mxu0 0.0
        %2162 = vmatpush1.msra.mxu0 0.0
        %2163 = vmatprep.subr.mxu0 0.0
        %2164 = vmatpush1.msra.mxu0 0.0
        %2165 = vmatprep.subr.mxu0 0.0
        %2166 = vmatpush1.msra.mxu0 0.0
        %2167 = vmatprep.subr.mxu0 0.0
        %2168 = vmatpush1.msra.mxu0 0.0
        %2169 = vmatprep.subr.mxu0 0.0
        %2170 = vmatpush1.msra.mxu0 0.0
        %2171 = vmatprep.subr.mxu0 0.0
        %2172 = vmatpush1.msra.mxu0 0.0
        %2173 = vmatprep.subr.mxu0 0.0
        %2174 = vmatpush1.msra.mxu0 0.0
        %2175 = vmatprep.subr.mxu0 0.0
        %2176 = vmatpush1.msra.mxu0 0.0
        %2177 = vmatprep.subr.mxu0 0.0
        %2178 = vmatpush1.msra.mxu0 0.0
        %2179 = vmatprep.subr.mxu0 0.0
        %2180 = vmatpush1.msra.mxu0 0.0
        %2181 = vmatprep.subr.mxu0 0.0
        %2182 = vmatpush1.msra.mxu0 0.0
        %2183 = vmatprep.subr.mxu0 0.0
        %2184 = vmatpush1.msra.mxu0 0.0
        %2185 = vmatprep.subr.mxu0 0.0
        %2186 = vmatpush1.msra.mxu0 0.0
        %2187 = vmatprep.subr.mxu0 0.0
        %2188 = vmatpush1.msra.mxu0 0.0
        %2189 = vmatprep.subr.mxu0 0.0
        %2190 = vmatpush1.msra.mxu0 0.0
        %2191 = vmatprep.subr.mxu0 0.0
        %2192 = vmatpush1.msra.mxu0 0.0
        %2193 = vmatprep.subr.mxu0 0.0
        %2194 = vmatpush1.msra.mxu0 0.0
        %2195 = vmatprep.subr.mxu0 0.0
        %2196 = vmatpush1.msra.mxu0 0.0
        %2197 = vmatprep.subr.mxu0 0.0
        %2198 = vmatpush1.msra.mxu0 0.0
        %2199 = vmatprep.subr.mxu0 0.0
        %2200 = vmatpush1.msra.mxu0 0.0
        %2201 = vmatprep.subr.mxu0 0.0
        %2202 = vmatpush1.msra.mxu0 0.0
        %2203 = vmatprep.subr.mxu0 0.0
        %2204 = vmatpush1.msra.mxu0 0.0
        %2205 = vmatprep.mubr.f32.mxu0 0.0
        %2206 = vmatmul.mubr.f32.gmra.mrb[0].mxu0 %v2068
        %v2207 = vpop.f32.mrb[0].mxu0
        %v2208 = vadd.f32 %v2065, %v2207
        %v2209 = vpop.f32.mrb[0].mxu0
        %v2210 = vadd.f32 %v2065, %v2209
        %2211 = vdwg.mxu0
        %v2212 = vmul.f32 %v2137, 0.2
        %v2213 = vmul.f32 %v2139, 0.2
        %v2214 = vmul.f32 %v2208, 0.2
        %v2215 = vmul.f32 %v2210, 0.2
        %v2216 = vmax.f32 %v2137, %v2212
        %v2217 = vmax.f32 %v2139, %v2213
        %v2218 = vmax.f32 %v2208, %v2214
        %v2219 = vmax.f32 %v2210, %v2215
        %v2220 = vld [vmem:[%s12] sm:$0xff]
        %v2221 = vld [vmem:[%s12 + $0x8] sm:$0xff]
        %v2222 = vld [vmem:[%s12 + $0x10] sm:$0xff]
        %v2223 = vld [vmem:[%s12 + $0x18] sm:$0xff]
        %v2224 = vld [vmem:[%s12 + $0x20] sm:$0xff]
        %v2225 = vld [vmem:[%s12 + $0x28] sm:$0xff]
        %v2226 = vld [vmem:[%s12 + $0x30] sm:$0xff]
        %v2227 = vld [vmem:[%s12 + $0x38] sm:$0xff]
        %v2228 = vld [vmem:[%s12 + $0x40] sm:$0xff]
        %v2229 = vld [vmem:[%s12 + $0x48] sm:$0xff]
        %v2230 = vld [vmem:[%s12 + $0x50] sm:$0xff]
        %v2231 = vld [vmem:[%s12 + $0x58] sm:$0xff]
        %v2232 = vld [vmem:[%s12 + $0x60] sm:$0xff]
        %v2233 = vld [vmem:[%s12 + $0x68] sm:$0xff]
        %v2234 = vld [vmem:[%s12 + $0x70] sm:$0xff]
        %v2235 = vld [vmem:[%s12 + $0x78] sm:$0xff]
        %v2236 = vld [vmem:[%s12 + $0x80] sm:$0xff]
        %v2237 = vld [vmem:[%s12 + $0x88] sm:$0xff]
        %v2238 = vld [vmem:[%s12 + $0x90] sm:$0xff]
        %v2239 = vld [vmem:[%s12 + $0x98] sm:$0xff]
        %v2240 = vld [vmem:[%s12 + $0xa0] sm:$0xff]
        %v2241 = vld [vmem:[%s12 + $0xa8] sm:$0xff]
        %v2242 = vld [vmem:[%s12 + $0xb0] sm:$0xff]
        %v2243 = vld [vmem:[%s12 + $0xb8] sm:$0xff]
        %v2244 = vld [vmem:[%s12 + $0xc0] sm:$0xff]
        %v2245 = vld [vmem:[%s12 + $0xc8] sm:$0xff]
        %v2246 = vld [vmem:[%s12 + $0xd0] sm:$0xff]
        %v2247 = vld [vmem:[%s12 + $0xd8] sm:$0xff]
        %v2248 = vld [vmem:[%s12 + $0xe0] sm:$0xff]
        %v2249 = vld [vmem:[%s12 + $0xe8] sm:$0xff]
        %v2250 = vld [vmem:[%s12 + $0xf0] sm:$0xff]
        %v2251 = vld [vmem:[%s12 + $0xf8] sm:$0xff]
        %v2252 = vld [vmem:[%s12 + $0x100] sm:$0xff]
        %v2253 = vld [vmem:[%s12 + $0x108] sm:$0xff]
        %v2254 = vld [vmem:[%s12 + $0x110] sm:$0xff]
        %v2255 = vld [vmem:[%s12 + $0x118] sm:$0xff]
        %v2256 = vld [vmem:[%s12 + $0x120] sm:$0xff]
        %v2257 = vld [vmem:[%s12 + $0x128] sm:$0xff]
        %v2258 = vld [vmem:[%s12 + $0x130] sm:$0xff]
        %v2259 = vld [vmem:[%s12 + $0x138] sm:$0xff]
        %v2260 = vld [vmem:[%s12 + $0x140] sm:$0xff]
        %v2261 = vld [vmem:[%s12 + $0x148] sm:$0xff]
        %v2262 = vld [vmem:[%s12 + $0x150] sm:$0xff]
        %v2263 = vld [vmem:[%s12 + $0x158] sm:$0xff]
        %v2264 = vld [vmem:[%s12 + $0x160] sm:$0xff]
        %v2265 = vld [vmem:[%s12 + $0x168] sm:$0xff]
        %v2266 = vld [vmem:[%s12 + $0x170] sm:$0xff]
        %v2267 = vld [vmem:[%s12 + $0x178] sm:$0xff]
        %v2268 = vld [vmem:[%s12 + $0x180] sm:$0xff]
        %v2269 = vld [vmem:[%s12 + $0x188] sm:$0xff]
        %v2270 = vld [vmem:[%s12 + $0x190] sm:$0xff]
        %v2271 = vld [vmem:[%s12 + $0x198] sm:$0xff]
        %v2272 = vld [vmem:[%s12 + $0x1a0] sm:$0xff]
        %v2273 = vld [vmem:[%s12 + $0x1a8] sm:$0xff]
        %v2274 = vld [vmem:[%s12 + $0x1b0] sm:$0xff]
        %v2275 = vld [vmem:[%s12 + $0x1b8] sm:$0xff]
        %v2276 = vld [vmem:[%s12 + $0x1c0] sm:$0xff]
        %v2277 = vld [vmem:[%s12 + $0x1c8] sm:$0xff]
        %v2278 = vld [vmem:[%s12 + $0x1d0] sm:$0xff]
        %v2279 = vld [vmem:[%s12 + $0x1d8] sm:$0xff]
        %v2280 = vld [vmem:[%s12 + $0x1e0] sm:$0xff]
        %v2281 = vld [vmem:[%s12 + $0x1e8] sm:$0xff]
        %v2282 = vld [vmem:[%s12 + $0x1f0] sm:$0xff]
        %v2283 = vld [vmem:[%s12 + $0x1f8] sm:$0xff]
        %2284 = vmatprep.subr.mxu0 0.0
        %2285 = vmatpush1.msra.mxu0 %v2220
        %2286 = vmatprep.subr.mxu0 0.0
        %2287 = vmatpush1.msra.mxu0 %v2221
        %2288 = vmatprep.subr.mxu0 0.0
        %2289 = vmatpush1.msra.mxu0 %v2222
        %2290 = vmatprep.subr.mxu0 0.0
        %2291 = vmatpush1.msra.mxu0 %v2223
        %2292 = vmatprep.subr.mxu0 0.0
        %2293 = vmatpush1.msra.mxu0 %v2224
        %2294 = vmatprep.subr.mxu0 0.0
        %2295 = vmatpush1.msra.mxu0 %v2225
        %2296 = vmatprep.subr.mxu0 0.0
        %2297 = vmatpush1.msra.mxu0 %v2226
        %2298 = vmatprep.subr.mxu0 0.0
        %2299 = vmatpush1.msra.mxu0 %v2227
        %2300 = vmatprep.subr.mxu0 0.0
        %2301 = vmatpush1.msra.mxu0 %v2228
        %2302 = vmatprep.subr.mxu0 0.0
        %2303 = vmatpush1.msra.mxu0 %v2229
        %2304 = vmatprep.subr.mxu0 0.0
        %2305 = vmatpush1.msra.mxu0 %v2230
        %2306 = vmatprep.subr.mxu0 0.0
        %2307 = vmatpush1.msra.mxu0 %v2231
        %2308 = vmatprep.subr.mxu0 0.0
        %2309 = vmatpush1.msra.mxu0 %v2232
        %2310 = vmatprep.subr.mxu0 0.0
        %2311 = vmatpush1.msra.mxu0 %v2233
        %2312 = vmatprep.subr.mxu0 0.0
        %2313 = vmatpush1.msra.mxu0 %v2234
        %2314 = vmatprep.subr.mxu0 0.0
        %2315 = vmatpush1.msra.mxu0 %v2235
        %2316 = vmatprep.subr.mxu0 0.0
        %2317 = vmatpush1.msra.mxu0 %v2236
        %2318 = vmatprep.subr.mxu0 0.0
        %2319 = vmatpush1.msra.mxu0 %v2237
        %2320 = vmatprep.subr.mxu0 0.0
        %2321 = vmatpush1.msra.mxu0 %v2238
        %2322 = vmatprep.subr.mxu0 0.0
        %2323 = vmatpush1.msra.mxu0 %v2239
        %2324 = vmatprep.subr.mxu0 0.0
        %2325 = vmatpush1.msra.mxu0 %v2240
        %2326 = vmatprep.subr.mxu0 0.0
        %2327 = vmatpush1.msra.mxu0 %v2241
        %2328 = vmatprep.subr.mxu0 0.0
        %2329 = vmatpush1.msra.mxu0 %v2242
        %2330 = vmatprep.subr.mxu0 0.0
        %2331 = vmatpush1.msra.mxu0 %v2243
        %2332 = vmatprep.subr.mxu0 0.0
        %2333 = vmatpush1.msra.mxu0 %v2244
        %2334 = vmatprep.subr.mxu0 0.0
        %2335 = vmatpush1.msra.mxu0 %v2245
        %2336 = vmatprep.subr.mxu0 0.0
        %2337 = vmatpush1.msra.mxu0 %v2246
        %2338 = vmatprep.subr.mxu0 0.0
        %2339 = vmatpush1.msra.mxu0 %v2247
        %2340 = vmatprep.subr.mxu0 0.0
        %2341 = vmatpush1.msra.mxu0 %v2248
        %2342 = vmatprep.subr.mxu0 0.0
        %2343 = vmatpush1.msra.mxu0 %v2249
        %2344 = vmatprep.subr.mxu0 0.0
        %2345 = vmatpush1.msra.mxu0 %v2250
        %2346 = vmatprep.subr.mxu0 0.0
        %2347 = vmatpush1.msra.mxu0 %v2251
        %2348 = vmatprep.mubr.f32.mxu0 %v2217
        %2349 = vmatmul.mubr.f32.gmra.mrb[0].mxu0 %v2216
        %v2350 = vpop.f32.mrb[0].mxu0
        %v2351 = vadd.f32 0.0, %v2350
        %v2352 = vpop.f32.mrb[0].mxu0
        %2353 = vdwg.mxu0
        %2354 = vmatprep.subr.mxu0 0.0
        %2355 = vmatpush1.msra.mxu0 %v2252
        %2356 = vmatprep.subr.mxu0 0.0
        %2357 = vmatpush1.msra.mxu0 %v2253
        %2358 = vmatprep.subr.mxu0 0.0
        %2359 = vmatpush1.msra.mxu0 %v2254
        %2360 = vmatprep.subr.mxu0 0.0
        %2361 = vmatpush1.msra.mxu0 %v2255
        %2362 = vmatprep.subr.mxu0 0.0
        %2363 = vmatpush1.msra.mxu0 %v2256
        %2364 = vmatprep.subr.mxu0 0.0
        %2365 = vmatpush1.msra.mxu0 %v2257
        %2366 = vmatprep.subr.mxu0 0.0
        %2367 = vmatpush1.msra.mxu0 %v2258
        %2368 = vmatprep.subr.mxu0 0.0
        %2369 = vmatpush1.msra.mxu0 %v2259
        %2370 = vmatprep.subr.mxu0 0.0
        %2371 = vmatpush1.msra.mxu0 %v2260
        %2372 = vmatprep.subr.mxu0 0.0
        %2373 = vmatpush1.msra.mxu0 %v2261
        %2374 = vmatprep.subr.mxu0 0.0
        %2375 = vmatpush1.msra.mxu0 %v2262
        %2376 = vmatprep.subr.mxu0 0.0
        %2377 = vmatpush1.msra.mxu0 %v2263
        %2378 = vmatprep.subr.mxu0 0.0
        %2379 = vmatpush1.msra.mxu0 %v2264
        %2380 = vmatprep.subr.mxu0 0.0
        %2381 = vmatpush1.msra.mxu0 %v2265
        %2382 = vmatprep.subr.mxu0 0.0
        %2383 = vmatpush1.msra.mxu0 %v2266
        %2384 = vmatprep.subr.mxu0 0.0
        %2385 = vmatpush1.msra.mxu0 %v2267
        %2386 = vmatprep.subr.mxu0 0.0
        %2387 = vmatpush1.msra.mxu0 %v2268
        %2388 = vmatprep.subr.mxu0 0.0
        %2389 = vmatpush1.msra.mxu0 %v2269
        %2390 = vmatprep.subr.mxu0 0.0
        %2391 = vmatpush1.msra.mxu0 %v2270
        %2392 = vmatprep.subr.mxu0 0.0
        %2393 = vmatpush1.msra.mxu0 %v2271
        %2394 = vmatprep.subr.mxu0 0.0
        %2395 = vmatpush1.msra.mxu0 %v2272
        %2396 = vmatprep.subr.mxu0 0.0
        %2397 = vmatpush1.msra.mxu0 %v2273
        %2398 = vmatprep.subr.mxu0 0.0
        %2399 = vmatpush1.msra.mxu0 %v2274
        %2400 = vmatprep.subr.mxu0 0.0
        %2401 = vmatpush1.msra.mxu0 %v2275
        %2402 = vmatprep.subr.mxu0 0.0
        %2403 = vmatpush1.msra.mxu0 %v2276
        %2404 = vmatprep.subr.mxu0 0.0
        %2405 = vmatpush1.msra.mxu0 %v2277
        %2406 = vmatprep.subr.mxu0 0.0
        %2407 = vmatpush1.msra.mxu0 %v2278
        %2408 = vmatprep.subr.mxu0 0.0
        %2409 = vmatpush1.msra.mxu0 %v2279
        %2410 = vmatprep.subr.mxu0 0.0
        %2411 = vmatpush1.msra.mxu0 %v2280
        %2412 = vmatprep.subr.mxu0 0.0
        %2413 = vmatpush1.msra.mxu0 %v2281
        %2414 = vmatprep.subr.mxu0 0.0
        %2415 = vmatpush1.msra.mxu0 %v2282
        %2416 = vmatprep.subr.mxu0 0.0
        %2417 = vmatpush1.msra.mxu0 %v2283
        %2418 = vmatprep.mubr.f32.mxu0 %v2219
        %2419 = vmatmul.mubr.f32.gmra.mrb[0].mxu0 %v2218
        %v2420 = vpop.f32.mrb[0].mxu0
        %v2421 = vadd.f32 %v2351, %v2420
        %v2422 = vpop.f32.mrb[0].mxu0
        %2423 = vdwg.mxu0
        %v2424 = vld [vmem:[%s15] sm:$0xff]
        %v2425 = vld [vmem:[%s15 + $0x8] sm:$0xff]
        %v2426 = vld [vmem:[%s15 + $0x10] sm:$0xff]
        %v2427 = vld [vmem:[%s15 + $0x18] sm:$0xff]
        %v2428 = vld [vmem:[%s15 + $0x20] sm:$0xff]
        %v2429 = vld [vmem:[%s15 + $0x28] sm:$0xff]
        %v2430 = vld [vmem:[%s15 + $0x30] sm:$0xff]
        %v2431 = vld [vmem:[%s15 + $0x38] sm:$0xff]
        %v2432 = vld [vmem:[%s15 + $0x40] sm:$0xff]
        %v2433 = vld [vmem:[%s15 + $0x48] sm:$0xff]
        %v2434 = vld [vmem:[%s15 + $0x50] sm:$0xff]
        %v2435 = vld [vmem:[%s15 + $0x58] sm:$0xff]
        %v2436 = vld [vmem:[%s15 + $0x60] sm:$0xff]
        %v2437 = vld [vmem:[%s15 + $0x68] sm:$0xff]
        %v2438 = vld [vmem:[%s15 + $0x70] sm:$0xff]
        %v2439 = vld [vmem:[%s15 + $0x78] sm:$0xff]
        %v2440 = vld [vmem:[%s16] sm:$0x3]
        %2441 = vmatprep.subr.mxu0 0.0
        %2442 = vmatpush1.msra.mxu0 %v2424
        %2443 = vmatprep.subr.mxu0 0.0
        %2444 = vmatpush1.msra.mxu0 %v2425
        %2445 = vmatprep.subr.mxu0 0.0
        %2446 = vmatpush1.msra.mxu0 %v2426
        %2447 = vmatprep.subr.mxu0 0.0
        %2448 = vmatpush1.msra.mxu0 %v2427
        %2449 = vmatprep.subr.mxu0 0.0
        %2450 = vmatpush1.msra.mxu0 %v2428
        %2451 = vmatprep.subr.mxu0 0.0
        %2452 = vmatpush1.msra.mxu0 %v2429
        %2453 = vmatprep.subr.mxu0 0.0
        %2454 = vmatpush1.msra.mxu0 %v2430
        %2455 = vmatprep.subr.mxu0 0.0
        %2456 = vmatpush1.msra.mxu0 %v2431
        %2457 = vmatprep.subr.mxu0 0.0
        %2458 = vmatpush1.msra.mxu0 %v2432
        %2459 = vmatprep.subr.mxu0 0.0
        %2460 = vmatpush1.msra.mxu0 %v2433
        %2461 = vmatprep.subr.mxu0 0.0
        %2462 = vmatpush1.msra.mxu0 %v2434
        %2463 = vmatprep.subr.mxu0 0.0
        %2464 = vmatpush1.msra.mxu0 %v2435
        %2465 = vmatprep.subr.mxu0 0.0
        %2466 = vmatpush1.msra.mxu0 %v2436
        %2467 = vmatprep.subr.mxu0 0.0
        %2468 = vmatpush1.msra.mxu0 %v2437
        %2469 = vmatprep.subr.mxu0 0.0
        %2470 = vmatpush1.msra.mxu0 %v2438
        %2471 = vmatprep.subr.mxu0 0.0
        %2472 = vmatpush1.msra.mxu0 %v2439
        %2473 = vmatprep.subr.mxu0 0.0
        %2474 = vmatpush1.msra.mxu0 0.0
        %2475 = vmatprep.subr.mxu0 0.0
        %2476 = vmatpush1.msra.mxu0 0.0
        %2477 = vmatprep.subr.mxu0 0.0
        %2478 = vmatpush1.msra.mxu0 0.0
        %2479 = vmatprep.subr.mxu0 0.0
        %2480 = vmatpush1.msra.mxu0 0.0
        %2481 = vmatprep.subr.mxu0 0.0
        %2482 = vmatpush1.msra.mxu0 0.0
        %2483 = vmatprep.subr.mxu0 0.0
        %2484 = vmatpush1.msra.mxu0 0.0
        %2485 = vmatprep.subr.mxu0 0.0
        %2486 = vmatpush1.msra.mxu0 0.0
        %2487 = vmatprep.subr.mxu0 0.0
        %2488 = vmatpush1.msra.mxu0 0.0
        %2489 = vmatprep.subr.mxu0 0.0
        %2490 = vmatpush1.msra.mxu0 0.0
        %2491 = vmatprep.subr.mxu0 0.0
        %2492 = vmatpush1.msra.mxu0 0.0
        %2493 = vmatprep.subr.mxu0 0.0
        %2494 = vmatpush1.msra.mxu0 0.0
        %2495 = vmatprep.subr.mxu0 0.0
        %2496 = vmatpush1.msra.mxu0 0.0
        %2497 = vmatprep.subr.mxu0 0.0
        %2498 = vmatpush1.msra.mxu0 0.0
        %2499 = vmatprep.subr.mxu0 0.0
        %2500 = vmatpush1.msra.mxu0 0.0
        %2501 = vmatprep.subr.mxu0 0.0
        %2502 = vmatpush1.msra.mxu0 0.0
        %2503 = vmatprep.subr.mxu0 0.0
        %2504 = vmatpush1.msra.mxu0 0.0
        %2505 = vmatprep.mubr.f32.mxu0 0.0
        %2506 = vmatmul.mubr.f32.gmra.mrb[0].mxu0 %v2421
        %v2507 = vpop.f32.mrb[0].mxu0
        %v2508 = vadd.f32 0.0, %v2507
        %v2509 = vpop.f32.mrb[0].mxu0
        %2510 = vdwg.mxu0
        %v2512 = vsel %vm1288, %v2508, 0
        %v2515 = vsel %vm1292, %v2440, 0
        %2517 = vmatprep.subr.mxu0 0.0
        %2518 = vmatpush1.msra.mxu0 %v2515
        %2519 = vmatprep.subr.mxu0 0.0
        %2520 = vmatpush1.msra.mxu0 0.0
        %2521 = vmatprep.subr.mxu0 0.0
        %2522 = vmatpush1.msra.mxu0 0.0
        %2523 = vmatprep.subr.mxu0 0.0
        %2524 = vmatpush1.msra.mxu0 0.0
        %2525 = vmatprep.subr.mxu0 0.0
        %2526 = vmatpush1.msra.mxu0 0.0
        %2527 = vmatprep.subr.mxu0 0.0
        %2528 = vmatpush1.msra.mxu0 0.0
        %2529 = vmatprep.subr.mxu0 0.0
        %2530 = vmatpush1.msra.mxu0 0.0
        %2531 = vmatprep.subr.mxu0 0.0
        %2532 = vmatpush1.msra.mxu0 0.0
        %2533 = vmatprep.subr.mxu0 0.0
        %2534 = vmatpush1.msra.mxu0 0.0
        %2535 = vmatprep.subr.mxu0 0.0
        %2536 = vmatpush1.msra.mxu0 0.0
        %2537 = vmatprep.subr.mxu0 0.0
        %2538 = vmatpush1.msra.mxu0 0.0
        %2539 = vmatprep.subr.mxu0 0.0
        %2540 = vmatpush1.msra.mxu0 0.0
        %2541 = vmatprep.subr.mxu0 0.0
        %2542 = vmatpush1.msra.mxu0 0.0
        %2543 = vmatprep.subr.mxu0 0.0
        %2544 = vmatpush1.msra.mxu0 0.0
        %2545 = vmatprep.subr.mxu0 0.0
        %2546 = vmatpush1.msra.mxu0 0.0
        %2547 = vmatprep.subr.mxu0 0.0
        %2548 = vmatpush1.msra.mxu0 0.0
        %2549 = vmatprep.subr.mxu0 0.0
        %2550 = vmatpush1.msra.mxu0 0.0
        %2551 = vmatprep.subr.mxu0 0.0
        %2552 = vmatpush1.msra.mxu0 0.0
        %2553 = vmatprep.subr.mxu0 0.0
        %2554 = vmatpush1.msra.mxu0 0.0
        %2555 = vmatprep.subr.mxu0 0.0
        %2556 = vmatpush1.msra.mxu0 0.0
        %2557 = vmatprep.subr.mxu0 0.0
        %2558 = vmatpush1.msra.mxu0 0.0
        %2559 = vmatprep.subr.mxu0 0.0
        %2560 = vmatpush1.msra.mxu0 0.0
        %2561 = vmatprep.subr.mxu0 0.0
        %2562 = vmatpush1.msra.mxu0 0.0
        %2563 = vmatprep.subr.mxu0 0.0
        %2564 = vmatpush1.msra.mxu0 0.0
        %2565 = vmatprep.subr.mxu0 0.0
        %2566 = vmatpush1.msra.mxu0 0.0
        %2567 = vmatprep.subr.mxu0 0.0
        %2568 = vmatpush1.msra.mxu0 0.0
        %2569 = vmatprep.subr.mxu0 0.0
        %2570 = vmatpush1.msra.mxu0 0.0
        %2571 = vmatprep.subr.mxu0 0.0
        %2572 = vmatpush1.msra.mxu0 0.0
        %2573 = vmatprep.subr.mxu0 0.0
        %2574 = vmatpush1.msra.mxu0 0.0
        %2575 = vmatprep.subr.mxu0 0.0
        %2576 = vmatpush1.msra.mxu0 0.0
        %2577 = vmatprep.subr.mxu0 0.0
        %2578 = vmatpush1.msra.mxu0 0.0
        %2579 = vmatprep.subr.mxu0 0.0
        %2580 = vmatpush1.msra.mxu0 0.0
        %2581 = vmatprep.mubr.f32.mxu0 0.0
        %2582 = vmatmul.mubr.f32.gmra.mrb[0].mxu0 %v2512
        %v2583 = vpop.f32.mrb[0].mxu0
        %v2584 = vadd.f32 0.0, %v2583
        %v2585 = vpop.f32.mrb[0].mxu0
        %2586 = vdwg.mxu0
        %v2587 = vsub.f32 %v2421, %v2584
        %v2588 = vmul.f32 %v2587, %v2587
        %2589 = vmatprep.subr.mxu0 0.0
        %2590 = vmatpush1.msra.mxu0 %v2424
        %2591 = vmatprep.subr.mxu0 0.0
        %2592 = vmatpush1.msra.mxu0 %v2425
        %2593 = vmatprep.subr.mxu0 0.0
        %2594 = vmatpush1.msra.mxu0 %v2426
        %2595 = vmatprep.subr.mxu0 0.0
        %2596 = vmatpush1.msra.mxu0 %v2427
        %2597 = vmatprep.subr.mxu0 0.0
        %2598 = vmatpush1.msra.mxu0 %v2428
        %2599 = vmatprep.subr.mxu0 0.0
        %2600 = vmatpush1.msra.mxu0 %v2429
        %2601 = vmatprep.subr.mxu0 0.0
        %2602 = vmatpush1.msra.mxu0 %v2430
        %2603 = vmatprep.subr.mxu0 0.0
        %2604 = vmatpush1.msra.mxu0 %v2431
        %2605 = vmatprep.subr.mxu0 0.0
        %2606 = vmatpush1.msra.mxu0 %v2432
        %2607 = vmatprep.subr.mxu0 0.0
        %2608 = vmatpush1.msra.mxu0 %v2433
        %2609 = vmatprep.subr.mxu0 0.0
        %2610 = vmatpush1.msra.mxu0 %v2434
        %2611 = vmatprep.subr.mxu0 0.0
        %2612 = vmatpush1.msra.mxu0 %v2435
        %2613 = vmatprep.subr.mxu0 0.0
        %2614 = vmatpush1.msra.mxu0 %v2436
        %2615 = vmatprep.subr.mxu0 0.0
        %2616 = vmatpush1.msra.mxu0 %v2437
        %2617 = vmatprep.subr.mxu0 0.0
        %2618 = vmatpush1.msra.mxu0 %v2438
        %2619 = vmatprep.subr.mxu0 0.0
        %2620 = vmatpush1.msra.mxu0 %v2439
        %2621 = vmatprep.subr.mxu0 0.0
        %2622 = vmatpush1.msra.mxu0 0.0
        %2623 = vmatprep.subr.mxu0 0.0
        %2624 = vmatpush1.msra.mxu0 0.0
        %2625 = vmatprep.subr.mxu0 0.0
        %2626 = vmatpush1.msra.mxu0 0.0
        %2627 = vmatprep.subr.mxu0 0.0
        %2628 = vmatpush1.msra.mxu0 0.0
        %2629 = vmatprep.subr.mxu0 0.0
        %2630 = vmatpush1.msra.mxu0 0.0
        %2631 = vmatprep.subr.mxu0 0.0
        %2632 = vmatpush1.msra.mxu0 0.0
        %2633 = vmatprep.subr.mxu0 0.0
        %2634 = vmatpush1.msra.mxu0 0.0
        %2635 = vmatprep.subr.mxu0 0.0
        %2636 = vmatpush1.msra.mxu0 0.0
        %2637 = vmatprep.subr.mxu0 0.0
        %2638 = vmatpush1.msra.mxu0 0.0
        %2639 = vmatprep.subr.mxu0 0.0
        %2640 = vmatpush1.msra.mxu0 0.0
        %2641 = vmatprep.subr.mxu0 0.0
        %2642 = vmatpush1.msra.mxu0 0.0
        %2643 = vmatprep.subr.mxu0 0.0
        %2644 = vmatpush1.msra.mxu0 0.0
        %2645 = vmatprep.subr.mxu0 0.0
        %2646 = vmatpush1.msra.mxu0 0.0
        %2647 = vmatprep.subr.mxu0 0.0
        %2648 = vmatpush1.msra.mxu0 0.0
        %2649 = vmatprep.subr.mxu0 0.0
        %2650 = vmatpush1.msra.mxu0 0.0
        %2651 = vmatprep.subr.mxu0 0.0
        %2652 = vmatpush1.msra.mxu0 0.0
        %2653 = vmatprep.mubr.f32.mxu0 0.0
        %2654 = vmatmul.mubr.f32.gmra.mrb[0].mxu0 %v2588
        %v2655 = vpop.f32.mrb[0].mxu0
        %v2656 = vadd.f32 1e-08, %v2655
        %v2657 = vpop.f32.mrb[0].mxu0
        %2658 = vdwg.mxu0
        %v2659 = vrsqrt.pop %v2656
        %v2660 = vmul.f32 %v2656, %v2659
        %vm2661 = vcmp.eq.f32.partialorder %v2656, inf
        %v2662 = vsel %vm2661, %v2656, %v2660
        %vm2663 = vcmp.eq.f32.partialorder %v2656, 0.0
        %v2664 = vand.u32 %v2656, 2147483648
        %v2665 = vsel %vm2663, %v2664, %v2662
        %v2666 = vrcp.pop %v2665
        %v2667 = vmul.f32 1.0, %v2666
        %v2669 = vsel %vm1288, %v2667, 0
        %2671 = vmatprep.subr.mxu0 0.0
        %2672 = vmatpush1.msra.mxu0 %v2515
        %2673 = vmatprep.subr.mxu0 0.0
        %2674 = vmatpush1.msra.mxu0 0.0
        %2675 = vmatprep.subr.mxu0 0.0
        %2676 = vmatpush1.msra.mxu0 0.0
        %2677 = vmatprep.subr.mxu0 0.0
        %2678 = vmatpush1.msra.mxu0 0.0
        %2679 = vmatprep.subr.mxu0 0.0
        %2680 = vmatpush1.msra.mxu0 0.0
        %2681 = vmatprep.subr.mxu0 0.0
        %2682 = vmatpush1.msra.mxu0 0.0
        %2683 = vmatprep.subr.mxu0 0.0
        %2684 = vmatpush1.msra.mxu0 0.0
        %2685 = vmatprep.subr.mxu0 0.0
        %2686 = vmatpush1.msra.mxu0 0.0
        %2687 = vmatprep.subr.mxu0 0.0
        %2688 = vmatpush1.msra.mxu0 0.0
        %2689 = vmatprep.subr.mxu0 0.0
        %2690 = vmatpush1.msra.mxu0 0.0
        %2691 = vmatprep.subr.mxu0 0.0
        %2692 = vmatpush1.msra.mxu0 0.0
        %2693 = vmatprep.subr.mxu0 0.0
        %2694 = vmatpush1.msra.mxu0 0.0
        %2695 = vmatprep.subr.mxu0 0.0
        %2696 = vmatpush1.msra.mxu0 0.0
        %2697 = vmatprep.subr.mxu0 0.0
        %2698 = vmatpush1.msra.mxu0 0.0
        %2699 = vmatprep.subr.mxu0 0.0
        %2700 = vmatpush1.msra.mxu0 0.0
        %2701 = vmatprep.subr.mxu0 0.0
        %2702 = vmatpush1.msra.mxu0 0.0
        %2703 = vmatprep.subr.mxu0 0.0
        %2704 = vmatpush1.msra.mxu0 0.0
        %2705 = vmatprep.subr.mxu0 0.0
        %2706 = vmatpush1.msra.mxu0 0.0
        %2707 = vmatprep.subr.mxu0 0.0
        %2708 = vmatpush1.msra.mxu0 0.0
        %2709 = vmatprep.subr.mxu0 0.0
        %2710 = vmatpush1.msra.mxu0 0.0
        %2711 = vmatprep.subr.mxu0 0.0
        %2712 = vmatpush1.msra.mxu0 0.0
        %2713 = vmatprep.subr.mxu0 0.0
        %2714 = vmatpush1.msra.mxu0 0.0
        %2715 = vmatprep.subr.mxu0 0.0
        %2716 = vmatpush1.msra.mxu0 0.0
        %2717 = vmatprep.subr.mxu0 0.0
        %2718 = vmatpush1.msra.mxu0 0.0
        %2719 = vmatprep.subr.mxu0 0.0
        %2720 = vmatpush1.msra.mxu0 0.0
        %2721 = vmatprep.subr.mxu0 0.0
        %2722 = vmatpush1.msra.mxu0 0.0
        %2723 = vmatprep.subr.mxu0 0.0
        %2724 = vmatpush1.msra.mxu0 0.0
        %2725 = vmatprep.subr.mxu0 0.0
        %2726 = vmatpush1.msra.mxu0 0.0
        %2727 = vmatprep.subr.mxu0 0.0
        %2728 = vmatpush1.msra.mxu0 0.0
        %2729 = vmatprep.subr.mxu0 0.0
        %2730 = vmatpush1.msra.mxu0 0.0
        %2731 = vmatprep.subr.mxu0 0.0
        %2732 = vmatpush1.msra.mxu0 0.0
        %2733 = vmatprep.subr.mxu0 0.0
        %2734 = vmatpush1.msra.mxu0 0.0
        %2735 = vmatprep.mubr.f32.mxu0 0.0
        %2736 = vmatmul.mubr.f32.gmra.mrb[0].mxu0 %v2669
        %v2737 = vpop.f32.mrb[0].mxu0
        %v2738 = vadd.f32 0.0, %v2737
        %v2739 = vpop.f32.mrb[0].mxu0
        %2740 = vdwg.mxu0
        %v2741 = vmul.f32 %v2587, %v2738
        %2742 = vst [vmem:[%s596] sm:$0xff] %v2741
        %v2743 = vld [vmem:[%s8] sm:$0xff]
        %v2744 = vld [vmem:[%s8 + $0x8] sm:$0xff]
        %v2745 = vld [vmem:[%s9] sm:$0xff]
        %v2746 = vld [vmem:[%s9 + $0x8] sm:$0xff]
        %v2748 = vsel %vm1753, %v2745, 0
        %v2751 = vsel %vm1753, %v2746, 0
        %2753 = vmatprep.subr.mxu0 0.0
        %2754 = vmatpush1.msra.mxu0 %v2665
        %2755 = vmatprep.subr.mxu0 0.0
        %2756 = vmatpush1.msra.mxu0 0.0
        %2757 = vmatprep.subr.mxu0 0.0
        %2758 = vmatpush1.msra.mxu0 0.0
        %2759 = vmatprep.subr.mxu0 0.0
        %2760 = vmatpush1.msra.mxu0 0.0
        %2761 = vmatprep.subr.mxu0 0.0
        %2762 = vmatpush1.msra.mxu0 0.0
        %2763 = vmatprep.subr.mxu0 0.0
        %2764 = vmatpush1.msra.mxu0 0.0
        %2765 = vmatprep.subr.mxu0 0.0
        %2766 = vmatpush1.msra.mxu0 0.0
        %2767 = vmatprep.subr.mxu0 0.0
        %2768 = vmatpush1.msra.mxu0 0.0
        %2769 = vmatprep.subr.mxu0 0.0
        %2770 = vmatpush1.msra.mxu0 0.0
        %2771 = vmatprep.subr.mxu0 0.0
        %2772 = vmatpush1.msra.mxu0 0.0
        %2773 = vmatprep.subr.mxu0 0.0
        %2774 = vmatpush1.msra.mxu0 0.0
        %2775 = vmatprep.subr.mxu0 0.0
        %2776 = vmatpush1.msra.mxu0 0.0
        %2777 = vmatprep.subr.mxu0 0.0
        %2778 = vmatpush1.msra.mxu0 0.0
        %2779 = vmatprep.subr.mxu0 0.0
        %2780 = vmatpush1.msra.mxu0 0.0
        %2781 = vmatprep.subr.mxu0 0.0
        %2782 = vmatpush1.msra.mxu0 0.0
        %2783 = vmatprep.subr.mxu0 0.0
        %2784 = vmatpush1.msra.mxu0 0.0
        %2785 = vmatprep.subr.mxu0 0.0
        %2786 = vmatpush1.msra.mxu0 0.0
        %2787 = vmatprep.subr.mxu0 0.0
        %2788 = vmatpush1.msra.mxu0 0.0
        %2789 = vmatprep.subr.mxu0 0.0
        %2790 = vmatpush1.msra.mxu0 0.0
        %2791 = vmatprep.subr.mxu0 0.0
        %2792 = vmatpush1.msra.mxu0 0.0
        %2793 = vmatprep.subr.mxu0 0.0
        %2794 = vmatpush1.msra.mxu0 0.0
        %2795 = vmatprep.subr.mxu0 0.0
        %2796 = vmatpush1.msra.mxu0 0.0
        %2797 = vmatprep.subr.mxu0 0.0
        %2798 = vmatpush1.msra.mxu0 0.0
        %2799 = vmatprep.subr.mxu0 0.0
        %2800 = vmatpush1.msra.mxu0 0.0
        %2801 = vmatprep.subr.mxu0 0.0
        %2802 = vmatpush1.msra.mxu0 0.0
        %2803 = vmatprep.subr.mxu0 0.0
        %2804 = vmatpush1.msra.mxu0 0.0
        %2805 = vmatprep.subr.mxu0 0.0
        %2806 = vmatpush1.msra.mxu0 0.0
        %2807 = vmatprep.subr.mxu0 0.0
        %2808 = vmatpush1.msra.mxu0 0.0
        %2809 = vmatprep.subr.mxu0 0.0
        %2810 = vmatpush1.msra.mxu0 0.0
        %2811 = vmatprep.subr.mxu0 0.0
        %2812 = vmatpush1.msra.mxu0 0.0
        %2813 = vmatprep.subr.mxu0 0.0
        %2814 = vmatpush1.msra.mxu0 0.0
        %2815 = vmatprep.subr.mxu0 0.0
        %2816 = vmatpush1.msra.mxu0 0.0
        %2817 = vmatprep.mubr.f32.mxu0 0.0
        %2818 = vmatmul.mubr.f32.gmra.mrb[0].mxu0 %v2748
        %v2819 = vpop.f32.mrb[0].mxu0
        %v2820 = vadd.f32 0.0, %v2819
        %v2821 = vpop.f32.mrb[0].mxu0
        %2822 = vmatprep.mubr.f32.mxu0 0.0
        %2823 = vmatmul.mubr.f32.gmra.mrb[0].mxu0 %v2751
        %v2824 = vpop.f32.mrb[0].mxu0
        %v2825 = vadd.f32 0.0, %v2824
        %v2826 = vpop.f32.mrb[0].mxu0
        %2827 = vdwg.mxu0
        %v2829 = vsel %vm1753, %v2743, 0
        %v2832 = vsel %vm1753, %v2744, 0
        %2834 = vmatprep.subr.mxu0 0.0
        %2835 = vmatpush1.msra.mxu0 %v2508
        %2836 = vmatprep.subr.mxu0 0.0
        %2837 = vmatpush1.msra.mxu0 0.0
        %2838 = vmatprep.subr.mxu0 0.0
        %2839 = vmatpush1.msra.mxu0 0.0
        %2840 = vmatprep.subr.mxu0 0.0
        %2841 = vmatpush1.msra.mxu0 0.0
        %2842 = vmatprep.subr.mxu0 0.0
        %2843 = vmatpush1.msra.mxu0 0.0
        %2844 = vmatprep.subr.mxu0 0.0
        %2845 = vmatpush1.msra.mxu0 0.0
        %2846 = vmatprep.subr.mxu0 0.0
        %2847 = vmatpush1.msra.mxu0 0.0
        %2848 = vmatprep.subr.mxu0 0.0
        %2849 = vmatpush1.msra.mxu0 0.0
        %2850 = vmatprep.subr.mxu0 0.0
        %2851 = vmatpush1.msra.mxu0 0.0
        %2852 = vmatprep.subr.mxu0 0.0
        %2853 = vmatpush1.msra.mxu0 0.0
        %2854 = vmatprep.subr.mxu0 0.0
        %2855 = vmatpush1.msra.mxu0 0.0
        %2856 = vmatprep.subr.mxu0 0.0
        %2857 = vmatpush1.msra.mxu0 0.0
        %2858 = vmatprep.subr.mxu0 0.0
        %2859 = vmatpush1.msra.mxu0 0.0
        %2860 = vmatprep.subr.mxu0 0.0
        %2861 = vmatpush1.msra.mxu0 0.0
        %2862 = vmatprep.subr.mxu0 0.0
        %2863 = vmatpush1.msra.mxu0 0.0
        %2864 = vmatprep.subr.mxu0 0.0
        %2865 = vmatpush1.msra.mxu0 0.0
        %2866 = vmatprep.subr.mxu0 0.0
        %2867 = vmatpush1.msra.mxu0 0.0
        %2868 = vmatprep.subr.mxu0 0.0
        %2869 = vmatpush1.msra.mxu0 0.0
        %2870 = vmatprep.subr.mxu0 0.0
        %2871 = vmatpush1.msra.mxu0 0.0
        %2872 = vmatprep.subr.mxu0 0.0
        %2873 = vmatpush1.msra.mxu0 0.0
        %2874 = vmatprep.subr.mxu0 0.0
        %2875 = vmatpush1.msra.mxu0 0.0
        %2876 = vmatprep.subr.mxu0 0.0
        %2877 = vmatpush1.msra.mxu0 0.0
        %2878 = vmatprep.subr.mxu0 0.0
        %2879 = vmatpush1.msra.mxu0 0.0
        %2880 = vmatprep.subr.mxu0 0.0
        %2881 = vmatpush1.msra.mxu0 0.0
        %2882 = vmatprep.subr.mxu0 0.0
        %2883 = vmatpush1.msra.mxu0 0.0
        %2884 = vmatprep.subr.mxu0 0.0
        %2885 = vmatpush1.msra.mxu0 0.0
        %2886 = vmatprep.subr.mxu0 0.0
        %2887 = vmatpush1.msra.mxu0 0.0
        %2888 = vmatprep.subr.mxu0 0.0
        %2889 = vmatpush1.msra.mxu0 0.0
        %2890 = vmatprep.subr.mxu0 0.0
        %2891 = vmatpush1.msra.mxu0 0.0
        %2892 = vmatprep.subr.mxu0 0.0
        %2893 = vmatpush1.msra.mxu0 0.0
        %2894 = vmatprep.subr.mxu0 0.0
        %2895 = vmatpush1.msra.mxu0 0.0
        %2896 = vmatprep.subr.mxu0 0.0
        %2897 = vmatpush1.msra.mxu0 0.0
        %2898 = vmatprep.mubr.f32.mxu0 0.0
        %2899 = vmatmul.mubr.f32.gmra.mrb[0].mxu0 %v2829
        %v2900 = vpop.f32.mrb[0].mxu0
        %v2901 = vadd.f32 %v2820, %v2900
        %v2902 = vpop.f32.mrb[0].mxu0
        %2903 = vmatprep.mubr.f32.mxu0 0.0
        %2904 = vmatmul.mubr.f32.gmra.mrb[0].mxu0 %v2832
        %v2905 = vpop.f32.mrb[0].mxu0
        %v2906 = vadd.f32 %v2825, %v2905
        %v2907 = vpop.f32.mrb[0].mxu0
        %2908 = vdwg.mxu0
        %v2909 = vld [vmem:[%s10] sm:$0xff]
        %v2910 = vld [vmem:[%s10 + $0x8] sm:$0xff]
        %2912 = vset.pattern.permute.xlu0 0
        %2913 = vperm.xlu0 %2912, %v2909
        %v2914 = vpop.permute.xlu0 %2913
        %2917 = vset.pattern.permute.xlu0 0
        %2918 = vperm.xlu0 %2917, %v2910
        %v2919 = vpop.permute.xlu0 %2918
        %v2921 = vadd.f32 %v2901, %v2914
        %v2922 = vadd.f32 %v2906, %v2919
        %2923 = vst.msk [vmem:[%s625] sm:$0xff] %vm1288, %v2921
        %2924 = vst.msk [vmem:[%s625 + $0x8] sm:$0xff] %vm1288, %v2922
        %s2925 = sand.u32 %s404, 1
        %s2926 = scalar_lea.sflag [#allocation3], %s2925
        %s2927 = sand.u32 %s404, 1
        %s2928 = smul.addr %s2927, 8
        %s2929 = scalar_lea.vmem [#allocation2], %s2928
        %p2930 = scmp.lt.s32.totalorder %s34, 1
        %s2931 = scalar_select %p2930, %s34, 1
        %s2932 = smul.addr %s2931, 2
        %s2933 = smul.addr %s2932, 8
        %s2934 = scalar_lea.vmem %s18, %s2933
        %p2935 = scmp.lt.s32.totalorder %s34, 1
        %s2936 = scalar_select %p2935, %s34, 1
        %s2937 = smul.addr %s2936, 2
        %s2938 = smul.addr %s2937, 8
        %s2939 = scalar_lea.vmem %s19, %s2938
        // Predicated region
        $region89: #{tpu_custom_call.1} parent=87 // pred_check
          %p2940 = pneg %p414
        $region90: #{tpu_custom_call.1} parent=87 // pred_check_branch
          %2942 = sbr.rel (%p2940) target = $region92
        $region91: #{tpu_custom_call.1} parent=87 // pred_region
          %s2944 = ssub.s32 128, 128
          %2945 = vsyncadd %s2926, %s2944
          %s2946 = smul.addr %s34, 128
          %s2947 = scalar_lea.hbm %s17, %s2946
          %s2949 = sshll.u32 %s2929, 4
          %s2950 = int_to_ptr.vmem [resolvable:$true] %s2949
          %2952 = dma.vmem_to_hbm [thread:$0]  %s2950, 128, %s2947, %s2926
        $region92: #{tpu_custom_call.1} parent=87 // pred_fallthru
          _
        // Predicated region
        $region93: #{tpu_custom_call.1} parent=87 // pred_check
          %p2953 = pneg %p440
        $region94: #{tpu_custom_call.1} parent=87 // pred_check_branch
          %2955 = sbr.rel (%p2953) target = $region96
        $region95: #{tpu_custom_call.1} parent=87 // pred_region
          _
        $region96: #{tpu_custom_call.1} parent=87 // pred_fallthru
          _
        // Predicated region
        $region97: #{tpu_custom_call.1} parent=87 // pred_check
          %p2956 = pneg %p466
        $region98: #{tpu_custom_call.1} parent=87 // pred_check_branch
          %2958 = sbr.rel (%p2956) target = $region100
        $region99: #{tpu_custom_call.1} parent=87 // pred_region
          _
        $region100: #{tpu_custom_call.1} parent=87 // pred_fallthru
          _
      $region88: #{tpu_custom_call.1} parent=5 // pred_fallthru
        _
      %p2959 = scmp.le.s32.totalorder 2, %s29
      // Predicated region
      $region101: #{tpu_custom_call.1} parent=5 // pred_check
        %p2960 = pneg %p2959
      $region102: #{tpu_custom_call.1} parent=5 // pred_check_branch
        %2962 = sbr.rel (%p2960) target = $region104
      $region103: #{tpu_custom_call.1} parent=5 // pred_region
        %s2963 = ssub.s32 %s29, 2
        // Predicated region
        $region105: #{tpu_custom_call.1} parent=103 // pred_check
          %p2964 = pneg %p420
        $region106: #{tpu_custom_call.1} parent=103 // pred_check_branch
          %2966 = sbr.rel (%p2964) target = $region108
        $region107: #{tpu_custom_call.1} parent=103 // pred_region
          %s2967 = sand.u32 %s405, 1
          %s2968 = scalar_lea.sflag [#allocation3], %s2967
          %s2969 = sand.u32 %s405, 1
          %s2970 = smul.addr %s2969, 8
          %s2971 = scalar_lea.vmem [#allocation2], %s2970
          %2972 = dma.done %s2968, 128
        $region108: #{tpu_custom_call.1} parent=103 // pred_fallthru
          _
        // Predicated region
        $region109: #{tpu_custom_call.1} parent=103 // pred_check
          %p2973 = pneg %p446
        $region110: #{tpu_custom_call.1} parent=103 // pred_check_branch
          %2975 = sbr.rel (%p2973) target = $region112
        $region111: #{tpu_custom_call.1} parent=103 // pred_region
          %p2976 = scmp.lt.s32.totalorder %s35, 1
          %s2977 = scalar_select %p2976, %s35, 1
          %s2978 = smul.addr %s2977, 2
          %s2979 = smul.addr %s2978, 8
          %s2980 = scalar_lea.vmem %s18, %s2979
        $region112: #{tpu_custom_call.1} parent=103 // pred_fallthru
          _
        // Predicated region
        $region113: #{tpu_custom_call.1} parent=103 // pred_check
          %p2981 = pneg %p472
        $region114: #{tpu_custom_call.1} parent=103 // pred_check_branch
          %2983 = sbr.rel (%p2981) target = $region116
        $region115: #{tpu_custom_call.1} parent=103 // pred_region
          %p2984 = scmp.lt.s32.totalorder %s35, 1
          %s2985 = scalar_select %p2984, %s35, 1
          %s2986 = smul.addr %s2985, 2
          %s2987 = smul.addr %s2986, 8
          %s2988 = scalar_lea.vmem %s19, %s2987
        $region116: #{tpu_custom_call.1} parent=103 // pred_fallthru
          _
      $region104: #{tpu_custom_call.1} parent=5 // pred_fallthru
        _
    $region6: #{tpu_custom_call.1} parent=1 // loop_footer
      %s33 = sadd.s32 1, %s29
    $region7: #{tpu_custom_call.1} parent=1 // loop_footer_branch
      %28 = sbr.rel target = $region3
    $region8: #{tpu_custom_call.1} parent=1 // loop_exit
      _
    %2989 = vsyncpa [#allocation3], 1
    %s2990 = scalar_lea.sflag [#allocation3], 1
    %2991 = vsyncpa %s2990, 1

</llo_original>
